<compile_context>
chip_gen: v6e
topology: v6e:2x2x1
jax: 0.10.0
libtpu: 0.0.40
codegen_flags: <defaults>
</compile_context>

<pallas_src>
import functools

import jax
import jax.numpy as jnp
from jax import lax
from jax.experimental import pallas as pl
from jax.experimental.pallas import tpu as pltpu


def _round_up(x, m):
    return (x + m - 1) // m * m


_VMEM_LIMIT = 64 * 1024 * 1024  # generous scoped-VMEM budget (fits v7x physical)


# ------------------ 3x3 conv + folded eval-BN + ReLU (direct) ----------------
#
# Canonical activation layout: (B, C, L_pad) bf16 with L = H * (W + 2);
# position j = y*(W+2) + x + 1 holds pixel (y, x); columns 0 and W+1 of every
# row and all j >= L are zero.  The conv consumes an "ext" buffer which is the
# canonical buffer shifted right by (W+2)+1 zeros (== the zero-padded image,
# flattened, prefixed by one extra zero), so every 3x3 tap is a constant flat
# shift s = dy*(W+2) + dx.

def _conv3x3_kernel(x_ref, w_ref, b_ref, m_ref, o_ref, acc_ref, *, shifts, l_pad):
    c = pl.program_id(1)

    @pl.when(c == 0)
    def _():
        acc_ref[...] = jnp.zeros_like(acc_ref)

    acc = acc_ref[...]
    for t, s in enumerate(shifts):
        xs = x_ref[0, :, s:s + l_pad]                       # (cin_chunk, L_pad)
        acc += jnp.dot(w_ref[t], xs, preferred_element_type=jnp.float32)
    acc_ref[...] = acc

    @pl.when(c == pl.num_programs(1) - 1)
    def _():
        y = jnp.maximum(acc_ref[...] + b_ref[...], 0.0)     # bias + ReLU
        o_ref[0] = (y * m_ref[...]).astype(o_ref.dtype)     # re-zero padded cols


def conv3x3_bn_relu(x_ext, w, bn_scale, bn_shift, mask, wp, l_pad):
    """x_ext: (B, Cin, NP) bf16 ext buffer -> (B, Cout, L_pad) bf16 canonical."""
    B, Cin, NP = x_ext.shape
    Cout = w.shape[0]
    cin_chunk = Cin if Cin <= 256 else 256
    if Cin % cin_chunk:
        cin_chunk = Cin

    # Fold BN scale into the weights; reorder to (tap, Cout, Cin).
    w9 = (jnp.transpose(w, (2, 3, 0, 1)).reshape(9, Cout, Cin)
          * bn_scale.reshape(1, Cout, 1)).astype(jnp.bfloat16)
    bias = bn_shift.reshape(Cout, 1).astype(jnp.float32)
    shifts = tuple(dy * wp + dx for dy in range(3) for dx in range(3))

    kernel = functools.partial(_conv3x3_kernel, shifts=shifts, l_pad=l_pad)
    return pl.pallas_call(
        kernel,
        out_shape=jax.ShapeDtypeStruct((B, Cout, l_pad), jnp.bfloat16),
        grid=(B, Cin // cin_chunk),
        in_specs=[
            pl.BlockSpec((1, cin_chunk, NP), lambda b, c: (b, c, 0)),
            pl.BlockSpec((9, Cout, cin_chunk), lambda b, c: (0, 0, c)),
            pl.BlockSpec((Cout, 1), lambda b, c: (0, 0)),
            pl.BlockSpec((1, l_pad), lambda b, c: (0, 0)),
        ],
        out_specs=pl.BlockSpec((1, Cout, l_pad), lambda b, c: (b, 0, 0)),
        scratch_shapes=[pltpu.VMEM((Cout, l_pad), jnp.float32)],
        compiler_params=pltpu.CompilerParams(
            dimension_semantics=("parallel", "arbitrary"),
            vmem_limit_bytes=_VMEM_LIMIT),
    )(x_ext, w9, bias, mask)


# ---------------------- PAM: position attention (KV-resident) ----------------

def _pam_qkv_kernel(x_ref, wq_ref, bq_ref, wk_ref, bk_ref, wv_ref, bv_ref,
                    q_ref, k_ref, v_ref):
    x = x_ref[0]                                            # (C, L_pad) bf16
    q_ref[0] = (jnp.dot(wq_ref[...], x, preferred_element_type=jnp.float32)
                + bq_ref[...]).astype(q_ref.dtype)
    k_ref[0] = (jnp.dot(wk_ref[...], x, preferred_element_type=jnp.float32)
                + bk_ref[...]).astype(k_ref.dtype)
    v_ref[0] = (jnp.dot(wv_ref[...], x, preferred_element_type=jnp.float32)
                + bv_ref[...]).astype(v_ref.dtype)


def _pam_attn_kernel(q_ref, k_ref, v_ref, x_ref, kb_ref, qm_ref, g_ref, o_ref):
    # Scores with keys on sublanes, queries on lanes: (L_pad, Tq) f32.
    s = lax.dot_general(k_ref[0], q_ref[0], (((0,), (0,)), ((), ())),
                        preferred_element_type=jnp.float32)
    s = s + kb_ref[...]                                     # mask padded keys
    m = jnp.max(s, axis=0, keepdims=True)                   # (1, Tq)
    p = jnp.exp(s - m)                                      # (L_pad, Tq)
    l = jnp.sum(p, axis=0, keepdims=True)                   # (1, Tq)
    out = jnp.dot(v_ref[0], p.astype(v_ref.dtype),
                  preferred_element_type=jnp.float32)       # (C, Tq)
    out = out * (1.0 / l)                                   # exact normalization
    o_ref[0] = ((g_ref[0, 0] * out + x_ref[0].astype(jnp.float32))
                * qm_ref[...]).astype(o_ref.dtype)


def pam_attention(feat, p, qmask, kbias):
    """feat: (B, C, L_pad) canonical bf16 -> (B, C, L_pad) canonical bf16."""
    B, C, l_pad = feat.shape
    Cq = p["pam_wq"].shape[0]

    def mat(w):
        return w.astype(jnp.bfloat16)

    def vec(b):
        return b.reshape(-1, 1).astype(jnp.float32)

    # Projection: three outputs, no XLA slicing of a fused qkv buffer.
    q, k, v = pl.pallas_call(
        _pam_qkv_kernel,
        out_shape=(jax.ShapeDtypeStruct((B, Cq, l_pad), jnp.bfloat16),
                   jax.ShapeDtypeStruct((B, Cq, l_pad), jnp.bfloat16),
                   jax.ShapeDtypeStruct((B, C, l_pad), jnp.bfloat16)),
        grid=(B,),
        in_specs=[pl.BlockSpec((1, C, l_pad), lambda b: (b, 0, 0)),
                  pl.BlockSpec((Cq, C), lambda b: (0, 0)),
                  pl.BlockSpec((Cq, 1), lambda b: (0, 0)),
                  pl.BlockSpec((Cq, C), lambda b: (0, 0)),
                  pl.BlockSpec((Cq, 1), lambda b: (0, 0)),
                  pl.BlockSpec((C, C), lambda b: (0, 0)),
                  pl.BlockSpec((C, 1), lambda b: (0, 0))],
        out_specs=(pl.BlockSpec((1, Cq, l_pad), lambda b: (b, 0, 0)),
                   pl.BlockSpec((1, Cq, l_pad), lambda b: (b, 0, 0)),
                   pl.BlockSpec((1, C, l_pad), lambda b: (b, 0, 0))),
        compiler_params=pltpu.CompilerParams(
            dimension_semantics=("parallel",),
            vmem_limit_bytes=_VMEM_LIMIT),
    )(feat, mat(p["pam_wq"]), vec(p["pam_bq"]),
      mat(p["pam_wk"]), vec(p["pam_bk"]),
      mat(p["pam_wv"]), vec(p["pam_bv"]))

    # Largest query tile that divides L_pad (L_pad is a multiple of 128).
    tq = 128
    for cand in (512, 256):
        if l_pad % cand == 0:
            tq = cand
            break

    out = pl.pallas_call(
        _pam_attn_kernel,
        out_shape=jax.ShapeDtypeStruct((B, C, l_pad), jnp.bfloat16),
        grid=(B, l_pad // tq),
        in_specs=[
            pl.BlockSpec((1, Cq, tq), lambda b, qi: (b, 0, qi)),      # q tile
            pl.BlockSpec((1, Cq, l_pad), lambda b, qi: (b, 0, 0)),    # K resident
            pl.BlockSpec((1, C, l_pad), lambda b, qi: (b, 0, 0)),     # V resident
            pl.BlockSpec((1, C, tq), lambda b, qi: (b, 0, qi)),       # residual
            pl.BlockSpec((l_pad, 1), lambda b, qi: (0, 0)),           # key bias
            pl.BlockSpec((1, tq), lambda b, qi: (0, qi)),             # query mask
            pl.BlockSpec(memory_space=pltpu.MemorySpace.SMEM),        # gamma
        ],
        out_specs=pl.BlockSpec((1, C, tq), lambda b, qi: (b, 0, qi)),
        compiler_params=pltpu.CompilerParams(
            dimension_semantics=("parallel", "parallel"),
            vmem_limit_bytes=_VMEM_LIMIT),
    )(q, k, v, feat, kbias, qmask,
      p["pam_gamma"].reshape(1, 1).astype(jnp.float32))
    return out


# ------------------ CAM: channel attention (fused single kernel) -------------

def _cam_kernel(x_ref, g_ref, o_ref):
    x = x_ref[0]                                            # (C, L_pad) bf16
    e = lax.dot_general(x, x, (((1,), (1,)), ((), ())),
                        preferred_element_type=jnp.float32)  # gram (C, C)
    e = jnp.max(e, axis=-1, keepdims=True) - e              # "energy_new"
    e = e - jnp.max(e, axis=-1, keepdims=True)               # stable softmax
    pexp = jnp.exp(e)
    att = pexp / jnp.sum(pexp, axis=-1, keepdims=True)       # f32 (C, C)
    out = jnp.dot(att, x.astype(jnp.float32),
                  preferred_element_type=jnp.float32)        # (C, L_pad) f32
    o_ref[0] = (g_ref[0, 0] * out + x.astype(jnp.float32)).astype(o_ref.dtype)


def cam_attention(feat, gamma):
    B, C, l_pad = feat.shape
    return pl.pallas_call(
        _cam_kernel,
        out_shape=jax.ShapeDtypeStruct((B, C, l_pad), jnp.bfloat16),
        grid=(B,),
        in_specs=[pl.BlockSpec((1, C, l_pad), lambda b: (b, 0, 0)),
                  pl.BlockSpec(memory_space=pltpu.MemorySpace.SMEM)],
        out_specs=pl.BlockSpec((1, C, l_pad), lambda b: (b, 0, 0)),
        compiler_params=pltpu.CompilerParams(
            dimension_semantics=("parallel",),
            vmem_limit_bytes=_VMEM_LIMIT),
    )(feat, gamma.reshape(1, 1).astype(jnp.float32))


# ------------------- feat_sum + final 1x1 classifier (fused) -----------------

def _sum_cls_kernel(a_ref, b_ref, w_ref, bias_ref, o_ref):
    s = a_ref[0] + b_ref[0]
    o_ref[0] = (jnp.dot(w_ref[...], s, preferred_element_type=jnp.float32)
                + bias_ref[...])


def sum_conv1x1(a, b, w, bias):
    B, C, l_pad = a.shape
    Cout = w.shape[0]
    return pl.pallas_call(
        _sum_cls_kernel,
        out_shape=jax.ShapeDtypeStruct((B, Cout, l_pad), jnp.float32),
        grid=(B,),
        in_specs=[pl.BlockSpec((1, C, l_pad), lambda i: (i, 0, 0)),
                  pl.BlockSpec((1, C, l_pad), lambda i: (i, 0, 0)),
                  pl.BlockSpec((Cout, C), lambda i: (0, 0)),
                  pl.BlockSpec((Cout, 1), lambda i: (0, 0))],
        out_specs=pl.BlockSpec((1, Cout, l_pad), lambda i: (i, 0, 0)),
        compiler_params=pltpu.CompilerParams(
            dimension_semantics=("parallel",),
            vmem_limit_bytes=_VMEM_LIMIT),
    )(a, b, w.astype(jnp.bfloat16), bias.reshape(Cout, 1).astype(jnp.float32))


# ------------------- bilinear resize (align_corners=True) --------------------

def _bilinear_kernel(x_ref, ah_ref, awt_ref, o_ref):
    t = jnp.dot(ah_ref[...], x_ref[0, 0],
                preferred_element_type=jnp.float32)          # (th, Wf_pad)
    o_ref[0, 0] = jnp.dot(t, awt_ref[...],
                          preferred_element_type=jnp.float32)  # (th, w_pad)


def _interp_matrix(out_size, in_size):
    if in_size == 1:
        return jnp.ones((out_size, 1), jnp.float32)
    src = jnp.arange(out_size, dtype=jnp.float32) * (in_size - 1) / (out_size - 1)
    i0 = jnp.clip(jnp.floor(src).astype(jnp.int32), 0, in_size - 2)
    i1 = i0 + 1
    w1 = src - i0.astype(jnp.float32)
    w0 = 1.0 - w1
    return (w0[:, None] * jax.nn.one_hot(i0, in_size, dtype=jnp.float32)
            + w1[:, None] * jax.nn.one_hot(i1, in_size, dtype=jnp.float32))


def bilinear_upsample(x, h, w):
    """x: (B, C, Hf, Wf) f32 -> (B, C, h, w) f32, align_corners=True."""
    B, C, Hf, Wf = x.shape
    wf_pad = _round_up(Wf, 128)
    w_pad = _round_up(w, 128)
    th = min(256, _round_up(h, 8))
    h_pad = _round_up(h, th)

    ah = jnp.pad(_interp_matrix(h, Hf), ((0, h_pad - h), (0, 0)))      # (h_pad, Hf)
    awt = jnp.pad(_interp_matrix(w, Wf).T,
                  ((0, wf_pad - Wf), (0, w_pad - w)))                  # (Wf_pad, w_pad)
    xp = jnp.pad(x.astype(jnp.float32),
                 ((0, 0), (0, 0), (0, 0), (0, wf_pad - Wf)))

    out = pl.pallas_call(
        _bilinear_kernel,
        out_shape=jax.ShapeDtypeStruct((B, C, h_pad, w_pad), jnp.float32),
        grid=(B, C, h_pad // th),
        in_specs=[pl.BlockSpec((1, 1, Hf, wf_pad), lambda b, c, r: (b, c, 0, 0)),
                  pl.BlockSpec((th, Hf), lambda b, c, r: (r, 0)),
                  pl.BlockSpec((wf_pad, w_pad), lambda b, c, r: (0, 0))],
        out_specs=pl.BlockSpec((1, 1, th, w_pad), lambda b, c, r: (b, c, r, 0)),
        compiler_params=pltpu.CompilerParams(
            dimension_semantics=("parallel", "parallel", "parallel")),
    )(xp, ah, awt)
    return out[:, :, :h, :w]


# --------------------------------- DANet head --------------------------------

def danet_head(x, p, *, zoom_factor=8):
    """x: backbone feature map (B, fea_dim, Hf, Wf) -> logits (B, classes, h, w)."""
    B, Cin, H, W = x.shape
    down = p["pam_in_w"].shape[0]
    classes = p["cls_w"].shape[0]

    wp = W + 2
    L = H * wp
    l_pad = _round_up(L, 128)
    NP = _round_up(l_pad + 2 * wp + 2, 128)
    ext_lead = wp + 1

    # Column-validity over the canonical layout (1 <= j mod wp <= W, j < L).
    j = jnp.arange(l_pad)
    valid = (j < L) & ((j % wp) >= 1) & ((j % wp) <= W)
    qmask = valid.astype(jnp.float32).reshape(1, l_pad)
    kbias = jnp.where(valid, 0.0, -1e30).astype(jnp.float32).reshape(l_pad, 1)

    # Eval-mode BatchNorm with default running stats, folded into the convs.
    eps = 1e-5
    bn_scale = jnp.full((down,), 1.0 / jnp.sqrt(1.0 + eps), jnp.float32)
    bn_shift = jnp.zeros((down,), jnp.float32)

    def to_ext(a):  # canonical (B, C, len) -> ext buffer (B, C, NP)
        return jnp.pad(a, ((0, 0), (0, 0),
                           (ext_lead, NP - ext_lead - a.shape[-1])))

    # Backbone feature -> canonical -> ext (only 1-pixel spatial zero padding,
    # no im2col inflation).
    x_can = jnp.pad(x, ((0, 0), (0, 0), (0, 0), (1, 1))).reshape(B, Cin, L)
    x_ext = to_ext(x_can.astype(jnp.bfloat16))

    # PAM branch (all stages stay in the canonical (B, C, l_pad) layout).
    pam_feat = conv3x3_bn_relu(x_ext, p["pam_in_w"], bn_scale, bn_shift,
                               qmask, wp, l_pad)
    pam_feat = pam_attention(pam_feat, p, qmask, kbias)
    pam_feat = conv3x3_bn_relu(to_ext(pam_feat), p["pam_out_w"], bn_scale,
                               bn_shift, qmask, wp, l_pad)

    # CAM branch.
    cam_feat = conv3x3_bn_relu(x_ext, p["cam_in_w"], bn_scale, bn_shift,
                               qmask, wp, l_pad)
    cam_feat = cam_attention(cam_feat, p["cam_gamma"])
    cam_feat = conv3x3_bn_relu(to_ext(cam_feat), p["cam_out_w"], bn_scale,
                               bn_shift, qmask, wp, l_pad)

    # pam_cls_seg / cam_cls_seg are unused in the eval forward (dead compute).
    logits_flat = sum_conv1x1(pam_feat, cam_feat, p["cls_w"], p["cls_b"])
    logits = logits_flat[:, :, :L].reshape(B, classes, H, wp)[..., 1:1 + W]

    if zoom_factor != 1:
        h = (H - 1) * zoom_factor + 1
        w = (W - 1) * zoom_factor + 1
        logits = bilinear_upsample(logits, h, w)
    return logits


# ------------------------------------ main -----------------------------------

if __name__ == "__main__":
    key = jax.random.PRNGKey(0)
    B, fea_dim, Hf, Wf = 2, 64, 5, 5       # small stand-in for fea_dim=2048
    classes, zoom_factor = 2, 8
    down = fea_dim // 4                    # 16
    qk = max(1, down // 8)                 # 2

    ks = jax.random.split(key, 12)

    def nrm(k, shape, scale=0.1):
        return scale * jax.random.normal(k, shape, jnp.float32)

    # Backbone output features (backbone itself untranslated — see TODO above).
    x_feat = jax.random.normal(ks[0], (B, fea_dim, Hf, Wf), jnp.float32)

    params = dict(
        pam_in_w=nrm(ks[1], (down, fea_dim, 3, 3)),
        pam_wq=nrm(ks[2], (qk, down)), pam_bq=nrm(ks[3], (qk,)),
        pam_wk=nrm(ks[4], (qk, down)), pam_bk=nrm(ks[5], (qk,)),
        pam_wv=nrm(ks[6], (down, down)), pam_bv=nrm(ks[7], (down,)),
        pam_out_w=nrm(ks[8], (down, down, 3, 3)),
        cam_in_w=nrm(ks[9], (down, fea_dim, 3, 3)),
        cam_out_w=nrm(ks[10], (down, down, 3, 3)),
        cls_w=nrm(ks[11], (classes, down)),
        cls_b=jnp.zeros((classes,), jnp.float32),
        # nn.Parameter(torch.zeros(1)) in __init__; nonzero so the attention
        # paths contribute to the output in this synthetic run.
        pam_gamma=jnp.array([0.5], jnp.float32),
        cam_gamma=jnp.array([0.5], jnp.float32),
    )

    danet_fn = jax.jit(functools.partial(danet_head, zoom_factor=zoom_factor))
    out = danet_fn(x_feat, params)
    out = jax.block_until_ready(out)

    h = (Hf - 1) * zoom_factor + 1
    w = (Wf - 1) * zoom_factor + 1
    assert out.shape == (B, classes, h, w), out.shape
    assert bool(jnp.all(jnp.isfinite(out)))
    print("KERNEL_OK")
</pallas_src>

<mosaic_0001>
module attributes {stable_mosaic.version = 11 : i64} {
  func.func @_conv3x3_kernel(%arg0: i32, %arg1: i32, %arg2: memref<1x64x256xbf16, #tpu.memory_space<vmem>>, %arg3: memref<9x16x64xbf16, #tpu.memory_space<vmem>>, %arg4: memref<16x1xf32, #tpu.memory_space<vmem>>, %arg5: memref<1x128xf32, #tpu.memory_space<vmem>>, %arg6: memref<1x16x128xbf16, #tpu.memory_space<vmem>>, %arg7: memref<16x128xf32, #tpu.memory_space<vmem>>) attributes {dimension_semantics = [#tpu.dimension_semantics<parallel>, #tpu.dimension_semantics<arbitrary>], iteration_bounds = array<i64: 2, 1>, scalar_prefetch = 0 : i64, scratch_operands = 1 : i64, tpu.core_type = #tpu.core_type<tc>, window_params = [{transform_indices = @transform_0, window_bounds = array<i64: 1, 64, 256>}, {transform_indices = @transform_1, window_bounds = array<i64: 9, 16, 64>}, {pipeline_mode = #tpu.pipeline_mode<synchronous>, transform_indices = @transform_2, window_bounds = array<i64: 16, 1>}, {pipeline_mode = #tpu.pipeline_mode<synchronous>, transform_indices = @transform_3, window_bounds = array<i64: 1, 128>}, {transform_indices = @transform_4, window_bounds = array<i64: 1, 16, 128>}]} {
    %c0_i32 = arith.constant 0 : i32
    %0 = arith.cmpi eq, %arg1, %c0_i32 : i32
    %1 = arith.extui %0 : i1 to i32
    %c0_i32_0 = arith.constant 0 : i32
    %2 = arith.cmpi ne, %1, %c0_i32_0 : i32
    scf.if %2 {
      %cst_56 = arith.constant 0.000000e+00 : f32
      %62 = vector.broadcast %cst_56 : f32 to vector<16x128xf32>
      %c0_57 = arith.constant 0 : index
      %c0_58 = arith.constant 0 : index
      %63 = vector.load %arg7[%c0_57, %c0_58] : memref<16x128xf32, #tpu.memory_space<vmem>>, vector<16x128xf32>
      tpu.vector_store %arg7[%c0_57, %c0_58], %62 {strides = array<i32>} : memref<16x128xf32, #tpu.memory_space<vmem>>, vector<16x128xf32>,
    } else {
    }
    %c0 = arith.constant 0 : index
    %c0_1 = arith.constant 0 : index
    %3 = vector.load %arg7[%c0, %c0_1] : memref<16x128xf32, #tpu.memory_space<vmem>>, vector<16x128xf32>
    %c0_2 = arith.constant 0 : index
    %c0_3 = arith.constant 0 : index
    %c0_4 = arith.constant 0 : index
    %4 = vector.load %arg2[%c0_2, %c0_3, %c0_4] : memref<1x64x256xbf16, #tpu.memory_space<vmem>>, vector<1x64x128xbf16>
    %5 = vector.shape_cast %4 : vector<1x64x128xbf16> to vector<64x128xbf16>
    %c0_5 = arith.constant 0 : index
    %c0_6 = arith.constant 0 : index
    %c0_7 = arith.constant 0 : index
    %6 = vector.load %arg3[%c0_5, %c0_6, %c0_7] : memref<9x16x64xbf16, #tpu.memory_space<vmem>>, vector<1x16x64xbf16>
    %7 = vector.shape_cast %6 : vector<1x16x64xbf16> to vector<16x64xbf16>
    %cst = arith.constant dense<0.000000e+00> : vector<16x128xf32>
    %8 = tpu.matmul %7, %5, %cst {dimension_numbers = #tpu.dot_dimension_numbers<[1], [0], [0], [1], [0, 0, 1, 1], [], []>} : vector<16x64xbf16>, vector<64x128xbf16>, vector<16x128xf32> -> vector<16x128xf32>
    %9 = arith.addf %3, %8 : vector<16x128xf32>
    %c0_8 = arith.constant 0 : index
    %c0_9 = arith.constant 0 : index
    %c1 = arith.constant 1 : index
    %10 = vector.load %arg2[%c0_8, %c0_9, %c1] : memref<1x64x256xbf16, #tpu.memory_space<vmem>>, vector<1x64x128xbf16>
    %11 = vector.shape_cast %10 : vector<1x64x128xbf16> to vector<64x128xbf16>
    %c1_10 = arith.constant 1 : index
    %c0_11 = arith.constant 0 : index
    %c0_12 = arith.constant 0 : index
    %12 = vector.load %arg3[%c1_10, %c0_11, %c0_12] : memref<9x16x64xbf16, #tpu.memory_space<vmem>>, vector<1x16x64xbf16>
    %13 = vector.shape_cast %12 : vector<1x16x64xbf16> to vector<16x64xbf16>
    %cst_13 = arith.constant dense<0.000000e+00> : vector<16x128xf32>
    %14 = tpu.matmul %13, %11, %cst_13 {dimension_numbers = #tpu.dot_dimension_numbers<[1], [0], [0], [1], [0, 0, 1, 1], [], []>} : vector<16x64xbf16>, vector<64x128xbf16>, vector<16x128xf32> -> vector<16x128xf32>
    %15 = arith.addf %9, %14 : vector<16x128xf32>
    %c0_14 = arith.constant 0 : index
    %c0_15 = arith.constant 0 : index
    %c2 = arith.constant 2 : index
    %16 = vector.load %arg2[%c0_14, %c0_15, %c2] : memref<1x64x256xbf16, #tpu.memory_space<vmem>>, vector<1x64x128xbf16>
    %17 = vector.shape_cast %16 : vector<1x64x128xbf16> to vector<64x128xbf16>
    %c2_16 = arith.constant 2 : index
    %c0_17 = arith.constant 0 : index
    %c0_18 = arith.constant 0 : index
    %18 = vector.load %arg3[%c2_16, %c0_17, %c0_18] : memref<9x16x64xbf16, #tpu.memory_space<vmem>>, vector<1x16x64xbf16>
    %19 = vector.shape_cast %18 : vector<1x16x64xbf16> to vector<16x64xbf16>
    %cst_19 = arith.constant dense<0.000000e+00> : vector<16x128xf32>
    %20 = tpu.matmul %19, %17, %cst_19 {dimension_numbers = #tpu.dot_dimension_numbers<[1], [0], [0], [1], [0, 0, 1, 1], [], []>} : vector<16x64xbf16>, vector<64x128xbf16>, vector<16x128xf32> -> vector<16x128xf32>
    %21 = arith.addf %15, %20 : vector<16x128xf32>
    %c0_20 = arith.constant 0 : index
    %c0_21 = arith.constant 0 : index
    %c7 = arith.constant 7 : index
    %22 = vector.load %arg2[%c0_20, %c0_21, %c7] : memref<1x64x256xbf16, #tpu.memory_space<vmem>>, vector<1x64x128xbf16>
    %23 = vector.shape_cast %22 : vector<1x64x128xbf16> to vector<64x128xbf16>
    %c3 = arith.constant 3 : index
    %c0_22 = arith.constant 0 : index
    %c0_23 = arith.constant 0 : index
    %24 = vector.load %arg3[%c3, %c0_22, %c0_23] : memref<9x16x64xbf16, #tpu.memory_space<vmem>>, vector<1x16x64xbf16>
    %25 = vector.shape_cast %24 : vector<1x16x64xbf16> to vector<16x64xbf16>
    %cst_24 = arith.constant dense<0.000000e+00> : vector<16x128xf32>
    %26 = tpu.matmul %25, %23, %cst_24 {dimension_numbers = #tpu.dot_dimension_numbers<[1], [0], [0], [1], [0, 0, 1, 1], [], []>} : vector<16x64xbf16>, vector<64x128xbf16>, vector<16x128xf32> -> vector<16x128xf32>
    %27 = arith.addf %21, %26 : vector<16x128xf32>
    %c0_25 = arith.constant 0 : index
    %c0_26 = arith.constant 0 : index
    %c8 = arith.constant 8 : index
    %28 = vector.load %arg2[%c0_25, %c0_26, %c8] : memref<1x64x256xbf16, #tpu.memory_space<vmem>>, vector<1x64x128xbf16>
    %29 = vector.shape_cast %28 : vector<1x64x128xbf16> to vector<64x128xbf16>
    %c4 = arith.constant 4 : index
    %c0_27 = arith.constant 0 : index
    %c0_28 = arith.constant 0 : index
    %30 = vector.load %arg3[%c4, %c0_27, %c0_28] : memref<9x16x64xbf16, #tpu.memory_space<vmem>>, vector<1x16x64xbf16>
    %31 = vector.shape_cast %30 : vector<1x16x64xbf16> to vector<16x64xbf16>
    %cst_29 = arith.constant dense<0.000000e+00> : vector<16x128xf32>
    %32 = tpu.matmul %31, %29, %cst_29 {dimension_numbers = #tpu.dot_dimension_numbers<[1], [0], [0], [1], [0, 0, 1, 1], [], []>} : vector<16x64xbf16>, vector<64x128xbf16>, vector<16x128xf32> -> vector<16x128xf32>
    %33 = arith.addf %27, %32 : vector<16x128xf32>
    %c0_30 = arith.constant 0 : index
    %c0_31 = arith.constant 0 : index
    %c9 = arith.constant 9 : index
    %34 = vector.load %arg2[%c0_30, %c0_31, %c9] : memref<1x64x256xbf16, #tpu.memory_space<vmem>>, vector<1x64x128xbf16>
    %35 = vector.shape_cast %34 : vector<1x64x128xbf16> to vector<64x128xbf16>
    %c5 = arith.constant 5 : index
    %c0_32 = arith.constant 0 : index
    %c0_33 = arith.constant 0 : index
    %36 = vector.load %arg3[%c5, %c0_32, %c0_33] : memref<9x16x64xbf16, #tpu.memory_space<vmem>>, vector<1x16x64xbf16>
    %37 = vector.shape_cast %36 : vector<1x16x64xbf16> to vector<16x64xbf16>
    %cst_34 = arith.constant dense<0.000000e+00> : vector<16x128xf32>
    %38 = tpu.matmul %37, %35, %cst_34 {dimension_numbers = #tpu.dot_dimension_numbers<[1], [0], [0], [1], [0, 0, 1, 1], [], []>} : vector<16x64xbf16>, vector<64x128xbf16>, vector<16x128xf32> -> vector<16x128xf32>
    %39 = arith.addf %33, %38 : vector<16x128xf32>
    %c0_35 = arith.constant 0 : index
    %c0_36 = arith.constant 0 : index
    %c14 = arith.constant 14 : index
    %40 = vector.load %arg2[%c0_35, %c0_36, %c14] : memref<1x64x256xbf16, #tpu.memory_space<vmem>>, vector<1x64x128xbf16>
    %41 = vector.shape_cast %40 : vector<1x64x128xbf16> to vector<64x128xbf16>
    %c6 = arith.constant 6 : index
    %c0_37 = arith.constant 0 : index
    %c0_38 = arith.constant 0 : index
    %42 = vector.load %arg3[%c6, %c0_37, %c0_38] : memref<9x16x64xbf16, #tpu.memory_space<vmem>>, vector<1x16x64xbf16>
    %43 = vector.shape_cast %42 : vector<1x16x64xbf16> to vector<16x64xbf16>
    %cst_39 = arith.constant dense<0.000000e+00> : vector<16x128xf32>
    %44 = tpu.matmul %43, %41, %cst_39 {dimension_numbers = #tpu.dot_dimension_numbers<[1], [0], [0], [1], [0, 0, 1, 1], [], []>} : vector<16x64xbf16>, vector<64x128xbf16>, vector<16x128xf32> -> vector<16x128xf32>
    %45 = arith.addf %39, %44 : vector<16x128xf32>
    %c0_40 = arith.constant 0 : index
    %c0_41 = arith.constant 0 : index
    %c15 = arith.constant 15 : index
    %46 = vector.load %arg2[%c0_40, %c0_41, %c15] : memref<1x64x256xbf16, #tpu.memory_space<vmem>>, vector<1x64x128xbf16>
    %47 = vector.shape_cast %46 : vector<1x64x128xbf16> to vector<64x128xbf16>
    %c7_42 = arith.constant 7 : index
    %c0_43 = arith.constant 0 : index
    %c0_44 = arith.constant 0 : index
    %48 = vector.load %arg3[%c7_42, %c0_43, %c0_44] : memref<9x16x64xbf16, #tpu.memory_space<vmem>>, vector<1x16x64xbf16>
    %49 = vector.shape_cast %48 : vector<1x16x64xbf16> to vector<16x64xbf16>
    %cst_45 = arith.constant dense<0.000000e+00> : vector<16x128xf32>
    %50 = tpu.matmul %49, %47, %cst_45 {dimension_numbers = #tpu.dot_dimension_numbers<[1], [0], [0], [1], [0, 0, 1, 1], [], []>} : vector<16x64xbf16>, vector<64x128xbf16>, vector<16x128xf32> -> vector<16x128xf32>
    %51 = arith.addf %45, %50 : vector<16x128xf32>
    %c0_46 = arith.constant 0 : index
    %c0_47 = arith.constant 0 : index
    %c16 = arith.constant 16 : index
    %52 = vector.load %arg2[%c0_46, %c0_47, %c16] : memref<1x64x256xbf16, #tpu.memory_space<vmem>>, vector<1x64x128xbf16>
    %53 = vector.shape_cast %52 : vector<1x64x128xbf16> to vector<64x128xbf16>
    %c8_48 = arith.constant 8 : index
    %c0_49 = arith.constant 0 : index
    %c0_50 = arith.constant 0 : index
    %54 = vector.load %arg3[%c8_48, %c0_49, %c0_50] : memref<9x16x64xbf16, #tpu.memory_space<vmem>>, vector<1x16x64xbf16>
    %55 = vector.shape_cast %54 : vector<1x16x64xbf16> to vector<16x64xbf16>
    %cst_51 = arith.constant dense<0.000000e+00> : vector<16x128xf32>
    %56 = tpu.matmul %55, %53, %cst_51 {dimension_numbers = #tpu.dot_dimension_numbers<[1], [0], [0], [1], [0, 0, 1, 1], [], []>} : vector<16x64xbf16>, vector<64x128xbf16>, vector<16x128xf32> -> vector<16x128xf32>
    %57 = arith.addf %51, %56 : vector<16x128xf32>
    %c0_52 = arith.constant 0 : index
    %c0_53 = arith.constant 0 : index
    %58 = vector.load %arg7[%c0_52, %c0_53] : memref<16x128xf32, #tpu.memory_space<vmem>>, vector<16x128xf32>
    tpu.vector_store %arg7[%c0_52, %c0_53], %57 {strides = array<i32>} : memref<16x128xf32, #tpu.memory_space<vmem>>, vector<16x128xf32>,
    %c0_i32_54 = arith.constant 0 : i32
    %59 = arith.cmpi eq, %arg1, %c0_i32_54 : i32
    %60 = arith.extui %59 : i1 to i32
    %c0_i32_55 = arith.constant 0 : i32
    %61 = arith.cmpi ne, %60, %c0_i32_55 : i32
    scf.if %61 {
      %c0_56 = arith.constant 0 : index
      %c0_57 = arith.constant 0 : index
      %62 = vector.load %arg7[%c0_56, %c0_57] : memref<16x128xf32, #tpu.memory_space<vmem>>, vector<16x128xf32>
      %c0_58 = arith.constant 0 : index
      %c0_59 = arith.constant 0 : index
      %63 = vector.load %arg4[%c0_58, %c0_59] : memref<16x1xf32, #tpu.memory_space<vmem>>, vector<16x1xf32>
      %64 = vector.broadcast %63 : vector<16x1xf32> to vector<16x128xf32>
      %65 = arith.addf %62, %64 : vector<16x128xf32>
      %cst_60 = arith.constant 0.000000e+00 : f32
      %66 = vector.broadcast %cst_60 : f32 to vector<16x128xf32>
      %67 = arith.maximumf %65, %66 : vector<16x128xf32>
      %c0_61 = arith.constant 0 : index
      %c0_62 = arith.constant 0 : index
      %68 = vector.load %arg5[%c0_61, %c0_62] : memref<1x128xf32, #tpu.memory_space<vmem>>, vector<1x128xf32>
      %69 = vector.broadcast %68 : vector<1x128xf32> to vector<16x128xf32>
      %70 = arith.mulf %67, %69 : vector<16x128xf32>
      %71 = arith.truncf %70 : vector<16x128xf32> to vector<16x128xbf16>
      %c0_63 = arith.constant 0 : index
      %c0_64 = arith.constant 0 : index
      %c0_65 = arith.constant 0 : index
      %72 = vector.load %arg6[%c0_63, %c0_64, %c0_65] : memref<1x16x128xbf16, #tpu.memory_space<vmem>>, vector<1x16x128xbf16>
      %73 = vector.shape_cast %72 : vector<1x16x128xbf16> to vector<16x128xbf16>
      %74 = vector.shape_cast %71 : vector<16x128xbf16> to vector<1x16x128xbf16>
      tpu.vector_store %arg6[%c0_63, %c0_64, %c0_65], %74 {strides = array<i32>} : memref<1x16x128xbf16, #tpu.memory_space<vmem>>, vector<1x16x128xbf16>,
    } else {
    }
    return
  }
  func.func @transform_0(%arg0: i32, %arg1: i32) -> (i32, i32, i32) {
    %c0_i32 = arith.constant 0 : i32
    %c0_i32_0 = arith.constant 0 : i32
    return %arg0, %arg1, %c0_i32 : i32, i32, i32
  }
  func.func @transform_1(%arg0: i32, %arg1: i32) -> (i32, i32, i32) {
    %c0_i32 = arith.constant 0 : i32
    %c0_i32_0 = arith.constant 0 : i32
    %c0_i32_1 = arith.constant 0 : i32
    return %c0_i32, %c0_i32_0, %arg1 : i32, i32, i32
  }
  func.func @transform_2(%arg0: i32, %arg1: i32) -> (i32, i32) {
    %c0_i32 = arith.constant 0 : i32
    %c0_i32_0 = arith.constant 0 : i32
    %c0_i32_1 = arith.constant 0 : i32
    return %c0_i32, %c0_i32_0 : i32, i32
  }
  func.func @transform_3(%arg0: i32, %arg1: i32) -> (i32, i32) {
    %c0_i32 = arith.constant 0 : i32
    %c0_i32_0 = arith.constant 0 : i32
    %c0_i32_1 = arith.constant 0 : i32
    return %c0_i32, %c0_i32_0 : i32, i32
  }
  func.func @transform_4(%arg0: i32, %arg1: i32) -> (i32, i32, i32) {
    %c0_i32 = arith.constant 0 : i32
    %c0_i32_0 = arith.constant 0 : i32
    %c0_i32_1 = arith.constant 0 : i32
    return %arg0, %c0_i32, %c0_i32_0 : i32, i32, i32
  }
}

module attributes {stable_mosaic.version = 11 : i64} {
  func.func @_pam_qkv_kernel(%arg0: i32, %arg1: memref<1x16x128xbf16, #tpu.memory_space<vmem>>, %arg2: memref<2x16xbf16, #tpu.memory_space<vmem>>, %arg3: memref<2x1xf32, #tpu.memory_space<vmem>>, %arg4: memref<2x16xbf16, #tpu.memory_space<vmem>>, %arg5: memref<2x1xf32, #tpu.memory_space<vmem>>, %arg6: memref<16x16xbf16, #tpu.memory_space<vmem>>, %arg7: memref<16x1xf32, #tpu.memory_space<vmem>>, %arg8: memref<1x2x128xbf16, #tpu.memory_space<vmem>>, %arg9: memref<1x2x128xbf16, #tpu.memory_space<vmem>>, %arg10: memref<1x16x128xbf16, #tpu.memory_space<vmem>>) attributes {dimension_semantics = [#tpu.dimension_semantics<parallel>], iteration_bounds = array<i64: 2>, scalar_prefetch = 0 : i64, scratch_operands = 0 : i64, tpu.core_type = #tpu.core_type<tc>, window_params = [{transform_indices = @transform_0, window_bounds = array<i64: 1, 16, 128>}, {pipeline_mode = #tpu.pipeline_mode<synchronous>, transform_indices = @transform_1, window_bounds = array<i64: 2, 16>}, {pipeline_mode = #tpu.pipeline_mode<synchronous>, transform_indices = @transform_2, window_bounds = array<i64: 2, 1>}, {pipeline_mode = #tpu.pipeline_mode<synchronous>, transform_indices = @transform_3, window_bounds = array<i64: 2, 16>}, {pipeline_mode = #tpu.pipeline_mode<synchronous>, transform_indices = @transform_4, window_bounds = array<i64: 2, 1>}, {pipeline_mode = #tpu.pipeline_mode<synchronous>, transform_indices = @transform_5, window_bounds = array<i64: 16, 16>}, {pipeline_mode = #tpu.pipeline_mode<synchronous>, transform_indices = @transform_6, window_bounds = array<i64: 16, 1>}, {transform_indices = @transform_7, window_bounds = array<i64: 1, 2, 128>}, {transform_indices = @transform_8, window_bounds = array<i64: 1, 2, 128>}, {transform_indices = @transform_9, window_bounds = array<i64: 1, 16, 128>}]} {
    %c0 = arith.constant 0 : index
    %c0_0 = arith.constant 0 : index
    %c0_1 = arith.constant 0 : index
    %0 = vector.load %arg1[%c0, %c0_0, %c0_1] : memref<1x16x128xbf16, #tpu.memory_space<vmem>>, vector<1x16x128xbf16>
    %1 = vector.shape_cast %0 : vector<1x16x128xbf16> to vector<16x128xbf16>
    %c0_2 = arith.constant 0 : index
    %c0_3 = arith.constant 0 : index
    %2 = vector.load %arg2[%c0_2, %c0_3] : memref<2x16xbf16, #tpu.memory_space<vmem>>, vector<2x16xbf16>
    %cst = arith.constant dense<0.000000e+00> : vector<2x128xf32>
    %3 = tpu.matmul %2, %1, %cst {dimension_numbers = #tpu.dot_dimension_numbers<[1], [0], [0], [1], [0, 0, 1, 1], [], []>} : vector<2x16xbf16>, vector<16x128xbf16>, vector<2x128xf32> -> vector<2x128xf32>
    %c0_4 = arith.constant 0 : index
    %c0_5 = arith.constant 0 : index
    %4 = vector.load %arg3[%c0_4, %c0_5] : memref<2x1xf32, #tpu.memory_space<vmem>>, vector<2x1xf32>
    %5 = vector.broadcast %4 : vector<2x1xf32> to vector<2x128xf32>
    %6 = arith.addf %3, %5 : vector<2x128xf32>
    %7 = arith.truncf %6 : vector<2x128xf32> to vector<2x128xbf16>
    %c0_6 = arith.constant 0 : index
    %c0_7 = arith.constant 0 : index
    %c0_8 = arith.constant 0 : index
    %8 = vector.load %arg8[%c0_6, %c0_7, %c0_8] : memref<1x2x128xbf16, #tpu.memory_space<vmem>>, vector<1x2x128xbf16>
    %9 = vector.shape_cast %8 : vector<1x2x128xbf16> to vector<2x128xbf16>
    %10 = vector.shape_cast %7 : vector<2x128xbf16> to vector<1x2x128xbf16>
    tpu.vector_store %arg8[%c0_6, %c0_7, %c0_8], %10 {strides = array<i32>} : memref<1x2x128xbf16, #tpu.memory_space<vmem>>, vector<1x2x128xbf16>,
    %c0_9 = arith.constant 0 : index
    %c0_10 = arith.constant 0 : index
    %11 = vector.load %arg4[%c0_9, %c0_10] : memref<2x16xbf16, #tpu.memory_space<vmem>>, vector<2x16xbf16>
    %cst_11 = arith.constant dense<0.000000e+00> : vector<2x128xf32>
    %12 = tpu.matmul %11, %1, %cst_11 {dimension_numbers = #tpu.dot_dimension_numbers<[1], [0], [0], [1], [0, 0, 1, 1], [], []>} : vector<2x16xbf16>, vector<16x128xbf16>, vector<2x128xf32> -> vector<2x128xf32>
    %c0_12 = arith.constant 0 : index
    %c0_13 = arith.constant 0 : index
    %13 = vector.load %arg5[%c0_12, %c0_13] : memref<2x1xf32, #tpu.memory_space<vmem>>, vector<2x1xf32>
    %14 = vector.broadcast %13 : vector<2x1xf32> to vector<2x128xf32>
    %15 = arith.addf %12, %14 : vector<2x128xf32>
    %16 = arith.truncf %15 : vector<2x128xf32> to vector<2x128xbf16>
    %c0_14 = arith.constant 0 : index
    %c0_15 = arith.constant 0 : index
    %c0_16 = arith.constant 0 : index
    %17 = vector.load %arg9[%c0_14, %c0_15, %c0_16] : memref<1x2x128xbf16, #tpu.memory_space<vmem>>, vector<1x2x128xbf16>
    %18 = vector.shape_cast %17 : vector<1x2x128xbf16> to vector<2x128xbf16>
    %19 = vector.shape_cast %16 : vector<2x128xbf16> to vector<1x2x128xbf16>
    tpu.vector_store %arg9[%c0_14, %c0_15, %c0_16], %19 {strides = array<i32>} : memref<1x2x128xbf16, #tpu.memory_space<vmem>>, vector<1x2x128xbf16>,
    %c0_17 = arith.constant 0 : index
    %c0_18 = arith.constant 0 : index
    %20 = vector.load %arg6[%c0_17, %c0_18] : memref<16x16xbf16, #tpu.memory_space<vmem>>, vector<16x16xbf16>
    %cst_19 = arith.constant dense<0.000000e+00> : vector<16x128xf32>
    %21 = tpu.matmul %20, %1, %cst_19 {dimension_numbers = #tpu.dot_dimension_numbers<[1], [0], [0], [1], [0, 0, 1, 1], [], []>} : vector<16x16xbf16>, vector<16x128xbf16>, vector<16x128xf32> -> vector<16x128xf32>
    %c0_20 = arith.constant 0 : index
    %c0_21 = arith.constant 0 : index
    %22 = vector.load %arg7[%c0_20, %c0_21] : memref<16x1xf32, #tpu.memory_space<vmem>>, vector<16x1xf32>
    %23 = vector.broadcast %22 : vector<16x1xf32> to vector<16x128xf32>
    %24 = arith.addf %21, %23 : vector<16x128xf32>
    %25 = arith.truncf %24 : vector<16x128xf32> to vector<16x128xbf16>
    %c0_22 = arith.constant 0 : index
    %c0_23 = arith.constant 0 : index
    %c0_24 = arith.constant 0 : index
    %26 = vector.load %arg10[%c0_22, %c0_23, %c0_24] : memref<1x16x128xbf16, #tpu.memory_space<vmem>>, vector<1x16x128xbf16>
    %27 = vector.shape_cast %26 : vector<1x16x128xbf16> to vector<16x128xbf16>
    %28 = vector.shape_cast %25 : vector<16x128xbf16> to vector<1x16x128xbf16>
    tpu.vector_store %arg10[%c0_22, %c0_23, %c0_24], %28 {strides = array<i32>} : memref<1x16x128xbf16, #tpu.memory_space<vmem>>, vector<1x16x128xbf16>,
    return
  }
  func.func @transform_0(%arg0: i32) -> (i32, i32, i32) {
    %c0_i32 = arith.constant 0 : i32
    %c0_i32_0 = arith.constant 0 : i32
    %c0_i32_1 = arith.constant 0 : i32
    return %arg0, %c0_i32, %c0_i32_0 : i32, i32, i32
  }
  func.func @transform_1(%arg0: i32) -> (i32, i32) {
    %c0_i32 = arith.constant 0 : i32
    %c0_i32_0 = arith.constant 0 : i32
    %c0_i32_1 = arith.constant 0 : i32
    return %c0_i32, %c0_i32_0 : i32, i32
  }
  func.func @transform_2(%arg0: i32) -> (i32, i32) {
    %c0_i32 = arith.constant 0 : i32
    %c0_i32_0 = arith.constant 0 : i32
    %c0_i32_1 = arith.constant 0 : i32
    return %c0_i32, %c0_i32_0 : i32, i32
  }
  func.func @transform_3(%arg0: i32) -> (i32, i32) {
    %c0_i32 = arith.constant 0 : i32
    %c0_i32_0 = arith.constant 0 : i32
    %c0_i32_1 = arith.constant 0 : i32
    return %c0_i32, %c0_i32_0 : i32, i32
  }
  func.func @transform_4(%arg0: i32) -> (i32, i32) {
    %c0_i32 = arith.constant 0 : i32
    %c0_i32_0 = arith.constant 0 : i32
    %c0_i32_1 = arith.constant 0 : i32
    return %c0_i32, %c0_i32_0 : i32, i32
  }
  func.func @transform_5(%arg0: i32) -> (i32, i32) {
    %c0_i32 = arith.constant 0 : i32
    %c0_i32_0 = arith.constant 0 : i32
    %c0_i32_1 = arith.constant 0 : i32
    return %c0_i32, %c0_i32_0 : i32, i32
  }
  func.func @transform_6(%arg0: i32) -> (i32, i32) {
    %c0_i32 = arith.constant 0 : i32
    %c0_i32_0 = arith.constant 0 : i32
    %c0_i32_1 = arith.constant 0 : i32
    return %c0_i32, %c0_i32_0 : i32, i32
  }
  func.func @transform_7(%arg0: i32) -> (i32, i32, i32) {
    %c0_i32 = arith.constant 0 : i32
    %c0_i32_0 = arith.constant 0 : i32
    %c0_i32_1 = arith.constant 0 : i32
    return %arg0, %c0_i32, %c0_i32_0 : i32, i32, i32
  }
  func.func @transform_8(%arg0: i32) -> (i32, i32, i32) {
    %c0_i32 = arith.constant 0 : i32
    %c0_i32_0 = arith.constant 0 : i32
    %c0_i32_1 = arith.constant 0 : i32
    return %arg0, %c0_i32, %c0_i32_0 : i32, i32, i32
  }
  func.func @transform_9(%arg0: i32) -> (i32, i32, i32) {
    %c0_i32 = arith.constant 0 : i32
    %c0_i32_0 = arith.constant 0 : i32
    %c0_i32_1 = arith.constant 0 : i32
    return %arg0, %c0_i32, %c0_i32_0 : i32, i32, i32
  }
}

module attributes {stable_mosaic.version = 11 : i64} {
  func.func @_pam_attn_kernel(%arg0: i32, %arg1: i32, %arg2: memref<1x2x128xbf16, #tpu.memory_space<vmem>>, %arg3: memref<1x2x128xbf16, #tpu.memory_space<vmem>>, %arg4: memref<1x16x128xbf16, #tpu.memory_space<vmem>>, %arg5: memref<1x16x128xbf16, #tpu.memory_space<vmem>>, %arg6: memref<128x1xf32, #tpu.memory_space<vmem>>, %arg7: memref<1x128xf32, #tpu.memory_space<vmem>>, %arg8: memref<1x1xf32, #tpu.memory_space<smem>>, %arg9: memref<1x16x128xbf16, #tpu.memory_space<vmem>>) attributes {dimension_semantics = [#tpu.dimension_semantics<parallel>, #tpu.dimension_semantics<parallel>], iteration_bounds = array<i64: 2, 1>, scalar_prefetch = 0 : i64, scratch_operands = 0 : i64, tpu.core_type = #tpu.core_type<tc>, window_params = [{transform_indices = @transform_0, window_bounds = array<i64: 1, 2, 128>}, {transform_indices = @transform_1, window_bounds = array<i64: 1, 2, 128>}, {transform_indices = @transform_2, window_bounds = array<i64: 1, 16, 128>}, {transform_indices = @transform_3, window_bounds = array<i64: 1, 16, 128>}, {pipeline_mode = #tpu.pipeline_mode<synchronous>, transform_indices = @transform_4, window_bounds = array<i64: 128, 1>}, {transform_indices = @transform_5, window_bounds = array<i64: 1, 128>}, {transform_indices = @transform_6, window_bounds = array<i64: 1, 1>}, {transform_indices = @transform_7, window_bounds = array<i64: 1, 16, 128>}]} {
    %c0 = arith.constant 0 : index
    %c0_0 = arith.constant 0 : index
    %c0_1 = arith.constant 0 : index
    %0 = vector.load %arg3[%c0, %c0_0, %c0_1] : memref<1x2x128xbf16, #tpu.memory_space<vmem>>, vector<1x2x128xbf16>
    %1 = vector.shape_cast %0 : vector<1x2x128xbf16> to vector<2x128xbf16>
    %c0_2 = arith.constant 0 : index
    %c0_3 = arith.constant 0 : index
    %c0_4 = arith.constant 0 : index
    %2 = vector.load %arg2[%c0_2, %c0_3, %c0_4] : memref<1x2x128xbf16, #tpu.memory_space<vmem>>, vector<1x2x128xbf16>
    %3 = vector.shape_cast %2 : vector<1x2x128xbf16> to vector<2x128xbf16>
    %cst = arith.constant dense<0.000000e+00> : vector<128x128xf32>
    %4 = tpu.matmul %1, %3, %cst {dimension_numbers = #tpu.dot_dimension_numbers<[0], [0], [1], [1], [0, 1, 1, 1], [], []>} : vector<2x128xbf16>, vector<2x128xbf16>, vector<128x128xf32> -> vector<128x128xf32>
    %c0_5 = arith.constant 0 : index
    %c0_6 = arith.constant 0 : index
    %5 = vector.load %arg6[%c0_5, %c0_6] : memref<128x1xf32, #tpu.memory_space<vmem>>, vector<128x1xf32>
    %6 = vector.broadcast %5 : vector<128x1xf32> to vector<128x128xf32>
    %7 = arith.addf %4, %6 : vector<128x128xf32>
    %cst_7 = arith.constant dense<0xFF800000> : vector<128xf32>
    %8 = vector.multi_reduction <maximumf>, %7, %cst_7 [0] : vector<128x128xf32> to vector<128xf32>
    %9 = vector.shape_cast %8 : vector<128xf32> to vector<1x128xf32>
    %10 = vector.broadcast %9 : vector<1x128xf32> to vector<128x128xf32>
    %11 = arith.subf %7, %10 : vector<128x128xf32>
    %12 = math.exp %11 : vector<128x128xf32>
    %cst_8 = arith.constant dense<0.000000e+00> : vector<128xf32>
    %13 = vector.multi_reduction <add>, %12, %cst_8 [0] : vector<128x128xf32> to vector<128xf32>
    %14 = vector.shape_cast %13 : vector<128xf32> to vector<1x128xf32>
    %c0_9 = arith.constant 0 : index
    %c0_10 = arith.constant 0 : index
    %c0_11 = arith.constant 0 : index
    %15 = vector.load %arg4[%c0_9, %c0_10, %c0_11] : memref<1x16x128xbf16, #tpu.memory_space<vmem>>, vector<1x16x128xbf16>
    %16 = vector.shape_cast %15 : vector<1x16x128xbf16> to vector<16x128xbf16>
    %17 = arith.truncf %12 : vector<128x128xf32> to vector<128x128xbf16>
    %cst_12 = arith.constant dense<0.000000e+00> : vector<16x128xf32>
    %18 = tpu.matmul %16, %17, %cst_12 {dimension_numbers = #tpu.dot_dimension_numbers<[1], [0], [0], [1], [0, 0, 1, 1], [], []>} : vector<16x128xbf16>, vector<128x128xbf16>, vector<16x128xf32> -> vector<16x128xf32>
    %cst_13 = arith.constant 1.000000e+00 : f32
    %19 = vector.broadcast %cst_13 : f32 to vector<1x128xf32>
    %20 = arith.divf %19, %14 : vector<1x128xf32>
    %21 = vector.broadcast %20 : vector<1x128xf32> to vector<16x128xf32>
    %22 = arith.mulf %18, %21 : vector<16x128xf32>
    %c0_14 = arith.constant 0 : index
    %c0_15 = arith.constant 0 : index
    %23 = memref.load %arg8[%c0_14, %c0_15] : memref<1x1xf32, #tpu.memory_space<smem>>
    %24 = vector.broadcast %23 : f32 to vector<16x128xf32>
    %25 = arith.mulf %24, %22 : vector<16x128xf32>
    %c0_16 = arith.constant 0 : index
    %c0_17 = arith.constant 0 : index
    %c0_18 = arith.constant 0 : index
    %26 = vector.load %arg5[%c0_16, %c0_17, %c0_18] : memref<1x16x128xbf16, #tpu.memory_space<vmem>>, vector<1x16x128xbf16>
    %27 = vector.shape_cast %26 : vector<1x16x128xbf16> to vector<16x128xbf16>
    %28 = arith.extf %27 : vector<16x128xbf16> to vector<16x128xf32>
    %29 = arith.addf %25, %28 : vector<16x128xf32>
    %c0_19 = arith.constant 0 : index
    %c0_20 = arith.constant 0 : index
    %30 = vector.load %arg7[%c0_19, %c0_20] : memref<1x128xf32, #tpu.memory_space<vmem>>, vector<1x128xf32>
    %31 = vector.broadcast %30 : vector<1x128xf32> to vector<16x128xf32>
    %32 = arith.mulf %29, %31 : vector<16x128xf32>
    %33 = arith.truncf %32 : vector<16x128xf32> to vector<16x128xbf16>
    %c0_21 = arith.constant 0 : index
    %c0_22 = arith.constant 0 : index
    %c0_23 = arith.constant 0 : index
    %34 = vector.load %arg9[%c0_21, %c0_22, %c0_23] : memref<1x16x128xbf16, #tpu.memory_space<vmem>>, vector<1x16x128xbf16>
    %35 = vector.shape_cast %34 : vector<1x16x128xbf16> to vector<16x128xbf16>
    %36 = vector.shape_cast %33 : vector<16x128xbf16> to vector<1x16x128xbf16>
    tpu.vector_store %arg9[%c0_21, %c0_22, %c0_23], %36 {strides = array<i32>} : memref<1x16x128xbf16, #tpu.memory_space<vmem>>, vector<1x16x128xbf16>,
    return
  }
  func.func @transform_0(%arg0: i32, %arg1: i32) -> (i32, i32, i32) {
    %c0_i32 = arith.constant 0 : i32
    %c0_i32_0 = arith.constant 0 : i32
    return %arg0, %c0_i32, %arg1 : i32, i32, i32
  }
  func.func @transform_1(%arg0: i32, %arg1: i32) -> (i32, i32, i32) {
    %c0_i32 = arith.constant 0 : i32
    %c0_i32_0 = arith.constant 0 : i32
    %c0_i32_1 = arith.constant 0 : i32
    return %arg0, %c0_i32, %c0_i32_0 : i32, i32, i32
  }
  func.func @transform_2(%arg0: i32, %arg1: i32) -> (i32, i32, i32) {
    %c0_i32 = arith.constant 0 : i32
    %c0_i32_0 = arith.constant 0 : i32
    %c0_i32_1 = arith.constant 0 : i32
    return %arg0, %c0_i32, %c0_i32_0 : i32, i32, i32
  }
  func.func @transform_3(%arg0: i32, %arg1: i32) -> (i32, i32, i32) {
    %c0_i32 = arith.constant 0 : i32
    %c0_i32_0 = arith.constant 0 : i32
    return %arg0, %c0_i32, %arg1 : i32, i32, i32
  }
  func.func @transform_4(%arg0: i32, %arg1: i32) -> (i32, i32) {
    %c0_i32 = arith.constant 0 : i32
    %c0_i32_0 = arith.constant 0 : i32
    %c0_i32_1 = arith.constant 0 : i32
    return %c0_i32, %c0_i32_0 : i32, i32
  }
  func.func @transform_5(%arg0: i32, %arg1: i32) -> (i32, i32) {
    %c0_i32 = arith.constant 0 : i32
    %c0_i32_0 = arith.constant 0 : i32
    return %c0_i32, %arg1 : i32, i32
  }
  func.func @transform_6(%arg0: i32, %arg1: i32) -> (i32, i32) {
    %c0_i32 = arith.constant 0 : i32
    %c0_i32_0 = arith.constant 0 : i32
    %c0_i32_1 = arith.constant 0 : i32
    return %c0_i32, %c0_i32_0 : i32, i32
  }
  func.func @transform_7(%arg0: i32, %arg1: i32) -> (i32, i32, i32) {
    %c0_i32 = arith.constant 0 : i32
    %c0_i32_0 = arith.constant 0 : i32
    return %arg0, %c0_i32, %arg1 : i32, i32, i32
  }
}

module attributes {stable_mosaic.version = 11 : i64} {
  func.func @_conv3x3_kernel(%arg0: i32, %arg1: i32, %arg2: memref<1x16x256xbf16, #tpu.memory_space<vmem>>, %arg3: memref<9x16x16xbf16, #tpu.memory_space<vmem>>, %arg4: memref<16x1xf32, #tpu.memory_space<vmem>>, %arg5: memref<1x128xf32, #tpu.memory_space<vmem>>, %arg6: memref<1x16x128xbf16, #tpu.memory_space<vmem>>, %arg7: memref<16x128xf32, #tpu.memory_space<vmem>>) attributes {dimension_semantics = [#tpu.dimension_semantics<parallel>, #tpu.dimension_semantics<arbitrary>], iteration_bounds = array<i64: 2, 1>, scalar_prefetch = 0 : i64, scratch_operands = 1 : i64, tpu.core_type = #tpu.core_type<tc>, window_params = [{transform_indices = @transform_0, window_bounds = array<i64: 1, 16, 256>}, {transform_indices = @transform_1, window_bounds = array<i64: 9, 16, 16>}, {pipeline_mode = #tpu.pipeline_mode<synchronous>, transform_indices = @transform_2, window_bounds = array<i64: 16, 1>}, {pipeline_mode = #tpu.pipeline_mode<synchronous>, transform_indices = @transform_3, window_bounds = array<i64: 1, 128>}, {transform_indices = @transform_4, window_bounds = array<i64: 1, 16, 128>}]} {
    %c0_i32 = arith.constant 0 : i32
    %0 = arith.cmpi eq, %arg1, %c0_i32 : i32
    %1 = arith.extui %0 : i1 to i32
    %c0_i32_0 = arith.constant 0 : i32
    %2 = arith.cmpi ne, %1, %c0_i32_0 : i32
    scf.if %2 {
      %cst_56 = arith.constant 0.000000e+00 : f32
      %62 = vector.broadcast %cst_56 : f32 to vector<16x128xf32>
      %c0_57 = arith.constant 0 : index
      %c0_58 = arith.constant 0 : index
      %63 = vector.load %arg7[%c0_57, %c0_58] : memref<16x128xf32, #tpu.memory_space<vmem>>, vector<16x128xf32>
      tpu.vector_store %arg7[%c0_57, %c0_58], %62 {strides = array<i32>} : memref<16x128xf32, #tpu.memory_space<vmem>>, vector<16x128xf32>,
    } else {
    }
    %c0 = arith.constant 0 : index
    %c0_1 = arith.constant 0 : index
    %3 = vector.load %arg7[%c0, %c0_1] : memref<16x128xf32, #tpu.memory_space<vmem>>, vector<16x128xf32>
    %c0_2 = arith.constant 0 : index
    %c0_3 = arith.constant 0 : index
    %c0_4 = arith.constant 0 : index
    %4 = vector.load %arg2[%c0_2, %c0_3, %c0_4] : memref<1x16x256xbf16, #tpu.memory_space<vmem>>, vector<1x16x128xbf16>
    %5 = vector.shape_cast %4 : vector<1x16x128xbf16> to vector<16x128xbf16>
    %c0_5 = arith.constant 0 : index
    %c0_6 = arith.constant 0 : index
    %c0_7 = arith.constant 0 : index
    %6 = vector.load %arg3[%c0_5, %c0_6, %c0_7] : memref<9x16x16xbf16, #tpu.memory_space<vmem>>, vector<1x16x16xbf16>
    %7 = vector.shape_cast %6 : vector<1x16x16xbf16> to vector<16x16xbf16>
    %cst = arith.constant dense<0.000000e+00> : vector<16x128xf32>
    %8 = tpu.matmul %7, %5, %cst {dimension_numbers = #tpu.dot_dimension_numbers<[1], [0], [0], [1], [0, 0, 1, 1], [], []>} : vector<16x16xbf16>, vector<16x128xbf16>, vector<16x128xf32> -> vector<16x128xf32>
    %9 = arith.addf %3, %8 : vector<16x128xf32>
    %c0_8 = arith.constant 0 : index
    %c0_9 = arith.constant 0 : index
    %c1 = arith.constant 1 : index
    %10 = vector.load %arg2[%c0_8, %c0_9, %c1] : memref<1x16x256xbf16, #tpu.memory_space<vmem>>, vector<1x16x128xbf16>
    %11 = vector.shape_cast %10 : vector<1x16x128xbf16> to vector<16x128xbf16>
    %c1_10 = arith.constant 1 : index
    %c0_11 = arith.constant 0 : index
    %c0_12 = arith.constant 0 : index
    %12 = vector.load %arg3[%c1_10, %c0_11, %c0_12] : memref<9x16x16xbf16, #tpu.memory_space<vmem>>, vector<1x16x16xbf16>
    %13 = vector.shape_cast %12 : vector<1x16x16xbf16> to vector<16x16xbf16>
    %cst_13 = arith.constant dense<0.000000e+00> : vector<16x128xf32>
    %14 = tpu.matmul %13, %11, %cst_13 {dimension_numbers = #tpu.dot_dimension_numbers<[1], [0], [0], [1], [0, 0, 1, 1], [], []>} : vector<16x16xbf16>, vector<16x128xbf16>, vector<16x128xf32> -> vector<16x128xf32>
    %15 = arith.addf %9, %14 : vector<16x128xf32>
    %c0_14 = arith.constant 0 : index
    %c0_15 = arith.constant 0 : index
    %c2 = arith.constant 2 : index
    %16 = vector.load %arg2[%c0_14, %c0_15, %c2] : memref<1x16x256xbf16, #tpu.memory_space<vmem>>, vector<1x16x128xbf16>
    %17 = vector.shape_cast %16 : vector<1x16x128xbf16> to vector<16x128xbf16>
    %c2_16 = arith.constant 2 : index
    %c0_17 = arith.constant 0 : index
    %c0_18 = arith.constant 0 : index
    %18 = vector.load %arg3[%c2_16, %c0_17, %c0_18] : memref<9x16x16xbf16, #tpu.memory_space<vmem>>, vector<1x16x16xbf16>
    %19 = vector.shape_cast %18 : vector<1x16x16xbf16> to vector<16x16xbf16>
    %cst_19 = arith.constant dense<0.000000e+00> : vector<16x128xf32>
    %20 = tpu.matmul %19, %17, %cst_19 {dimension_numbers = #tpu.dot_dimension_numbers<[1], [0], [0], [1], [0, 0, 1, 1], [], []>} : vector<16x16xbf16>, vector<16x128xbf16>, vector<16x128xf32> -> vector<16x128xf32>
    %21 = arith.addf %15, %20 : vector<16x128xf32>
    %c0_20 = arith.constant 0 : index
    %c0_21 = arith.constant 0 : index
    %c7 = arith.constant 7 : index
    %22 = vector.load %arg2[%c0_20, %c0_21, %c7] : memref<1x16x256xbf16, #tpu.memory_space<vmem>>, vector<1x16x128xbf16>
    %23 = vector.shape_cast %22 : vector<1x16x128xbf16> to vector<16x128xbf16>
    %c3 = arith.constant 3 : index
    %c0_22 = arith.constant 0 : index
    %c0_23 = arith.constant 0 : index
    %24 = vector.load %arg3[%c3, %c0_22, %c0_23] : memref<9x16x16xbf16, #tpu.memory_space<vmem>>, vector<1x16x16xbf16>
    %25 = vector.shape_cast %24 : vector<1x16x16xbf16> to vector<16x16xbf16>
    %cst_24 = arith.constant dense<0.000000e+00> : vector<16x128xf32>
    %26 = tpu.matmul %25, %23, %cst_24 {dimension_numbers = #tpu.dot_dimension_numbers<[1], [0], [0], [1], [0, 0, 1, 1], [], []>} : vector<16x16xbf16>, vector<16x128xbf16>, vector<16x128xf32> -> vector<16x128xf32>
    %27 = arith.addf %21, %26 : vector<16x128xf32>
    %c0_25 = arith.constant 0 : index
    %c0_26 = arith.constant 0 : index
    %c8 = arith.constant 8 : index
    %28 = vector.load %arg2[%c0_25, %c0_26, %c8] : memref<1x16x256xbf16, #tpu.memory_space<vmem>>, vector<1x16x128xbf16>
    %29 = vector.shape_cast %28 : vector<1x16x128xbf16> to vector<16x128xbf16>
    %c4 = arith.constant 4 : index
    %c0_27 = arith.constant 0 : index
    %c0_28 = arith.constant 0 : index
    %30 = vector.load %arg3[%c4, %c0_27, %c0_28] : memref<9x16x16xbf16, #tpu.memory_space<vmem>>, vector<1x16x16xbf16>
    %31 = vector.shape_cast %30 : vector<1x16x16xbf16> to vector<16x16xbf16>
    %cst_29 = arith.constant dense<0.000000e+00> : vector<16x128xf32>
    %32 = tpu.matmul %31, %29, %cst_29 {dimension_numbers = #tpu.dot_dimension_numbers<[1], [0], [0], [1], [0, 0, 1, 1], [], []>} : vector<16x16xbf16>, vector<16x128xbf16>, vector<16x128xf32> -> vector<16x128xf32>
    %33 = arith.addf %27, %32 : vector<16x128xf32>
    %c0_30 = arith.constant 0 : index
    %c0_31 = arith.constant 0 : index
    %c9 = arith.constant 9 : index
    %34 = vector.load %arg2[%c0_30, %c0_31, %c9] : memref<1x16x256xbf16, #tpu.memory_space<vmem>>, vector<1x16x128xbf16>
    %35 = vector.shape_cast %34 : vector<1x16x128xbf16> to vector<16x128xbf16>
    %c5 = arith.constant 5 : index
    %c0_32 = arith.constant 0 : index
    %c0_33 = arith.constant 0 : index
    %36 = vector.load %arg3[%c5, %c0_32, %c0_33] : memref<9x16x16xbf16, #tpu.memory_space<vmem>>, vector<1x16x16xbf16>
    %37 = vector.shape_cast %36 : vector<1x16x16xbf16> to vector<16x16xbf16>
    %cst_34 = arith.constant dense<0.000000e+00> : vector<16x128xf32>
    %38 = tpu.matmul %37, %35, %cst_34 {dimension_numbers = #tpu.dot_dimension_numbers<[1], [0], [0], [1], [0, 0, 1, 1], [], []>} : vector<16x16xbf16>, vector<16x128xbf16>, vector<16x128xf32> -> vector<16x128xf32>
    %39 = arith.addf %33, %38 : vector<16x128xf32>
    %c0_35 = arith.constant 0 : index
    %c0_36 = arith.constant 0 : index
    %c14 = arith.constant 14 : index
    %40 = vector.load %arg2[%c0_35, %c0_36, %c14] : memref<1x16x256xbf16, #tpu.memory_space<vmem>>, vector<1x16x128xbf16>
    %41 = vector.shape_cast %40 : vector<1x16x128xbf16> to vector<16x128xbf16>
    %c6 = arith.constant 6 : index
    %c0_37 = arith.constant 0 : index
    %c0_38 = arith.constant 0 : index
    %42 = vector.load %arg3[%c6, %c0_37, %c0_38] : memref<9x16x16xbf16, #tpu.memory_space<vmem>>, vector<1x16x16xbf16>
    %43 = vector.shape_cast %42 : vector<1x16x16xbf16> to vector<16x16xbf16>
    %cst_39 = arith.constant dense<0.000000e+00> : vector<16x128xf32>
    %44 = tpu.matmul %43, %41, %cst_39 {dimension_numbers = #tpu.dot_dimension_numbers<[1], [0], [0], [1], [0, 0, 1, 1], [], []>} : vector<16x16xbf16>, vector<16x128xbf16>, vector<16x128xf32> -> vector<16x128xf32>
    %45 = arith.addf %39, %44 : vector<16x128xf32>
    %c0_40 = arith.constant 0 : index
    %c0_41 = arith.constant 0 : index
    %c15 = arith.constant 15 : index
    %46 = vector.load %arg2[%c0_40, %c0_41, %c15] : memref<1x16x256xbf16, #tpu.memory_space<vmem>>, vector<1x16x128xbf16>
    %47 = vector.shape_cast %46 : vector<1x16x128xbf16> to vector<16x128xbf16>
    %c7_42 = arith.constant 7 : index
    %c0_43 = arith.constant 0 : index
    %c0_44 = arith.constant 0 : index
    %48 = vector.load %arg3[%c7_42, %c0_43, %c0_44] : memref<9x16x16xbf16, #tpu.memory_space<vmem>>, vector<1x16x16xbf16>
    %49 = vector.shape_cast %48 : vector<1x16x16xbf16> to vector<16x16xbf16>
    %cst_45 = arith.constant dense<0.000000e+00> : vector<16x128xf32>
    %50 = tpu.matmul %49, %47, %cst_45 {dimension_numbers = #tpu.dot_dimension_numbers<[1], [0], [0], [1], [0, 0, 1, 1], [], []>} : vector<16x16xbf16>, vector<16x128xbf16>, vector<16x128xf32> -> vector<16x128xf32>
    %51 = arith.addf %45, %50 : vector<16x128xf32>
    %c0_46 = arith.constant 0 : index
    %c0_47 = arith.constant 0 : index
    %c16 = arith.constant 16 : index
    %52 = vector.load %arg2[%c0_46, %c0_47, %c16] : memref<1x16x256xbf16, #tpu.memory_space<vmem>>, vector<1x16x128xbf16>
    %53 = vector.shape_cast %52 : vector<1x16x128xbf16> to vector<16x128xbf16>
    %c8_48 = arith.constant 8 : index
    %c0_49 = arith.constant 0 : index
    %c0_50 = arith.constant 0 : index
    %54 = vector.load %arg3[%c8_48, %c0_49, %c0_50] : memref<9x16x16xbf16, #tpu.memory_space<vmem>>, vector<1x16x16xbf16>
    %55 = vector.shape_cast %54 : vector<1x16x16xbf16> to vector<16x16xbf16>
    %cst_51 = arith.constant dense<0.000000e+00> : vector<16x128xf32>
    %56 = tpu.matmul %55, %53, %cst_51 {dimension_numbers = #tpu.dot_dimension_numbers<[1], [0], [0], [1], [0, 0, 1, 1], [], []>} : vector<16x16xbf16>, vector<16x128xbf16>, vector<16x128xf32> -> vector<16x128xf32>
    %57 = arith.addf %51, %56 : vector<16x128xf32>
    %c0_52 = arith.constant 0 : index
    %c0_53 = arith.constant 0 : index
    %58 = vector.load %arg7[%c0_52, %c0_53] : memref<16x128xf32, #tpu.memory_space<vmem>>, vector<16x128xf32>
    tpu.vector_store %arg7[%c0_52, %c0_53], %57 {strides = array<i32>} : memref<16x128xf32, #tpu.memory_space<vmem>>, vector<16x128xf32>,
    %c0_i32_54 = arith.constant 0 : i32
    %59 = arith.cmpi eq, %arg1, %c0_i32_54 : i32
    %60 = arith.extui %59 : i1 to i32
    %c0_i32_55 = arith.constant 0 : i32
    %61 = arith.cmpi ne, %60, %c0_i32_55 : i32
    scf.if %61 {
      %c0_56 = arith.constant 0 : index
      %c0_57 = arith.constant 0 : index
      %62 = vector.load %arg7[%c0_56, %c0_57] : memref<16x128xf32, #tpu.memory_space<vmem>>, vector<16x128xf32>
      %c0_58 = arith.constant 0 : index
      %c0_59 = arith.constant 0 : index
      %63 = vector.load %arg4[%c0_58, %c0_59] : memref<16x1xf32, #tpu.memory_space<vmem>>, vector<16x1xf32>
      %64 = vector.broadcast %63 : vector<16x1xf32> to vector<16x128xf32>
      %65 = arith.addf %62, %64 : vector<16x128xf32>
      %cst_60 = arith.constant 0.000000e+00 : f32
      %66 = vector.broadcast %cst_60 : f32 to vector<16x128xf32>
      %67 = arith.maximumf %65, %66 : vector<16x128xf32>
      %c0_61 = arith.constant 0 : index
      %c0_62 = arith.constant 0 : index
      %68 = vector.load %arg5[%c0_61, %c0_62] : memref<1x128xf32, #tpu.memory_space<vmem>>, vector<1x128xf32>
      %69 = vector.broadcast %68 : vector<1x128xf32> to vector<16x128xf32>
      %70 = arith.mulf %67, %69 : vector<16x128xf32>
      %71 = arith.truncf %70 : vector<16x128xf32> to vector<16x128xbf16>
      %c0_63 = arith.constant 0 : index
      %c0_64 = arith.constant 0 : index
      %c0_65 = arith.constant 0 : index
      %72 = vector.load %arg6[%c0_63, %c0_64, %c0_65] : memref<1x16x128xbf16, #tpu.memory_space<vmem>>, vector<1x16x128xbf16>
      %73 = vector.shape_cast %72 : vector<1x16x128xbf16> to vector<16x128xbf16>
      %74 = vector.shape_cast %71 : vector<16x128xbf16> to vector<1x16x128xbf16>
      tpu.vector_store %arg6[%c0_63, %c0_64, %c0_65], %74 {strides = array<i32>} : memref<1x16x128xbf16, #tpu.memory_space<vmem>>, vector<1x16x128xbf16>,
    } else {
    }
    return
  }
  func.func @transform_0(%arg0: i32, %arg1: i32) -> (i32, i32, i32) {
    %c0_i32 = arith.constant 0 : i32
    %c0_i32_0 = arith.constant 0 : i32
    return %arg0, %arg1, %c0_i32 : i32, i32, i32
  }
  func.func @transform_1(%arg0: i32, %arg1: i32) -> (i32, i32, i32) {
    %c0_i32 = arith.constant 0 : i32
    %c0_i32_0 = arith.constant 0 : i32
    %c0_i32_1 = arith.constant 0 : i32
    return %c0_i32, %c0_i32_0, %arg1 : i32, i32, i32
  }
  func.func @transform_2(%arg0: i32, %arg1: i32) -> (i32, i32) {
    %c0_i32 = arith.constant 0 : i32
    %c0_i32_0 = arith.constant 0 : i32
    %c0_i32_1 = arith.constant 0 : i32
    return %c0_i32, %c0_i32_0 : i32, i32
  }
  func.func @transform_3(%arg0: i32, %arg1: i32) -> (i32, i32) {
    %c0_i32 = arith.constant 0 : i32
    %c0_i32_0 = arith.constant 0 : i32
    %c0_i32_1 = arith.constant 0 : i32
    return %c0_i32, %c0_i32_0 : i32, i32
  }
  func.func @transform_4(%arg0: i32, %arg1: i32) -> (i32, i32, i32) {
    %c0_i32 = arith.constant 0 : i32
    %c0_i32_0 = arith.constant 0 : i32
    %c0_i32_1 = arith.constant 0 : i32
    return %arg0, %c0_i32, %c0_i32_0 : i32, i32, i32
  }
}

module attributes {stable_mosaic.version = 11 : i64} {
  func.func @_cam_kernel(%arg0: i32, %arg1: memref<1x16x128xbf16, #tpu.memory_space<vmem>>, %arg2: memref<1x1xf32, #tpu.memory_space<smem>>, %arg3: memref<1x16x128xbf16, #tpu.memory_space<vmem>>) attributes {dimension_semantics = [#tpu.dimension_semantics<parallel>], iteration_bounds = array<i64: 2>, scalar_prefetch = 0 : i64, scratch_operands = 0 : i64, tpu.core_type = #tpu.core_type<tc>, window_params = [{transform_indices = @transform_0, window_bounds = array<i64: 1, 16, 128>}, {transform_indices = @transform_1, window_bounds = array<i64: 1, 1>}, {transform_indices = @transform_2, window_bounds = array<i64: 1, 16, 128>}]} {
    %c0 = arith.constant 0 : index
    %c0_0 = arith.constant 0 : index
    %c0_1 = arith.constant 0 : index
    %0 = vector.load %arg1[%c0, %c0_0, %c0_1] : memref<1x16x128xbf16, #tpu.memory_space<vmem>>, vector<1x16x128xbf16>
    %1 = vector.shape_cast %0 : vector<1x16x128xbf16> to vector<16x128xbf16>
    %cst = arith.constant dense<0.000000e+00> : vector<16x16xf32>
    %2 = tpu.matmul %1, %1, %cst {dimension_numbers = #tpu.dot_dimension_numbers<[1], [1], [0], [0], [0, 0, 1, 0], [], []>} : vector<16x128xbf16>, vector<16x128xbf16>, vector<16x16xf32> -> vector<16x16xf32>
    %cst_2 = arith.constant dense<0xFF800000> : vector<16xf32>
    %3 = vector.multi_reduction <maximumf>, %2, %cst_2 [1] : vector<16x16xf32> to vector<16xf32>
    %4 = vector.shape_cast %3 : vector<16xf32> to vector<16x1xf32>
    %5 = vector.broadcast %4 : vector<16x1xf32> to vector<16x16xf32>
    %6 = arith.subf %5, %2 : vector<16x16xf32>
    %cst_3 = arith.constant dense<0xFF800000> : vector<16xf32>
    %7 = vector.multi_reduction <maximumf>, %6, %cst_3 [1] : vector<16x16xf32> to vector<16xf32>
    %8 = vector.shape_cast %7 : vector<16xf32> to vector<16x1xf32>
    %9 = vector.broadcast %8 : vector<16x1xf32> to vector<16x16xf32>
    %10 = arith.subf %6, %9 : vector<16x16xf32>
    %11 = math.exp %10 : vector<16x16xf32>
    %cst_4 = arith.constant dense<0.000000e+00> : vector<16xf32>
    %12 = vector.multi_reduction <add>, %11, %cst_4 [1] : vector<16x16xf32> to vector<16xf32>
    %13 = vector.shape_cast %12 : vector<16xf32> to vector<16x1xf32>
    %14 = vector.broadcast %13 : vector<16x1xf32> to vector<16x16xf32>
    %15 = arith.divf %11, %14 : vector<16x16xf32>
    %16 = arith.extf %1 : vector<16x128xbf16> to vector<16x128xf32>
    %cst_5 = arith.constant dense<0.000000e+00> : vector<16x128xf32>
    %17 = tpu.matmul %15, %16, %cst_5 {dimension_numbers = #tpu.dot_dimension_numbers<[1], [0], [0], [1], [0, 0, 1, 1], [], []>} : vector<16x16xf32>, vector<16x128xf32>, vector<16x128xf32> -> vector<16x128xf32>
    %c0_6 = arith.constant 0 : index
    %c0_7 = arith.constant 0 : index
    %18 = memref.load %arg2[%c0_6, %c0_7] : memref<1x1xf32, #tpu.memory_space<smem>>
    %19 = vector.broadcast %18 : f32 to vector<16x128xf32>
    %20 = arith.mulf %19, %17 : vector<16x128xf32>
    %21 = arith.extf %1 : vector<16x128xbf16> to vector<16x128xf32>
    %22 = arith.addf %20, %21 : vector<16x128xf32>
    %23 = arith.truncf %22 : vector<16x128xf32> to vector<16x128xbf16>
    %c0_8 = arith.constant 0 : index
    %c0_9 = arith.constant 0 : index
    %c0_10 = arith.constant 0 : index
    %24 = vector.load %arg3[%c0_8, %c0_9, %c0_10] : memref<1x16x128xbf16, #tpu.memory_space<vmem>>, vector<1x16x128xbf16>
    %25 = vector.shape_cast %24 : vector<1x16x128xbf16> to vector<16x128xbf16>
    %26 = vector.shape_cast %23 : vector<16x128xbf16> to vector<1x16x128xbf16>
    tpu.vector_store %arg3[%c0_8, %c0_9, %c0_10], %26 {strides = array<i32>} : memref<1x16x128xbf16, #tpu.memory_space<vmem>>, vector<1x16x128xbf16>,
    return
  }
  func.func @transform_0(%arg0: i32) -> (i32, i32, i32) {
    %c0_i32 = arith.constant 0 : i32
    %c0_i32_0 = arith.constant 0 : i32
    %c0_i32_1 = arith.constant 0 : i32
    return %arg0, %c0_i32, %c0_i32_0 : i32, i32, i32
  }
  func.func @transform_1(%arg0: i32) -> (i32, i32) {
    %c0_i32 = arith.constant 0 : i32
    %c0_i32_0 = arith.constant 0 : i32
    %c0_i32_1 = arith.constant 0 : i32
    return %c0_i32, %c0_i32_0 : i32, i32
  }
  func.func @transform_2(%arg0: i32) -> (i32, i32, i32) {
    %c0_i32 = arith.constant 0 : i32
    %c0_i32_0 = arith.constant 0 : i32
    %c0_i32_1 = arith.constant 0 : i32
    return %arg0, %c0_i32, %c0_i32_0 : i32, i32, i32
  }
}

module attributes {stable_mosaic.version = 11 : i64} {
  func.func @_sum_cls_kernel(%arg0: i32, %arg1: memref<1x16x128xbf16, #tpu.memory_space<vmem>>, %arg2: memref<1x16x128xbf16, #tpu.memory_space<vmem>>, %arg3: memref<2x16xbf16, #tpu.memory_space<vmem>>, %arg4: memref<2x1xf32, #tpu.memory_space<vmem>>, %arg5: memref<1x2x128xf32, #tpu.memory_space<vmem>>) attributes {dimension_semantics = [#tpu.dimension_semantics<parallel>], iteration_bounds = array<i64: 2>, scalar_prefetch = 0 : i64, scratch_operands = 0 : i64, tpu.core_type = #tpu.core_type<tc>, window_params = [{transform_indices = @transform_0, window_bounds = array<i64: 1, 16, 128>}, {transform_indices = @transform_1, window_bounds = array<i64: 1, 16, 128>}, {pipeline_mode = #tpu.pipeline_mode<synchronous>, transform_indices = @transform_2, window_bounds = array<i64: 2, 16>}, {pipeline_mode = #tpu.pipeline_mode<synchronous>, transform_indices = @transform_3, window_bounds = array<i64: 2, 1>}, {transform_indices = @transform_4, window_bounds = array<i64: 1, 2, 128>}]} {
    %c0 = arith.constant 0 : index
    %c0_0 = arith.constant 0 : index
    %c0_1 = arith.constant 0 : index
    %0 = vector.load %arg1[%c0, %c0_0, %c0_1] : memref<1x16x128xbf16, #tpu.memory_space<vmem>>, vector<1x16x128xbf16>
    %1 = vector.shape_cast %0 : vector<1x16x128xbf16> to vector<16x128xbf16>
    %c0_2 = arith.constant 0 : index
    %c0_3 = arith.constant 0 : index
    %c0_4 = arith.constant 0 : index
    %2 = vector.load %arg2[%c0_2, %c0_3, %c0_4] : memref<1x16x128xbf16, #tpu.memory_space<vmem>>, vector<1x16x128xbf16>
    %3 = vector.shape_cast %2 : vector<1x16x128xbf16> to vector<16x128xbf16>
    %4 = arith.addf %1, %3 : vector<16x128xbf16>
    %c0_5 = arith.constant 0 : index
    %c0_6 = arith.constant 0 : index
    %5 = vector.load %arg3[%c0_5, %c0_6] : memref<2x16xbf16, #tpu.memory_space<vmem>>, vector<2x16xbf16>
    %cst = arith.constant dense<0.000000e+00> : vector<2x128xf32>
    %6 = tpu.matmul %5, %4, %cst {dimension_numbers = #tpu.dot_dimension_numbers<[1], [0], [0], [1], [0, 0, 1, 1], [], []>} : vector<2x16xbf16>, vector<16x128xbf16>, vector<2x128xf32> -> vector<2x128xf32>
    %c0_7 = arith.constant 0 : index
    %c0_8 = arith.constant 0 : index
    %7 = vector.load %arg4[%c0_7, %c0_8] : memref<2x1xf32, #tpu.memory_space<vmem>>, vector<2x1xf32>
    %8 = vector.broadcast %7 : vector<2x1xf32> to vector<2x128xf32>
    %9 = arith.addf %6, %8 : vector<2x128xf32>
    %c0_9 = arith.constant 0 : index
    %c0_10 = arith.constant 0 : index
    %c0_11 = arith.constant 0 : index
    %10 = vector.load %arg5[%c0_9, %c0_10, %c0_11] : memref<1x2x128xf32, #tpu.memory_space<vmem>>, vector<1x2x128xf32>
    %11 = vector.shape_cast %10 : vector<1x2x128xf32> to vector<2x128xf32>
    %12 = vector.shape_cast %9 : vector<2x128xf32> to vector<1x2x128xf32>
    tpu.vector_store %arg5[%c0_9, %c0_10, %c0_11], %12 {strides = array<i32>} : memref<1x2x128xf32, #tpu.memory_space<vmem>>, vector<1x2x128xf32>,
    return
  }
  func.func @transform_0(%arg0: i32) -> (i32, i32, i32) {
    %c0_i32 = arith.constant 0 : i32
    %c0_i32_0 = arith.constant 0 : i32
    %c0_i32_1 = arith.constant 0 : i32
    return %arg0, %c0_i32, %c0_i32_0 : i32, i32, i32
  }
  func.func @transform_1(%arg0: i32) -> (i32, i32, i32) {
    %c0_i32 = arith.constant 0 : i32
    %c0_i32_0 = arith.constant 0 : i32
    %c0_i32_1 = arith.constant 0 : i32
    return %arg0, %c0_i32, %c0_i32_0 : i32, i32, i32
  }
  func.func @transform_2(%arg0: i32) -> (i32, i32) {
    %c0_i32 = arith.constant 0 : i32
    %c0_i32_0 = arith.constant 0 : i32
    %c0_i32_1 = arith.constant 0 : i32
    return %c0_i32, %c0_i32_0 : i32, i32
  }
  func.func @transform_3(%arg0: i32) -> (i32, i32) {
    %c0_i32 = arith.constant 0 : i32
    %c0_i32_0 = arith.constant 0 : i32
    %c0_i32_1 = arith.constant 0 : i32
    return %c0_i32, %c0_i32_0 : i32, i32
  }
  func.func @transform_4(%arg0: i32) -> (i32, i32, i32) {
    %c0_i32 = arith.constant 0 : i32
    %c0_i32_0 = arith.constant 0 : i32
    %c0_i32_1 = arith.constant 0 : i32
    return %arg0, %c0_i32, %c0_i32_0 : i32, i32, i32
  }
}

module attributes {stable_mosaic.version = 11 : i64} {
  func.func @_bilinear_kernel(%arg0: i32, %arg1: i32, %arg2: i32, %arg3: memref<1x1x5x128xf32, #tpu.memory_space<vmem>>, %arg4: memref<40x5xf32, #tpu.memory_space<vmem>>, %arg5: memref<128x128xf32, #tpu.memory_space<vmem>>, %arg6: memref<1x1x40x128xf32, #tpu.memory_space<vmem>>) attributes {dimension_semantics = [#tpu.dimension_semantics<parallel>, #tpu.dimension_semantics<parallel>, #tpu.dimension_semantics<parallel>], iteration_bounds = array<i64: 2, 2, 1>, scalar_prefetch = 0 : i64, scratch_operands = 0 : i64, tpu.core_type = #tpu.core_type<tc>, window_params = [{transform_indices = @transform_0, window_bounds = array<i64: 1, 1, 5, 128>}, {transform_indices = @transform_1, window_bounds = array<i64: 40, 5>}, {pipeline_mode = #tpu.pipeline_mode<synchronous>, transform_indices = @transform_2, window_bounds = array<i64: 128, 128>}, {transform_indices = @transform_3, window_bounds = array<i64: 1, 1, 40, 128>}]} {
    %c0 = arith.constant 0 : index
    %c0_0 = arith.constant 0 : index
    %0 = vector.load %arg4[%c0, %c0_0] : memref<40x5xf32, #tpu.memory_space<vmem>>, vector<40x5xf32>
    %c0_1 = arith.constant 0 : index
    %c0_2 = arith.constant 0 : index
    %c0_3 = arith.constant 0 : index
    %c0_4 = arith.constant 0 : index
    %1 = vector.load %arg3[%c0_1, %c0_2, %c0_3, %c0_4] : memref<1x1x5x128xf32, #tpu.memory_space<vmem>>, vector<1x1x5x128xf32>
    %2 = vector.shape_cast %1 : vector<1x1x5x128xf32> to vector<5x128xf32>
    %cst = arith.constant dense<0.000000e+00> : vector<40x128xf32>
    %3 = tpu.matmul %0, %2, %cst {dimension_numbers = #tpu.dot_dimension_numbers<[1], [0], [0], [1], [0, 0, 1, 1], [], []>} : vector<40x5xf32>, vector<5x128xf32>, vector<40x128xf32> -> vector<40x128xf32>
    %c0_5 = arith.constant 0 : index
    %c0_6 = arith.constant 0 : index
    %4 = vector.load %arg5[%c0_5, %c0_6] : memref<128x128xf32, #tpu.memory_space<vmem>>, vector<128x128xf32>
    %cst_7 = arith.constant dense<0.000000e+00> : vector<40x128xf32>
    %5 = tpu.matmul %3, %4, %cst_7 {dimension_numbers = #tpu.dot_dimension_numbers<[1], [0], [0], [1], [0, 0, 1, 1], [], []>} : vector<40x128xf32>, vector<128x128xf32>, vector<40x128xf32> -> vector<40x128xf32>
    %c0_8 = arith.constant 0 : index
    %c0_9 = arith.constant 0 : index
    %c0_10 = arith.constant 0 : index
    %c0_11 = arith.constant 0 : index
    %6 = vector.load %arg6[%c0_8, %c0_9, %c0_10, %c0_11] : memref<1x1x40x128xf32, #tpu.memory_space<vmem>>, vector<1x1x40x128xf32>
    %7 = vector.shape_cast %6 : vector<1x1x40x128xf32> to vector<40x128xf32>
    %8 = vector.shape_cast %5 : vector<40x128xf32> to vector<1x1x40x128xf32>
    tpu.vector_store %arg6[%c0_8, %c0_9, %c0_10, %c0_11], %8 {strides = array<i32>} : memref<1x1x40x128xf32, #tpu.memory_space<vmem>>, vector<1x1x40x128xf32>,
    return
  }
  func.func @transform_0(%arg0: i32, %arg1: i32, %arg2: i32) -> (i32, i32, i32, i32) {
    %c0_i32 = arith.constant 0 : i32
    %c0_i32_0 = arith.constant 0 : i32
    %c0_i32_1 = arith.constant 0 : i32
    return %arg0, %arg1, %c0_i32, %c0_i32_0 : i32, i32, i32, i32
  }
  func.func @transform_1(%arg0: i32, %arg1: i32, %arg2: i32) -> (i32, i32) {
    %c0_i32 = arith.constant 0 : i32
    %c0_i32_0 = arith.constant 0 : i32
    return %arg2, %c0_i32 : i32, i32
  }
  func.func @transform_2(%arg0: i32, %arg1: i32, %arg2: i32) -> (i32, i32) {
    %c0_i32 = arith.constant 0 : i32
    %c0_i32_0 = arith.constant 0 : i32
    %c0_i32_1 = arith.constant 0 : i32
    return %c0_i32, %c0_i32_0 : i32, i32
  }
  func.func @transform_3(%arg0: i32, %arg1: i32, %arg2: i32) -> (i32, i32, i32, i32) {
    %c0_i32 = arith.constant 0 : i32
    %c0_i32_0 = arith.constant 0 : i32
    return %arg0, %arg1, %arg2, %c0_i32 : i32, i32, i32, i32
  }
}

</mosaic_0001>

<llo_original>
// kernel: danet_head.11
$region0: #{danet_head.11}
  #allocation0 [shape = 'u32[]', space=smem, size = 0x4, offset = 0x4, fixed_abs, tag = 'smem constant byte address 0x4 - core index']
  #allocation1 [shape = 'u32[144,128]{1,0:T(1,128)}', space=vmem, size = 0x12000, scoped, tag = 'internal scratch']
  #allocation2 [shape = 'f32[1,1]{1,0:T(1,128)S(6)}', space=smem, size = 0x200, scoped, tag = 'scoped memory for danet_head.11']
  %s0 = inlined_call_operand.vmem [shape: bf16[2,2,128], index: 0, kind: input, shape index: {}]
  %s1 = inlined_call_operand.vmem [shape: bf16[2,2,128], index: 1, kind: input, shape index: {}]
  %s2 = inlined_call_operand.vmem [shape: bf16[2,16,128], index: 2, kind: input, shape index: {}]
  %s3 = inlined_call_operand.vmem [shape: bf16[2,16,128], index: 3, kind: input, shape index: {}]
  %s4 = inlined_call_operand.vmem [shape: f32[128,1], index: 4, kind: input, shape index: {}]
  %s5 = inlined_call_operand.vmem [shape: f32[1,128], index: 5, kind: input, shape index: {}]
  %s6 = inlined_call_operand.<no memory space> [shape: f32[1,1], index: 6, kind: input, shape index: {}]
  %s7 = inlined_call_operand.vmem [shape: bf16[2,16,128], index: 7, kind: output, shape index: {}]
  %s8 = sld [smem:[#allocation0]]
  $region61: #{danet_head.11} parent=0
    _
  %s10 = ssub.s32 1, %s8
  %s11 = scalar_select 0, %s10, %s8
  %12 = sst [smem:[#allocation2]] %s6
  loop: start=0, step=1, limit=4
  $region2: #{danet_head.11} parent=0 // loop_pre_header
    _
  $region3: #{danet_head.11} parent=0 // loop_header
    %s14 = sphi 0, %s18
    %p15 = scmp.ge.s32.totalorder %s14, 4
    %s21 = sphi 0, %s33
    %s22 = sphi 0, %s29
    %s23 = sphi 0, %s21
    %s24 = sphi 0, %s22
    %s25 = sphi 0, %s23
    %s26 = sphi 0, %s24
    %s38 = sphi 0, %s40
    %s41 = sphi 0, %s38
    %s42 = sphi 0, %s41
    %s58 = sphi 0, %s42
    %s64 = sphi 0, %s66
    %s67 = sphi 0, %s64
    %s68 = sphi 0, %s67
    %s84 = sphi 0, %s68
    %s90 = sphi 0, %s92
    %s93 = sphi 0, %s90
    %s94 = sphi 0, %s93
    %s110 = sphi 0, %s94
    %s118 = sphi 0, %s120
    %s121 = sphi 0, %s118
    %s122 = sphi 0, %s121
    %s138 = sphi 0, %s122
    %s142 = sphi 0, %s142
    %s144 = sphi 0, %s142
    %s145 = sphi 0, %s144
    %s159 = sphi 0, %s145
    %s165 = sphi 0, %s167
    %s168 = sphi 0, %s165
    %s169 = sphi 0, %s168
    %s185 = sphi 0, %s169
    %s189 = sphi 0, %s189
    %s191 = sphi 0, %s189
    %s192 = sphi 0, %s191
    %s206 = sphi 0, %s192
    %s214 = sphi 0, %s216
    %s217 = sphi 0, %s214
    %s218 = sphi 0, %s217
    %s234 = sphi 0, %s218
  $region4: #{danet_head.11} parent=0 // loop_header_branch
    %17 = sbr.rel (%p15) target = $region8
  $region5: #{danet_head.11} parent=0 // loop_body
    %s19 = ssub.s32 %s14, 1
    %s20 = ssub.s32 %s14, 2
    %s27 = sadd.s32 1, %s22
    %p28 = scmp.ge.s32.totalorder %s27, 1
    %s29 = scalar_select %p28, 0, %s27
    %s30 = sadd.s32 1, %s21
    %s31 = scalar_select %p28, %s30, %s21
    %p32 = scmp.ge.s32.totalorder %s31, 2
    %s33 = scalar_select %p32, 0, %s31
    %s34 = ssub.s32 %s21, %s33
    %s35 = ssub.s32 %s22, %s29
    %s36 = sor.u32 %s34, %s35
    %p37 = scmp.eq.s32.totalorder %s36, 0
    %s39 = sadd.s32 %s38, 1
    %s40 = scalar_select %p37, %s38, %s39
    %p43 = pneg %p37
    %p44 = scmp.eq.s32.totalorder %s14, 1
    %p45 = por %p43, %p44
    %p46 = scmp.ne.s32.totalorder %s38, %s41
    %p47 = scmp.eq.s32.totalorder %s14, 0
    %p48 = por %p46, %p47
    %p49 = scmp.ne.s32.totalorder %s38, %s41
    %p50 = scmp.eq.s32.totalorder %s19, 1
    %p51 = por %p49, %p50
    %p52 = scmp.ne.s32.totalorder %s41, %s42
    %p53 = scmp.eq.s32.totalorder %s19, 0
    %p54 = por %p52, %p53
    %p55 = scmp.ne.s32.totalorder %s41, %s42
    %p56 = scmp.eq.s32.totalorder %s20, 1
    %p57 = por %p55, %p56
    %p59 = scmp.ne.s32.totalorder %s42, %s58
    %p60 = scmp.eq.s32.totalorder %s20, 0
    %p61 = por %p59, %p60
    %s62 = ssub.s32 %s21, %s33
    %p63 = scmp.eq.s32.totalorder %s62, 0
    %s65 = sadd.s32 %s64, 1
    %s66 = scalar_select %p63, %s64, %s65
    %p69 = pneg %p63
    %p70 = scmp.eq.s32.totalorder %s14, 1
    %p71 = por %p69, %p70
    %p72 = scmp.ne.s32.totalorder %s64, %s67
    %p73 = scmp.eq.s32.totalorder %s14, 0
    %p74 = por %p72, %p73
    %p75 = scmp.ne.s32.totalorder %s64, %s67
    %p76 = scmp.eq.s32.totalorder %s19, 1
    %p77 = por %p75, %p76
    %p78 = scmp.ne.s32.totalorder %s67, %s68
    %p79 = scmp.eq.s32.totalorder %s19, 0
    %p80 = por %p78, %p79
    %p81 = scmp.ne.s32.totalorder %s67, %s68
    %p82 = scmp.eq.s32.totalorder %s20, 1
    %p83 = por %p81, %p82
    %p85 = scmp.ne.s32.totalorder %s68, %s84
    %p86 = scmp.eq.s32.totalorder %s20, 0
    %p87 = por %p85, %p86
    %s88 = ssub.s32 %s21, %s33
    %p89 = scmp.eq.s32.totalorder %s88, 0
    %s91 = sadd.s32 %s90, 1
    %s92 = scalar_select %p89, %s90, %s91
    %p95 = pneg %p89
    %p96 = scmp.eq.s32.totalorder %s14, 1
    %p97 = por %p95, %p96
    %p98 = scmp.ne.s32.totalorder %s90, %s93
    %p99 = scmp.eq.s32.totalorder %s14, 0
    %p100 = por %p98, %p99
    %p101 = scmp.ne.s32.totalorder %s90, %s93
    %p102 = scmp.eq.s32.totalorder %s19, 1
    %p103 = por %p101, %p102
    %p104 = scmp.ne.s32.totalorder %s93, %s94
    %p105 = scmp.eq.s32.totalorder %s19, 0
    %p106 = por %p104, %p105
    %p107 = scmp.ne.s32.totalorder %s93, %s94
    %p108 = scmp.eq.s32.totalorder %s20, 1
    %p109 = por %p107, %p108
    %p111 = scmp.ne.s32.totalorder %s94, %s110
    %p112 = scmp.eq.s32.totalorder %s20, 0
    %p113 = por %p111, %p112
    %s114 = ssub.s32 %s21, %s33
    %s115 = ssub.s32 %s22, %s29
    %s116 = sor.u32 %s114, %s115
    %p117 = scmp.eq.s32.totalorder %s116, 0
    %s119 = sadd.s32 %s118, 1
    %s120 = scalar_select %p117, %s118, %s119
    %p123 = pneg %p117
    %p124 = scmp.eq.s32.totalorder %s14, 1
    %p125 = por %p123, %p124
    %p126 = scmp.ne.s32.totalorder %s118, %s121
    %p127 = scmp.eq.s32.totalorder %s14, 0
    %p128 = por %p126, %p127
    %p129 = scmp.ne.s32.totalorder %s118, %s121
    %p130 = scmp.eq.s32.totalorder %s19, 1
    %p131 = por %p129, %p130
    %p132 = scmp.ne.s32.totalorder %s121, %s122
    %p133 = scmp.eq.s32.totalorder %s19, 0
    %p134 = por %p132, %p133
    %p135 = scmp.ne.s32.totalorder %s121, %s122
    %p136 = scmp.eq.s32.totalorder %s20, 1
    %p137 = por %p135, %p136
    %p139 = scmp.ne.s32.totalorder %s122, %s138
    %p140 = scmp.eq.s32.totalorder %s20, 0
    %p141 = por %p139, %p140
    %s143 = sadd.s32 %s142, 1
    %p146 = scmp.eq.s32.totalorder %s14, 1
    %p147 = scmp.ne.s32.totalorder %s142, %s144
    %p148 = scmp.eq.s32.totalorder %s14, 0
    %p149 = por %p147, %p148
    %p150 = scmp.ne.s32.totalorder %s142, %s144
    %p151 = scmp.eq.s32.totalorder %s19, 1
    %p152 = por %p150, %p151
    %p153 = scmp.ne.s32.totalorder %s144, %s145
    %p154 = scmp.eq.s32.totalorder %s19, 0
    %p155 = por %p153, %p154
    %p156 = scmp.ne.s32.totalorder %s144, %s145
    %p157 = scmp.eq.s32.totalorder %s20, 1
    %p158 = por %p156, %p157
    %p160 = scmp.ne.s32.totalorder %s145, %s159
    %p161 = scmp.eq.s32.totalorder %s20, 0
    %p162 = por %p160, %p161
    %s163 = ssub.s32 %s22, %s29
    %p164 = scmp.eq.s32.totalorder %s163, 0
    %s166 = sadd.s32 %s165, 1
    %s167 = scalar_select %p164, %s165, %s166
    %p170 = pneg %p164
    %p171 = scmp.eq.s32.totalorder %s14, 1
    %p172 = por %p170, %p171
    %p173 = scmp.ne.s32.totalorder %s165, %s168
    %p174 = scmp.eq.s32.totalorder %s14, 0
    %p175 = por %p173, %p174
    %p176 = scmp.ne.s32.totalorder %s165, %s168
    %p177 = scmp.eq.s32.totalorder %s19, 1
    %p178 = por %p176, %p177
    %p179 = scmp.ne.s32.totalorder %s168, %s169
    %p180 = scmp.eq.s32.totalorder %s19, 0
    %p181 = por %p179, %p180
    %p182 = scmp.ne.s32.totalorder %s168, %s169
    %p183 = scmp.eq.s32.totalorder %s20, 1
    %p184 = por %p182, %p183
    %p186 = scmp.ne.s32.totalorder %s169, %s185
    %p187 = scmp.eq.s32.totalorder %s20, 0
    %p188 = por %p186, %p187
    %s190 = sadd.s32 %s189, 1
    %p193 = scmp.eq.s32.totalorder %s14, 1
    %p194 = scmp.ne.s32.totalorder %s189, %s191
    %p195 = scmp.eq.s32.totalorder %s14, 0
    %p196 = por %p194, %p195
    %p197 = scmp.ne.s32.totalorder %s189, %s191
    %p198 = scmp.eq.s32.totalorder %s19, 1
    %p199 = por %p197, %p198
    %p200 = scmp.ne.s32.totalorder %s191, %s192
    %p201 = scmp.eq.s32.totalorder %s19, 0
    %p202 = por %p200, %p201
    %p203 = scmp.ne.s32.totalorder %s191, %s192
    %p204 = scmp.eq.s32.totalorder %s20, 1
    %p205 = por %p203, %p204
    %p207 = scmp.ne.s32.totalorder %s192, %s206
    %p208 = scmp.eq.s32.totalorder %s20, 0
    %p209 = por %p207, %p208
    %s210 = ssub.s32 %s21, %s33
    %s211 = ssub.s32 %s22, %s29
    %s212 = sor.u32 %s210, %s211
    %p213 = scmp.eq.s32.totalorder %s212, 0
    %s215 = sadd.s32 %s214, 1
    %s216 = scalar_select %p213, %s214, %s215
    %p219 = pneg %p213
    %p220 = scmp.eq.s32.totalorder %s14, 1
    %p221 = por %p219, %p220
    %p222 = scmp.ne.s32.totalorder %s214, %s217
    %p223 = scmp.eq.s32.totalorder %s14, 0
    %p224 = por %p222, %p223
    %p225 = scmp.ne.s32.totalorder %s214, %s217
    %p226 = scmp.eq.s32.totalorder %s19, 1
    %p227 = por %p225, %p226
    %p228 = scmp.ne.s32.totalorder %s217, %s218
    %p229 = scmp.eq.s32.totalorder %s19, 0
    %p230 = por %p228, %p229
    %p231 = scmp.ne.s32.totalorder %s217, %s218
    %p232 = scmp.eq.s32.totalorder %s20, 1
    %p233 = por %p231, %p232
    %p235 = scmp.ne.s32.totalorder %s218, %s234
    %p236 = scmp.eq.s32.totalorder %s20, 0
    %p237 = por %p235, %p236
    %p238 = scmp.le.s32.totalorder 1, %s14
    %p239 = scmp.lt.s32.totalorder %s14, 3
    %p240 = pnand %p238, %p239
    %p241 = pneg %p240
    // Predicated region
    $region9: #{danet_head.11} parent=5 // pred_check
      _
    $region10: #{danet_head.11} parent=5 // pred_check_branch
      %243 = sbr.rel (%p240) target = $region12
    $region11: #{danet_head.11} parent=5 // pred_region
      %s244 = ssub.s32 %s14, 1
      // Predicated region
      $region13: #{danet_head.11} parent=11 // pred_check
        %p245 = pneg %p155
      $region14: #{danet_head.11} parent=11 // pred_check_branch
        %247 = sbr.rel (%p245) target = $region16
      $region15: #{danet_head.11} parent=11 // pred_region
        _
      $region16: #{danet_head.11} parent=11 // pred_fallthru
        _
      // Predicated region
      $region17: #{danet_head.11} parent=11 // pred_check
        %p248 = pneg %p181
      $region18: #{danet_head.11} parent=11 // pred_check_branch
        %250 = sbr.rel (%p248) target = $region20
      $region19: #{danet_head.11} parent=11 // pred_region
        %p251 = scmp.lt.s32.totalorder %s24, 0
        %s252 = scalar_select %p251, %s24, 0
        %s253 = scalar_lea.vmem %s5, %s252
      $region20: #{danet_head.11} parent=11 // pred_fallthru
        _
      // Predicated region
      $region21: #{danet_head.11} parent=11 // pred_check
        %p254 = pneg %p202
      $region22: #{danet_head.11} parent=11 // pred_check_branch
        %256 = sbr.rel (%p254) target = $region24
      $region23: #{danet_head.11} parent=11 // pred_region
        _
      $region24: #{danet_head.11} parent=11 // pred_fallthru
        _
    $region12: #{danet_head.11} parent=5 // pred_fallthru
      _
    %p257 = scmp.lt.s32.totalorder %s14, 2
    // Predicated region
    $region25: #{danet_head.11} parent=5 // pred_check
      %p258 = pneg %p257
    $region26: #{danet_head.11} parent=5 // pred_check_branch
      %260 = sbr.rel (%p258) target = $region28
    $region27: #{danet_head.11} parent=5 // pred_region
      // Predicated region
      $region29: #{danet_head.11} parent=27 // pred_check
        %p261 = pneg %p48
      $region30: #{danet_head.11} parent=27 // pred_check_branch
        %263 = sbr.rel (%p261) target = $region32
      $region31: #{danet_head.11} parent=27 // pred_region
        %p264 = scmp.lt.s32.totalorder %s21, 1
        %s265 = scalar_select %p264, %s21, 1
        %p266 = scmp.lt.s32.totalorder %s22, 0
        %s267 = scalar_select %p266, %s22, 0
        %s268 = sadd.s32 %s267, %s265
        %s269 = scalar_lea.vmem %s0, %s268
      $region32: #{danet_head.11} parent=27 // pred_fallthru
        _
      // Predicated region
      $region33: #{danet_head.11} parent=27 // pred_check
        %p270 = pneg %p74
      $region34: #{danet_head.11} parent=27 // pred_check_branch
        %272 = sbr.rel (%p270) target = $region36
      $region35: #{danet_head.11} parent=27 // pred_region
        %p273 = scmp.lt.s32.totalorder %s21, 1
        %s274 = scalar_select %p273, %s21, 1
        %s275 = scalar_lea.vmem %s1, %s274
      $region36: #{danet_head.11} parent=27 // pred_fallthru
        _
      // Predicated region
      $region37: #{danet_head.11} parent=27 // pred_check
        %p276 = pneg %p100
      $region38: #{danet_head.11} parent=27 // pred_check_branch
        %278 = sbr.rel (%p276) target = $region40
      $region39: #{danet_head.11} parent=27 // pred_region
        %p279 = scmp.lt.s32.totalorder %s21, 1
        %s280 = scalar_select %p279, %s21, 1
        %s281 = smul.addr %s280, 2
        %s282 = smul.addr %s281, 4
        %s283 = scalar_lea.vmem %s2, %s282
      $region40: #{danet_head.11} parent=27 // pred_fallthru
        _
      // Predicated region
      $region41: #{danet_head.11} parent=27 // pred_check
        %p284 = pneg %p128
      $region42: #{danet_head.11} parent=27 // pred_check_branch
        %286 = sbr.rel (%p284) target = $region44
      $region43: #{danet_head.11} parent=27 // pred_region
        %p287 = scmp.lt.s32.totalorder %s21, 1
        %s288 = scalar_select %p287, %s21, 1
        %p289 = scmp.lt.s32.totalorder %s22, 0
        %s290 = scalar_select %p289, %s22, 0
        %s291 = smul.addr %s288, 2
        %s292 = sadd.s32 %s290, %s291
        %s293 = smul.addr %s292, 4
        %s294 = scalar_lea.vmem %s3, %s293
      $region44: #{danet_head.11} parent=27 // pred_fallthru
        _
    $region28: #{danet_head.11} parent=5 // pred_fallthru
      _
    %p295 = scmp.le.s32.totalorder 1, %s14
    %p296 = scmp.lt.s32.totalorder %s14, 3
    %p297 = pnand %p295, %p296
    %p298 = pneg %p297
    // Predicated region
    $region45: #{danet_head.11} parent=5 // pred_check
      _
    $region46: #{danet_head.11} parent=5 // pred_check_branch
      %300 = sbr.rel (%p297) target = $region48
    $region47: #{danet_head.11} parent=5 // pred_region
      %s301 = ssub.s32 %s14, 1
      %p302 = scmp.lt.s32.totalorder %s23, 1
      %s303 = scalar_select %p302, %s23, 1
      %p304 = scmp.lt.s32.totalorder %s24, 0
      %s305 = scalar_select %p304, %s24, 0
      %s306 = sadd.s32 %s305, %s303
      %s307 = scalar_lea.vmem %s0, %s306
      %p308 = pneg %p54
      %p309 = pneg %p51
      %p310 = scmp.lt.s32.totalorder %s23, 1
      %s311 = scalar_select %p310, %s23, 1
      %s312 = scalar_lea.vmem %s1, %s311
      %p313 = pneg %p80
      %p314 = pneg %p77
      %p315 = scmp.lt.s32.totalorder %s23, 1
      %s316 = scalar_select %p315, %s23, 1
      %s317 = smul.addr %s316, 2
      %s318 = smul.addr %s317, 4
      %s319 = scalar_lea.vmem %s2, %s318
      %p320 = pneg %p106
      %p321 = pneg %p103
      %p322 = scmp.lt.s32.totalorder %s23, 1
      %s323 = scalar_select %p322, %s23, 1
      %p324 = scmp.lt.s32.totalorder %s24, 0
      %s325 = scalar_select %p324, %s24, 0
      %s326 = smul.addr %s323, 2
      %s327 = sadd.s32 %s325, %s326
      %s328 = smul.addr %s327, 4
      %s329 = scalar_lea.vmem %s3, %s328
      %p330 = pneg %p134
      %p331 = pneg %p131
      %p332 = pneg %p155
      %p333 = pneg %p152
      %p334 = scmp.lt.s32.totalorder %s24, 0
      %s335 = scalar_select %p334, %s24, 0
      %s336 = scalar_lea.vmem %s5, %s335
      %p337 = pneg %p181
      %p338 = pneg %p178
      %p339 = pneg %p202
      %p340 = pneg %p199
      %p341 = pneg %p230
      %p342 = pneg %p227
      %p343 = scmp.lt.s32.totalorder %s23, 1
      %s344 = scalar_select %p343, %s23, 1
      %p345 = scmp.lt.s32.totalorder %s24, 0
      %s346 = scalar_select %p345, %s24, 0
      %s347 = smul.addr %s344, 2
      %s348 = sadd.s32 %s346, %s347
      %s349 = smul.addr %s348, 4
      %s350 = scalar_lea.vmem %s7, %s349
      %p351 = scmp.lt.s32.totalorder %s23, 1
      %s352 = scalar_select %p351, %s23, 1
      %p353 = scmp.lt.s32.totalorder %s24, 0
      %s354 = scalar_select %p353, %s24, 0
      %s355 = sadd.s32 %s354, %s352
      %s356 = scalar_lea.vmem %s0, %s355
      %p357 = scmp.lt.s32.totalorder %s23, 1
      %s358 = scalar_select %p357, %s23, 1
      %s359 = scalar_lea.vmem %s1, %s358
      %p360 = scmp.lt.s32.totalorder %s23, 1
      %s361 = scalar_select %p360, %s23, 1
      %s362 = smul.addr %s361, 2
      %s363 = smul.addr %s362, 4
      %s364 = scalar_lea.vmem %s2, %s363
      %p365 = scmp.lt.s32.totalorder %s23, 1
      %s366 = scalar_select %p365, %s23, 1
      %p367 = scmp.lt.s32.totalorder %s24, 0
      %s368 = scalar_select %p367, %s24, 0
      %s369 = smul.addr %s366, 2
      %s370 = sadd.s32 %s368, %s369
      %s371 = smul.addr %s370, 4
      %s372 = scalar_lea.vmem %s3, %s371
      %p373 = scmp.lt.s32.totalorder %s24, 0
      %s374 = scalar_select %p373, %s24, 0
      %s375 = scalar_lea.vmem %s5, %s374
      %p376 = scmp.lt.s32.totalorder %s23, 1
      %s377 = scalar_select %p376, %s23, 1
      %p378 = scmp.lt.s32.totalorder %s24, 0
      %s379 = scalar_select %p378, %s24, 0
      %s380 = smul.addr %s377, 2
      %s381 = sadd.s32 %s379, %s380
      %s382 = smul.addr %s381, 4
      %s383 = scalar_lea.vmem %s7, %s382
      %v385 = vld [vmem:[%s359] sm:$0x1]
      %v386 = vld [vmem:[%s356] sm:$0x1]
      %v387 = vld [vmem:[%s4] sm:$0xff]
      %v388 = vld [vmem:[%s4 + $0x8] sm:$0xff]
      %v389 = vld [vmem:[%s4 + $0x10] sm:$0xff]
      %v390 = vld [vmem:[%s4 + $0x18] sm:$0xff]
      %v391 = vld [vmem:[%s4 + $0x20] sm:$0xff]
      %v392 = vld [vmem:[%s4 + $0x28] sm:$0xff]
      %v393 = vld [vmem:[%s4 + $0x30] sm:$0xff]
      %v394 = vld [vmem:[%s4 + $0x38] sm:$0xff]
      %v395 = vld [vmem:[%s4 + $0x40] sm:$0xff]
      %v396 = vld [vmem:[%s4 + $0x48] sm:$0xff]
      %v397 = vld [vmem:[%s4 + $0x50] sm:$0xff]
      %v398 = vld [vmem:[%s4 + $0x58] sm:$0xff]
      %v399 = vld [vmem:[%s4 + $0x60] sm:$0xff]
      %v400 = vld [vmem:[%s4 + $0x68] sm:$0xff]
      %v401 = vld [vmem:[%s4 + $0x70] sm:$0xff]
      %v402 = vld [vmem:[%s4 + $0x78] sm:$0xff]
      %404 = vset.pattern.permute.xlu0 0
      %405 = vperm.xlu0 %404, %v387
      %v406 = vpop.permute.xlu0 %405
      %409 = vset.pattern.permute.xlu0 0
      %410 = vperm.xlu0 %409, %v388
      %v411 = vpop.permute.xlu0 %410
      %414 = vset.pattern.permute.xlu0 0
      %415 = vperm.xlu0 %414, %v389
      %v416 = vpop.permute.xlu0 %415
      %419 = vset.pattern.permute.xlu0 0
      %420 = vperm.xlu0 %419, %v390
      %v421 = vpop.permute.xlu0 %420
      %424 = vset.pattern.permute.xlu0 0
      %425 = vperm.xlu0 %424, %v391
      %v426 = vpop.permute.xlu0 %425
      %429 = vset.pattern.permute.xlu0 0
      %430 = vperm.xlu0 %429, %v392
      %v431 = vpop.permute.xlu0 %430
      %434 = vset.pattern.permute.xlu0 0
      %435 = vperm.xlu0 %434, %v393
      %v436 = vpop.permute.xlu0 %435
      %439 = vset.pattern.permute.xlu0 0
      %440 = vperm.xlu0 %439, %v394
      %v441 = vpop.permute.xlu0 %440
      %444 = vset.pattern.permute.xlu0 0
      %445 = vperm.xlu0 %444, %v395
      %v446 = vpop.permute.xlu0 %445
      %449 = vset.pattern.permute.xlu0 0
      %450 = vperm.xlu0 %449, %v396
      %v451 = vpop.permute.xlu0 %450
      %454 = vset.pattern.permute.xlu0 0
      %455 = vperm.xlu0 %454, %v397
      %v456 = vpop.permute.xlu0 %455
      %459 = vset.pattern.permute.xlu0 0
      %460 = vperm.xlu0 %459, %v398
      %v461 = vpop.permute.xlu0 %460
      %464 = vset.pattern.permute.xlu0 0
      %465 = vperm.xlu0 %464, %v399
      %v466 = vpop.permute.xlu0 %465
      %469 = vset.pattern.permute.xlu0 0
      %470 = vperm.xlu0 %469, %v400
      %v471 = vpop.permute.xlu0 %470
      %474 = vset.pattern.permute.xlu0 0
      %475 = vperm.xlu0 %474, %v401
      %v476 = vpop.permute.xlu0 %475
      %479 = vset.pattern.permute.xlu0 0
      %480 = vperm.xlu0 %479, %v402
      %v481 = vpop.permute.xlu0 %480
      %483 = vxpose.xlu0.c.b16.start [1/8] %v385, 128
      %484 = vxpose.xlu0.c.b16.cont [2/8] 0, 128
      %485 = vxpose.xlu0.c.b16.cont [3/8] 0, 128
      %486 = vxpose.xlu0.c.b16.cont [4/8] 0, 128
      %487 = vxpose.xlu0.c.b16.cont [5/8] 0, 128
      %488 = vxpose.xlu0.c.b16.cont [6/8] 0, 128
      %489 = vxpose.xlu0.c.b16.cont [7/8] 0, 128
      %490 = vxpose.xlu0.c.b16.end [8/8] 0, 128
      %v491 = vpop.trf.xlu0
      %v492 = vpop.trf.xlu0
      %v493 = vpop.trf.xlu0
      %v494 = vpop.trf.xlu0
      %v495 = vpop.trf.xlu0
      %v496 = vpop.trf.xlu0
      %v497 = vpop.trf.xlu0
      %v498 = vpop.trf.xlu0
      %vm499 = vcmask 15360
      %v501 = vsel %vm499, %v491, 0
      %v504 = vsel %vm499, %v492, 0
      %v507 = vsel %vm499, %v493, 0
      %v510 = vsel %vm499, %v494, 0
      %v513 = vsel %vm499, %v495, 0
      %v516 = vsel %vm499, %v496, 0
      %v519 = vsel %vm499, %v497, 0
      %v522 = vsel %vm499, %v498, 0
      %vm524 = vcmask 1040384
      %v526 = vsel %vm524, %v386, 0
      %528 = vmatprep.subr.bf16.mxu0 0
      %529 = vmatpush1.bf16.msra.mxu0 0
      %530 = vmatprep.subr.bf16.mxu0 0
      %531 = vmatpush1.bf16.msra.mxu0 0
      %532 = vmatprep.subr.bf16.mxu0 0
      %533 = vmatpush1.bf16.msra.mxu0 0
      %534 = vmatprep.subr.bf16.mxu0 0
      %535 = vmatpush1.bf16.msra.mxu0 0
      %536 = vmatprep.subr.bf16.mxu0 0
      %537 = vmatpush1.bf16.msra.mxu0 0
      %538 = vmatprep.subr.bf16.mxu0 0
      %539 = vmatpush1.bf16.msra.mxu0 0
      %540 = vmatprep.subr.bf16.mxu0 0
      %541 = vmatpush1.bf16.msra.mxu0 0
      %542 = vmatprep.subr.bf16.mxu0 0
      %543 = vmatpush1.bf16.msra.mxu0 %v526
      %544 = vmatprep.subr.bf16.mxu0 0
      %545 = vmatpush2.bf16.msra.mxu0 0
      %546 = vmatprep.subr.bf16.mxu0 0
      %547 = vmatpush2.bf16.msra.mxu0 0
      %548 = vmatprep.subr.bf16.mxu0 0
      %549 = vmatpush2.bf16.msra.mxu0 0
      %550 = vmatprep.subr.bf16.mxu0 0
      %551 = vmatpush2.bf16.msra.mxu0 0
      %552 = vmatprep.subr.bf16.mxu0 0
      %553 = vmatpush2.bf16.msra.mxu0 0
      %554 = vmatprep.subr.bf16.mxu0 0
      %555 = vmatpush2.bf16.msra.mxu0 0
      %556 = vmatprep.subr.bf16.mxu0 0
      %557 = vmatpush2.bf16.msra.mxu0 0
      %558 = vmatprep.subr.bf16.mxu0 0
      %559 = vmatpush2.bf16.msra.mxu0 0
      %560 = vmatprep.mubr.bf16.mxu0 0
      %561 = vmatmul.mubr.bf16.gmra.mxu0 %v501
      %v562 = vpop.f32.mrf.mxu0
      %v563 = vadd.f32 %v406, %v562
      %v564 = vpop.f32.mrf.mxu0
      %v565 = vpop.f32.mrf.mxu0
      %v566 = vadd.f32 %v411, %v565
      %v567 = vpop.f32.mrf.mxu0
      %568 = vmatprep.mubr.bf16.mxu0 0
      %569 = vmatmul.mubr.bf16.gmra.mxu0 %v504
      %v570 = vpop.f32.mrf.mxu0
      %v571 = vadd.f32 %v416, %v570
      %v572 = vpop.f32.mrf.mxu0
      %v573 = vpop.f32.mrf.mxu0
      %v574 = vadd.f32 %v421, %v573
      %v575 = vpop.f32.mrf.mxu0
      %576 = vmatprep.mubr.bf16.mxu0 0
      %577 = vmatmul.mubr.bf16.gmra.mxu0 %v507
      %v578 = vpop.f32.mrf.mxu0
      %v579 = vadd.f32 %v426, %v578
      %v580 = vpop.f32.mrf.mxu0
      %v581 = vpop.f32.mrf.mxu0
      %v582 = vadd.f32 %v431, %v581
      %v583 = vpop.f32.mrf.mxu0
      %584 = vmatprep.mubr.bf16.mxu0 0
      %585 = vmatmul.mubr.bf16.gmra.mxu0 %v510
      %v586 = vpop.f32.mrf.mxu0
      %v587 = vadd.f32 %v436, %v586
      %v588 = vpop.f32.mrf.mxu0
      %v589 = vpop.f32.mrf.mxu0
      %v590 = vadd.f32 %v441, %v589
      %v591 = vpop.f32.mrf.mxu0
      %592 = vmatprep.mubr.bf16.mxu0 0
      %593 = vmatmul.mubr.bf16.gmra.mxu0 %v513
      %v594 = vpop.f32.mrf.mxu0
      %v595 = vadd.f32 %v446, %v594
      %v596 = vpop.f32.mrf.mxu0
      %v597 = vpop.f32.mrf.mxu0
      %v598 = vadd.f32 %v451, %v597
      %v599 = vpop.f32.mrf.mxu0
      %600 = vmatprep.mubr.bf16.mxu0 0
      %601 = vmatmul.mubr.bf16.gmra.mxu0 %v516
      %v602 = vpop.f32.mrf.mxu0
      %v603 = vadd.f32 %v456, %v602
      %v604 = vpop.f32.mrf.mxu0
      %v605 = vpop.f32.mrf.mxu0
      %v606 = vadd.f32 %v461, %v605
      %v607 = vpop.f32.mrf.mxu0
      %608 = vmatprep.mubr.bf16.mxu0 0
      %609 = vmatmul.mubr.bf16.gmra.mxu0 %v519
      %v610 = vpop.f32.mrf.mxu0
      %v611 = vadd.f32 %v466, %v610
      %v612 = vpop.f32.mrf.mxu0
      %v613 = vpop.f32.mrf.mxu0
      %v614 = vadd.f32 %v471, %v613
      %v615 = vpop.f32.mrf.mxu0
      %616 = vmatprep.mubr.bf16.mxu0 0
      %617 = vmatmul.mubr.bf16.gmra.mxu0 %v522
      %v618 = vpop.f32.mrf.mxu0
      %v619 = vadd.f32 %v476, %v618
      %v620 = vpop.f32.mrf.mxu0
      %v621 = vpop.f32.mrf.mxu0
      %v622 = vadd.f32 %v481, %v621
      %v623 = vpop.f32.mrf.mxu0
      %624 = vdwg.mxu0
      %v625 = vmax.f32 %v563, %v579
      %v626 = vmax.f32 %v566, %v582
      %v627 = vmax.f32 %v571, %v587
      %v628 = vmax.f32 %v574, %v590
      %v629 = vmax.f32 %v625, %v595
      %v630 = vmax.f32 %v626, %v598
      %v631 = vmax.f32 %v627, %v603
      %v632 = vmax.f32 %v628, %v606
      %v633 = vmax.f32 %v629, %v611
      %v634 = vmax.f32 %v630, %v614
      %v635 = vmax.f32 %v631, %v619
      %v636 = vmax.f32 %v632, %v622
      %v637 = vmax.f32 %v633, %v634
      %v638 = vmax.f32 %v635, %v636
      %v639 = vmax.f32 %v637, %v638
      %v640 = vrot.slane %v639, 4
      %v641 = vmax.f32 %v639, %v640
      %v642 = vrot.slane %v641, 2
      %v643 = vmax.f32 %v641, %v642
      %v644 = vrot.slane %v643, 1
      %v645 = vmax.f32 %v643, %v644
      %v646 = vsub.f32 %v563, %v645
      %v647 = vsub.f32 %v566, %v645
      %v648 = vsub.f32 %v571, %v645
      %v649 = vsub.f32 %v574, %v645
      %v650 = vsub.f32 %v579, %v645
      %v651 = vsub.f32 %v582, %v645
      %v652 = vsub.f32 %v587, %v645
      %v653 = vsub.f32 %v590, %v645
      %v654 = vsub.f32 %v595, %v645
      %v655 = vsub.f32 %v598, %v645
      %v656 = vsub.f32 %v603, %v645
      %v657 = vsub.f32 %v606, %v645
      %v658 = vsub.f32 %v611, %v645
      %v659 = vsub.f32 %v614, %v645
      %v660 = vsub.f32 %v619, %v645
      %v661 = vsub.f32 %v622, %v645
      %v662 = vmul.f32 %v646, 1.442695
      %v663 = vpow.pop %v662
      %v664 = vmul.f32 %v647, 1.442695
      %v665 = vpow.pop %v664
      %v666 = vmul.f32 %v648, 1.442695
      %v667 = vpow.pop %v666
      %v668 = vmul.f32 %v649, 1.442695
      %v669 = vpow.pop %v668
      %v670 = vmul.f32 %v650, 1.442695
      %v671 = vpow.pop %v670
      %v672 = vmul.f32 %v651, 1.442695
      %v673 = vpow.pop %v672
      %v674 = vmul.f32 %v652, 1.442695
      %v675 = vpow.pop %v674
      %v676 = vmul.f32 %v653, 1.442695
      %v677 = vpow.pop %v676
      %v678 = vmul.f32 %v654, 1.442695
      %v679 = vpow.pop %v678
      %v680 = vmul.f32 %v655, 1.442695
      %v681 = vpow.pop %v680
      %v682 = vmul.f32 %v656, 1.442695
      %v683 = vpow.pop %v682
      %v684 = vmul.f32 %v657, 1.442695
      %v685 = vpow.pop %v684
      %v686 = vmul.f32 %v658, 1.442695
      %v687 = vpow.pop %v686
      %v688 = vmul.f32 %v659, 1.442695
      %v689 = vpow.pop %v688
      %v690 = vmul.f32 %v660, 1.442695
      %v691 = vpow.pop %v690
      %v692 = vmul.f32 %v661, 1.442695
      %v693 = vpow.pop %v692
      %v694 = vadd.f32 %v663, %v665
      %v695 = vadd.f32 %v694, %v667
      %v696 = vadd.f32 %v695, %v669
      %v697 = vadd.f32 %v696, %v671
      %v698 = vadd.f32 %v697, %v673
      %v699 = vadd.f32 %v698, %v675
      %v700 = vadd.f32 %v699, %v677
      %v701 = vadd.f32 %v700, %v679
      %v702 = vadd.f32 %v701, %v681
      %v703 = vadd.f32 %v702, %v683
      %v704 = vadd.f32 %v703, %v685
      %v705 = vadd.f32 %v704, %v687
      %v706 = vadd.f32 %v705, %v689
      %v707 = vadd.f32 %v706, %v691
      %v708 = vadd.f32 %v707, %v693
      %v709 = vrot.slane %v708, 4
      %v710 = vadd.f32 %v708, %v709
      %v711 = vrot.slane %v710, 2
      %v712 = vadd.f32 %v710, %v711
      %v713 = vrot.slane %v712, 1
      %v714 = vadd.f32 %v712, %v713
      %v715 = vld [vmem:[%s364] sm:$0xf]
      %v716 = vld [vmem:[%s364 + $0x4] sm:$0xf]
      %v717 = vpack.c.bf16 %v665, %v663
      %v718 = vpack.c.bf16 %v669, %v667
      %v719 = vpack.c.bf16 %v673, %v671
      %v720 = vpack.c.bf16 %v677, %v675
      %v721 = vpack.c.bf16 %v681, %v679
      %v722 = vpack.c.bf16 %v685, %v683
      %v723 = vpack.c.bf16 %v689, %v687
      %v724 = vpack.c.bf16 %v693, %v691
      %v727 = vunpack.c.l.b16 %v715
      %v728 = vunpack.c.l.b16 %v716
      %v729 = vpack.c.b16 %v728, %v727
      %731 = vmatprep.subr.bf16.mxu0 0
      %732 = vmatpush1.bf16.msra.mxu0 %v724
      %733 = vmatprep.subr.bf16.mxu0 0
      %734 = vmatpush1.bf16.msra.mxu0 %v723
      %735 = vmatprep.subr.bf16.mxu0 0
      %736 = vmatpush1.bf16.msra.mxu0 %v722
      %737 = vmatprep.subr.bf16.mxu0 0
      %738 = vmatpush1.bf16.msra.mxu0 %v721
      %739 = vmatprep.subr.bf16.mxu0 0
      %740 = vmatpush1.bf16.msra.mxu0 %v720
      %741 = vmatprep.subr.bf16.mxu0 0
      %742 = vmatpush1.bf16.msra.mxu0 %v719
      %743 = vmatprep.subr.bf16.mxu0 0
      %744 = vmatpush1.bf16.msra.mxu0 %v718
      %745 = vmatprep.subr.bf16.mxu0 0
      %746 = vmatpush1.bf16.msra.mxu0 %v717
      %747 = vmatprep.subr.bf16.mxu0 0
      %748 = vmatpush2.bf16.msra.mxu0 0
      %749 = vmatprep.subr.bf16.mxu0 0
      %750 = vmatpush2.bf16.msra.mxu0 0
      %751 = vmatprep.subr.bf16.mxu0 0
      %752 = vmatpush2.bf16.msra.mxu0 0
      %753 = vmatprep.subr.bf16.mxu0 0
      %754 = vmatpush2.bf16.msra.mxu0 0
      %755 = vmatprep.subr.bf16.mxu0 0
      %756 = vmatpush2.bf16.msra.mxu0 0
      %757 = vmatprep.subr.bf16.mxu0 0
      %758 = vmatpush2.bf16.msra.mxu0 0
      %759 = vmatprep.subr.bf16.mxu0 0
      %760 = vmatpush2.bf16.msra.mxu0 0
      %761 = vmatprep.subr.bf16.mxu0 0
      %762 = vmatpush2.bf16.msra.mxu0 0
      %763 = vmatprep.mubr.bf16.mxu0 0
      %764 = vmatmul.mubr.bf16.gmra.mxu0 %v729
      %v765 = vpop.f32.mrf.mxu0
      %v766 = vadd.f32 0.0, %v765
      %v767 = vpop.f32.mrf.mxu0
      %v768 = vpop.f32.mrf.mxu0
      %v769 = vadd.f32 0.0, %v768
      %v770 = vpop.f32.mrf.mxu0
      %771 = vdwg.mxu0
      %v772 = vrcp.pop %v714
      %v773 = vmul.f32 1.0, %v772
      %v774 = vmul.f32 %v766, %v773
      %v775 = vmul.f32 %v769, %v773
      %s776 = sld [smem:[#allocation2]]
      %v777 = vstv %s776
      %v778 = vmul.f32 %v777, %v774
      %v779 = vmul.f32 %v777, %v775
      %v780 = vld [vmem:[%s372] sm:$0xf]
      %v781 = vld [vmem:[%s372 + $0x4] sm:$0xf]
      %v782 = vunpack.c.l.bf16 %v780
      %v783 = vunpack.c.l.bf16 %v781
      %v784 = vadd.f32 %v778, %v782
      %v785 = vadd.f32 %v779, %v783
      %v786 = vld [vmem:[%s375] sm:$0x1]
      %v788 = vlaneseq
      %v789 = vshrl.u32 %v788, 7
      %v790 = vsub.s32 0, %v789
      %v791 = vrot.slane %v786, %v790
      %v793 = vmul.f32 %v784, %v791
      %v794 = vmul.f32 %v785, %v791
      %v795 = vpack.c.bf16 %v794, %v793
      %v797 = vunpack.c.l.b16 %v795
      %v798 = vunpack.c.h.b16 %v795
      %v799 = vpack.c.b16 %v797, %v797
      %v800 = vpack.c.b16 %v798, %v798
      %803 = vst [vmem:[%s383] sm:$0xf] %v799
      %804 = vst [vmem:[%s383 + $0x4] sm:$0xf] %v800
      %p805 = scmp.lt.s32.totalorder %s23, 1
      %s806 = scalar_select %p805, %s23, 1
      %p807 = scmp.lt.s32.totalorder %s24, 0
      %s808 = scalar_select %p807, %s24, 0
      %s809 = smul.addr %s806, 2
      %s810 = sadd.s32 %s808, %s809
      %s811 = smul.addr %s810, 4
      %s812 = scalar_lea.vmem %s7, %s811
      // Predicated region
      $region49: #{danet_head.11} parent=47 // pred_check
        %p813 = pneg %p227
      $region50: #{danet_head.11} parent=47 // pred_check_branch
        %815 = sbr.rel (%p813) target = $region52
      $region51: #{danet_head.11} parent=47 // pred_region
        _
      $region52: #{danet_head.11} parent=47 // pred_fallthru
        _
    $region48: #{danet_head.11} parent=5 // pred_fallthru
      _
    %p816 = scmp.le.s32.totalorder 2, %s14
    // Predicated region
    $region53: #{danet_head.11} parent=5 // pred_check
      %p817 = pneg %p816
    $region54: #{danet_head.11} parent=5 // pred_check_branch
      %819 = sbr.rel (%p817) target = $region56
    $region55: #{danet_head.11} parent=5 // pred_region
      %s820 = ssub.s32 %s14, 2
      // Predicated region
      $region57: #{danet_head.11} parent=55 // pred_check
        %p821 = pneg %p233
      $region58: #{danet_head.11} parent=55 // pred_check_branch
        %823 = sbr.rel (%p821) target = $region60
      $region59: #{danet_head.11} parent=55 // pred_region
        %p824 = scmp.lt.s32.totalorder %s25, 1
        %s825 = scalar_select %p824, %s25, 1
        %p826 = scmp.lt.s32.totalorder %s26, 0
        %s827 = scalar_select %p826, %s26, 0
        %s828 = smul.addr %s825, 2
        %s829 = sadd.s32 %s827, %s828
        %s830 = smul.addr %s829, 4
        %s831 = scalar_lea.vmem %s7, %s830
      $region60: #{danet_head.11} parent=55 // pred_fallthru
        _
    $region56: #{danet_head.11} parent=5 // pred_fallthru
      _
  $region6: #{danet_head.11} parent=0 // loop_footer
    %s18 = sadd.s32 1, %s14
  $region7: #{danet_head.11} parent=0 // loop_footer_branch
    %13 = sbr.rel target = $region3
  $region8: #{danet_head.11} parent=0 // loop_exit
    _

// kernel: danet_head.10
$region0: #{danet_head.10}
  #allocation0 [shape = 'u32[]', space=smem, size = 0x4, offset = 0x4, fixed_abs, tag = 'smem constant byte address 0x4 - core index']
  #allocation1 [shape = 'u32[144,128]{1,0:T(1,128)}', space=vmem, size = 0x12000, scoped, tag = 'internal scratch']
  %s0 = inlined_call_operand.vmem [shape: bf16[2,16,128], index: 0, kind: input, shape index: {}]
  %s1 = inlined_call_operand.vmem [shape: bf16[2,16], index: 1, kind: input, shape index: {}]
  %s2 = inlined_call_operand.vmem [shape: f32[2,1], index: 2, kind: input, shape index: {}]
  %s3 = inlined_call_operand.vmem [shape: bf16[2,16], index: 3, kind: input, shape index: {}]
  %s4 = inlined_call_operand.vmem [shape: f32[2,1], index: 4, kind: input, shape index: {}]
  %s5 = inlined_call_operand.vmem [shape: bf16[16,16], index: 5, kind: input, shape index: {}]
  %s6 = inlined_call_operand.vmem [shape: f32[16,1], index: 6, kind: input, shape index: {}]
  %s7 = inlined_call_operand.vmem [shape: bf16[2,2,128], index: 7, kind: output, shape index: {0}]
  %s8 = inlined_call_operand.vmem [shape: bf16[2,2,128], index: 8, kind: output, shape index: {1}]
  %s9 = inlined_call_operand.vmem [shape: bf16[2,16,128], index: 9, kind: output, shape index: {2}]
  %10 = xla_tuple %s7, %s8, %s9
  %s11 = sld [smem:[#allocation0]]
  $region77: #{danet_head.10} parent=0
    _
  %s13 = ssub.s32 1, %s11
  %s14 = scalar_select 0, %s13, %s11
  loop: start=0, step=1, limit=4
  $region2: #{danet_head.10} parent=0 // loop_pre_header
    _
  $region3: #{danet_head.10} parent=0 // loop_header
    %s16 = sphi 0, %s20
    %p17 = scmp.ge.s32.totalorder %s16, 4
    %s26 = sphi 0, %s28
    %s29 = sphi 0, %s26
    %s30 = sphi 0, %s29
    %s46 = sphi 0, %s30
    %s50 = sphi 0, %s50
    %s52 = sphi 0, %s50
    %s53 = sphi 0, %s52
    %s67 = sphi 0, %s53
    %s71 = sphi 0, %s71
    %s73 = sphi 0, %s71
    %s74 = sphi 0, %s73
    %s88 = sphi 0, %s74
    %s92 = sphi 0, %s92
    %s94 = sphi 0, %s92
    %s95 = sphi 0, %s94
    %s109 = sphi 0, %s95
    %s113 = sphi 0, %s113
    %s115 = sphi 0, %s113
    %s116 = sphi 0, %s115
    %s130 = sphi 0, %s116
    %s134 = sphi 0, %s134
    %s136 = sphi 0, %s134
    %s137 = sphi 0, %s136
    %s151 = sphi 0, %s137
    %s155 = sphi 0, %s155
    %s157 = sphi 0, %s155
    %s158 = sphi 0, %s157
    %s172 = sphi 0, %s158
    %s178 = sphi 0, %s180
    %s181 = sphi 0, %s178
    %s182 = sphi 0, %s181
    %s198 = sphi 0, %s182
    %s204 = sphi 0, %s206
    %s207 = sphi 0, %s204
    %s208 = sphi 0, %s207
    %s224 = sphi 0, %s208
    %s230 = sphi 0, %s232
    %s233 = sphi 0, %s230
    %s234 = sphi 0, %s233
    %s250 = sphi 0, %s234
  $region4: #{danet_head.10} parent=0 // loop_header_branch
    %19 = sbr.rel (%p17) target = $region8
  $region5: #{danet_head.10} parent=0 // loop_body
    %s21 = ssub.s32 %s16, 1
    %s22 = ssub.s32 %s16, 2
    %s23 = sadd.s32 %s16, 1
    %s24 = ssub.s32 %s16, %s23
    %p25 = scmp.eq.s32.totalorder %s24, 0
    %s27 = sadd.s32 %s26, 1
    %s28 = scalar_select %p25, %s26, %s27
    %p31 = pneg %p25
    %p32 = scmp.eq.s32.totalorder %s16, 1
    %p33 = por %p31, %p32
    %p34 = scmp.ne.s32.totalorder %s26, %s29
    %p35 = scmp.eq.s32.totalorder %s16, 0
    %p36 = por %p34, %p35
    %p37 = scmp.ne.s32.totalorder %s26, %s29
    %p38 = scmp.eq.s32.totalorder %s21, 1
    %p39 = por %p37, %p38
    %p40 = scmp.ne.s32.totalorder %s29, %s30
    %p41 = scmp.eq.s32.totalorder %s21, 0
    %p42 = por %p40, %p41
    %p43 = scmp.ne.s32.totalorder %s29, %s30
    %p44 = scmp.eq.s32.totalorder %s22, 1
    %p45 = por %p43, %p44
    %p47 = scmp.ne.s32.totalorder %s30, %s46
    %p48 = scmp.eq.s32.totalorder %s22, 0
    %p49 = por %p47, %p48
    %s51 = sadd.s32 %s50, 1
    %p54 = scmp.eq.s32.totalorder %s16, 1
    %p55 = scmp.ne.s32.totalorder %s50, %s52
    %p56 = scmp.eq.s32.totalorder %s16, 0
    %p57 = por %p55, %p56
    %p58 = scmp.ne.s32.totalorder %s50, %s52
    %p59 = scmp.eq.s32.totalorder %s21, 1
    %p60 = por %p58, %p59
    %p61 = scmp.ne.s32.totalorder %s52, %s53
    %p62 = scmp.eq.s32.totalorder %s21, 0
    %p63 = por %p61, %p62
    %p64 = scmp.ne.s32.totalorder %s52, %s53
    %p65 = scmp.eq.s32.totalorder %s22, 1
    %p66 = por %p64, %p65
    %p68 = scmp.ne.s32.totalorder %s53, %s67
    %p69 = scmp.eq.s32.totalorder %s22, 0
    %p70 = por %p68, %p69
    %s72 = sadd.s32 %s71, 1
    %p75 = scmp.eq.s32.totalorder %s16, 1
    %p76 = scmp.ne.s32.totalorder %s71, %s73
    %p77 = scmp.eq.s32.totalorder %s16, 0
    %p78 = por %p76, %p77
    %p79 = scmp.ne.s32.totalorder %s71, %s73
    %p80 = scmp.eq.s32.totalorder %s21, 1
    %p81 = por %p79, %p80
    %p82 = scmp.ne.s32.totalorder %s73, %s74
    %p83 = scmp.eq.s32.totalorder %s21, 0
    %p84 = por %p82, %p83
    %p85 = scmp.ne.s32.totalorder %s73, %s74
    %p86 = scmp.eq.s32.totalorder %s22, 1
    %p87 = por %p85, %p86
    %p89 = scmp.ne.s32.totalorder %s74, %s88
    %p90 = scmp.eq.s32.totalorder %s22, 0
    %p91 = por %p89, %p90
    %s93 = sadd.s32 %s92, 1
    %p96 = scmp.eq.s32.totalorder %s16, 1
    %p97 = scmp.ne.s32.totalorder %s92, %s94
    %p98 = scmp.eq.s32.totalorder %s16, 0
    %p99 = por %p97, %p98
    %p100 = scmp.ne.s32.totalorder %s92, %s94
    %p101 = scmp.eq.s32.totalorder %s21, 1
    %p102 = por %p100, %p101
    %p103 = scmp.ne.s32.totalorder %s94, %s95
    %p104 = scmp.eq.s32.totalorder %s21, 0
    %p105 = por %p103, %p104
    %p106 = scmp.ne.s32.totalorder %s94, %s95
    %p107 = scmp.eq.s32.totalorder %s22, 1
    %p108 = por %p106, %p107
    %p110 = scmp.ne.s32.totalorder %s95, %s109
    %p111 = scmp.eq.s32.totalorder %s22, 0
    %p112 = por %p110, %p111
    %s114 = sadd.s32 %s113, 1
    %p117 = scmp.eq.s32.totalorder %s16, 1
    %p118 = scmp.ne.s32.totalorder %s113, %s115
    %p119 = scmp.eq.s32.totalorder %s16, 0
    %p120 = por %p118, %p119
    %p121 = scmp.ne.s32.totalorder %s113, %s115
    %p122 = scmp.eq.s32.totalorder %s21, 1
    %p123 = por %p121, %p122
    %p124 = scmp.ne.s32.totalorder %s115, %s116
    %p125 = scmp.eq.s32.totalorder %s21, 0
    %p126 = por %p124, %p125
    %p127 = scmp.ne.s32.totalorder %s115, %s116
    %p128 = scmp.eq.s32.totalorder %s22, 1
    %p129 = por %p127, %p128
    %p131 = scmp.ne.s32.totalorder %s116, %s130
    %p132 = scmp.eq.s32.totalorder %s22, 0
    %p133 = por %p131, %p132
    %s135 = sadd.s32 %s134, 1
    %p138 = scmp.eq.s32.totalorder %s16, 1
    %p139 = scmp.ne.s32.totalorder %s134, %s136
    %p140 = scmp.eq.s32.totalorder %s16, 0
    %p141 = por %p139, %p140
    %p142 = scmp.ne.s32.totalorder %s134, %s136
    %p143 = scmp.eq.s32.totalorder %s21, 1
    %p144 = por %p142, %p143
    %p145 = scmp.ne.s32.totalorder %s136, %s137
    %p146 = scmp.eq.s32.totalorder %s21, 0
    %p147 = por %p145, %p146
    %p148 = scmp.ne.s32.totalorder %s136, %s137
    %p149 = scmp.eq.s32.totalorder %s22, 1
    %p150 = por %p148, %p149
    %p152 = scmp.ne.s32.totalorder %s137, %s151
    %p153 = scmp.eq.s32.totalorder %s22, 0
    %p154 = por %p152, %p153
    %s156 = sadd.s32 %s155, 1
    %p159 = scmp.eq.s32.totalorder %s16, 1
    %p160 = scmp.ne.s32.totalorder %s155, %s157
    %p161 = scmp.eq.s32.totalorder %s16, 0
    %p162 = por %p160, %p161
    %p163 = scmp.ne.s32.totalorder %s155, %s157
    %p164 = scmp.eq.s32.totalorder %s21, 1
    %p165 = por %p163, %p164
    %p166 = scmp.ne.s32.totalorder %s157, %s158
    %p167 = scmp.eq.s32.totalorder %s21, 0
    %p168 = por %p166, %p167
    %p169 = scmp.ne.s32.totalorder %s157, %s158
    %p170 = scmp.eq.s32.totalorder %s22, 1
    %p171 = por %p169, %p170
    %p173 = scmp.ne.s32.totalorder %s158, %s172
    %p174 = scmp.eq.s32.totalorder %s22, 0
    %p175 = por %p173, %p174
    %s176 = ssub.s32 %s16, %s23
    %p177 = scmp.eq.s32.totalorder %s176, 0
    %s179 = sadd.s32 %s178, 1
    %s180 = scalar_select %p177, %s178, %s179
    %p183 = pneg %p177
    %p184 = scmp.eq.s32.totalorder %s16, 1
    %p185 = por %p183, %p184
    %p186 = scmp.ne.s32.totalorder %s178, %s181
    %p187 = scmp.eq.s32.totalorder %s16, 0
    %p188 = por %p186, %p187
    %p189 = scmp.ne.s32.totalorder %s178, %s181
    %p190 = scmp.eq.s32.totalorder %s21, 1
    %p191 = por %p189, %p190
    %p192 = scmp.ne.s32.totalorder %s181, %s182
    %p193 = scmp.eq.s32.totalorder %s21, 0
    %p194 = por %p192, %p193
    %p195 = scmp.ne.s32.totalorder %s181, %s182
    %p196 = scmp.eq.s32.totalorder %s22, 1
    %p197 = por %p195, %p196
    %p199 = scmp.ne.s32.totalorder %s182, %s198
    %p200 = scmp.eq.s32.totalorder %s22, 0
    %p201 = por %p199, %p200
    %s202 = ssub.s32 %s16, %s23
    %p203 = scmp.eq.s32.totalorder %s202, 0
    %s205 = sadd.s32 %s204, 1
    %s206 = scalar_select %p203, %s204, %s205
    %p209 = pneg %p203
    %p210 = scmp.eq.s32.totalorder %s16, 1
    %p211 = por %p209, %p210
    %p212 = scmp.ne.s32.totalorder %s204, %s207
    %p213 = scmp.eq.s32.totalorder %s16, 0
    %p214 = por %p212, %p213
    %p215 = scmp.ne.s32.totalorder %s204, %s207
    %p216 = scmp.eq.s32.totalorder %s21, 1
    %p217 = por %p215, %p216
    %p218 = scmp.ne.s32.totalorder %s207, %s208
    %p219 = scmp.eq.s32.totalorder %s21, 0
    %p220 = por %p218, %p219
    %p221 = scmp.ne.s32.totalorder %s207, %s208
    %p222 = scmp.eq.s32.totalorder %s22, 1
    %p223 = por %p221, %p222
    %p225 = scmp.ne.s32.totalorder %s208, %s224
    %p226 = scmp.eq.s32.totalorder %s22, 0
    %p227 = por %p225, %p226
    %s228 = ssub.s32 %s16, %s23
    %p229 = scmp.eq.s32.totalorder %s228, 0
    %s231 = sadd.s32 %s230, 1
    %s232 = scalar_select %p229, %s230, %s231
    %p235 = pneg %p229
    %p236 = scmp.eq.s32.totalorder %s16, 1
    %p237 = por %p235, %p236
    %p238 = scmp.ne.s32.totalorder %s230, %s233
    %p239 = scmp.eq.s32.totalorder %s16, 0
    %p240 = por %p238, %p239
    %p241 = scmp.ne.s32.totalorder %s230, %s233
    %p242 = scmp.eq.s32.totalorder %s21, 1
    %p243 = por %p241, %p242
    %p244 = scmp.ne.s32.totalorder %s233, %s234
    %p245 = scmp.eq.s32.totalorder %s21, 0
    %p246 = por %p244, %p245
    %p247 = scmp.ne.s32.totalorder %s233, %s234
    %p248 = scmp.eq.s32.totalorder %s22, 1
    %p249 = por %p247, %p248
    %p251 = scmp.ne.s32.totalorder %s234, %s250
    %p252 = scmp.eq.s32.totalorder %s22, 0
    %p253 = por %p251, %p252
    %p254 = scmp.le.s32.totalorder 1, %s16
    %p255 = scmp.lt.s32.totalorder %s16, 3
    %p256 = pnand %p254, %p255
    %p257 = pneg %p256
    // Predicated region
    $region9: #{danet_head.10} parent=5 // pred_check
      _
    $region10: #{danet_head.10} parent=5 // pred_check_branch
      %259 = sbr.rel (%p256) target = $region12
    $region11: #{danet_head.10} parent=5 // pred_region
      %s260 = ssub.s32 %s16, 1
      // Predicated region
      $region13: #{danet_head.10} parent=11 // pred_check
        %p261 = pneg %p63
      $region14: #{danet_head.10} parent=11 // pred_check_branch
        %263 = sbr.rel (%p261) target = $region16
      $region15: #{danet_head.10} parent=11 // pred_region
        _
      $region16: #{danet_head.10} parent=11 // pred_fallthru
        _
      // Predicated region
      $region17: #{danet_head.10} parent=11 // pred_check
        %p264 = pneg %p84
      $region18: #{danet_head.10} parent=11 // pred_check_branch
        %266 = sbr.rel (%p264) target = $region20
      $region19: #{danet_head.10} parent=11 // pred_region
        _
      $region20: #{danet_head.10} parent=11 // pred_fallthru
        _
      // Predicated region
      $region21: #{danet_head.10} parent=11 // pred_check
        %p267 = pneg %p105
      $region22: #{danet_head.10} parent=11 // pred_check_branch
        %269 = sbr.rel (%p267) target = $region24
      $region23: #{danet_head.10} parent=11 // pred_region
        _
      $region24: #{danet_head.10} parent=11 // pred_fallthru
        _
      // Predicated region
      $region25: #{danet_head.10} parent=11 // pred_check
        %p270 = pneg %p126
      $region26: #{danet_head.10} parent=11 // pred_check_branch
        %272 = sbr.rel (%p270) target = $region28
      $region27: #{danet_head.10} parent=11 // pred_region
        _
      $region28: #{danet_head.10} parent=11 // pred_fallthru
        _
      // Predicated region
      $region29: #{danet_head.10} parent=11 // pred_check
        %p273 = pneg %p147
      $region30: #{danet_head.10} parent=11 // pred_check_branch
        %275 = sbr.rel (%p273) target = $region32
      $region31: #{danet_head.10} parent=11 // pred_region
        _
      $region32: #{danet_head.10} parent=11 // pred_fallthru
        _
      // Predicated region
      $region33: #{danet_head.10} parent=11 // pred_check
        %p276 = pneg %p168
      $region34: #{danet_head.10} parent=11 // pred_check_branch
        %278 = sbr.rel (%p276) target = $region36
      $region35: #{danet_head.10} parent=11 // pred_region
        _
      $region36: #{danet_head.10} parent=11 // pred_fallthru
        _
    $region12: #{danet_head.10} parent=5 // pred_fallthru
      _
    %p279 = scmp.lt.s32.totalorder %s16, 2
    // Predicated region
    $region37: #{danet_head.10} parent=5 // pred_check
      %p280 = pneg %p279
    $region38: #{danet_head.10} parent=5 // pred_check_branch
      %282 = sbr.rel (%p280) target = $region40
    $region39: #{danet_head.10} parent=5 // pred_region
      // Predicated region
      $region41: #{danet_head.10} parent=39 // pred_check
        %p283 = pneg %p36
      $region42: #{danet_head.10} parent=39 // pred_check_branch
        %285 = sbr.rel (%p283) target = $region44
      $region43: #{danet_head.10} parent=39 // pred_region
        %p286 = scmp.lt.s32.totalorder %s16, 1
        %s287 = scalar_select %p286, %s16, 1
        %s288 = smul.addr %s287, 2
        %s289 = smul.addr %s288, 4
        %s290 = scalar_lea.vmem %s0, %s289
      $region44: #{danet_head.10} parent=39 // pred_fallthru
        _
    $region40: #{danet_head.10} parent=5 // pred_fallthru
      _
    %p291 = scmp.le.s32.totalorder 1, %s16
    %p292 = scmp.lt.s32.totalorder %s16, 3
    %p293 = pnand %p291, %p292
    %p294 = pneg %p293
    // Predicated region
    $region45: #{danet_head.10} parent=5 // pred_check
      _
    $region46: #{danet_head.10} parent=5 // pred_check_branch
      %296 = sbr.rel (%p293) target = $region48
    $region47: #{danet_head.10} parent=5 // pred_region
      %s297 = ssub.s32 %s16, 1
      %p298 = scmp.lt.s32.totalorder %s21, 1
      %s299 = scalar_select %p298, %s21, 1
      %s300 = smul.addr %s299, 2
      %s301 = smul.addr %s300, 4
      %s302 = scalar_lea.vmem %s0, %s301
      %p303 = pneg %p42
      %p304 = pneg %p39
      %p305 = pneg %p63
      %p306 = pneg %p60
      %p307 = pneg %p84
      %p308 = pneg %p81
      %p309 = pneg %p105
      %p310 = pneg %p102
      %p311 = pneg %p126
      %p312 = pneg %p123
      %p313 = pneg %p147
      %p314 = pneg %p144
      %p315 = pneg %p168
      %p316 = pneg %p165
      %p317 = pneg %p194
      %p318 = pneg %p191
      %p319 = scmp.lt.s32.totalorder %s21, 1
      %s320 = scalar_select %p319, %s21, 1
      %s321 = scalar_lea.vmem %s7, %s320
      %p322 = pneg %p220
      %p323 = pneg %p217
      %p324 = scmp.lt.s32.totalorder %s21, 1
      %s325 = scalar_select %p324, %s21, 1
      %s326 = scalar_lea.vmem %s8, %s325
      %p327 = pneg %p246
      %p328 = pneg %p243
      %p329 = scmp.lt.s32.totalorder %s21, 1
      %s330 = scalar_select %p329, %s21, 1
      %s331 = smul.addr %s330, 2
      %s332 = smul.addr %s331, 4
      %s333 = scalar_lea.vmem %s9, %s332
      %p334 = scmp.lt.s32.totalorder %s21, 1
      %s335 = scalar_select %p334, %s21, 1
      %s336 = smul.addr %s335, 2
      %s337 = smul.addr %s336, 4
      %s338 = scalar_lea.vmem %s0, %s337
      %p339 = scmp.lt.s32.totalorder %s21, 1
      %s340 = scalar_select %p339, %s21, 1
      %s341 = scalar_lea.vmem %s7, %s340
      %p342 = scmp.lt.s32.totalorder %s21, 1
      %s343 = scalar_select %p342, %s21, 1
      %s344 = scalar_lea.vmem %s8, %s343
      %p345 = scmp.lt.s32.totalorder %s21, 1
      %s346 = scalar_select %p345, %s21, 1
      %s347 = smul.addr %s346, 2
      %s348 = smul.addr %s347, 4
      %s349 = scalar_lea.vmem %s9, %s348
      %v351 = vld [vmem:[%s338] sm:$0xf]
      %v352 = vld [vmem:[%s338 + $0x4] sm:$0xf]
      %v353 = vld [vmem:[%s1] sm:$0x1]
      %v354 = vld [vmem:[%s2] sm:$0x3]
      %356 = vset.pattern.permute.xlu0 0
      %357 = vperm.xlu0 %356, %v354
      %v358 = vpop.permute.xlu0 %357
      %v362 = vunpack.c.l.b16 %v351
      %v363 = vunpack.c.l.b16 %v352
      %v364 = vpack.c.b16 %v363, %v362
      %vm366 = vcmask 130048
      %v368 = vsel %vm366, %v353, 0
      %370 = vmatprep.subr.bf16.mxu0 0
      %371 = vmatpush1.bf16.msra.mxu0 0
      %372 = vmatprep.subr.bf16.mxu0 0
      %373 = vmatpush1.bf16.msra.mxu0 0
      %374 = vmatprep.subr.bf16.mxu0 0
      %375 = vmatpush1.bf16.msra.mxu0 0
      %376 = vmatprep.subr.bf16.mxu0 0
      %377 = vmatpush1.bf16.msra.mxu0 0
      %378 = vmatprep.subr.bf16.mxu0 0
      %379 = vmatpush1.bf16.msra.mxu0 0
      %380 = vmatprep.subr.bf16.mxu0 0
      %381 = vmatpush1.bf16.msra.mxu0 0
      %382 = vmatprep.subr.bf16.mxu0 0
      %383 = vmatpush1.bf16.msra.mxu0 0
      %384 = vmatprep.subr.bf16.mxu0 0
      %385 = vmatpush1.bf16.msra.mxu0 %v364
      %386 = vmatprep.subr.bf16.mxu0 0
      %387 = vmatpush2.bf16.msra.mxu0 0
      %388 = vmatprep.subr.bf16.mxu0 0
      %389 = vmatpush2.bf16.msra.mxu0 0
      %390 = vmatprep.subr.bf16.mxu0 0
      %391 = vmatpush2.bf16.msra.mxu0 0
      %392 = vmatprep.subr.bf16.mxu0 0
      %393 = vmatpush2.bf16.msra.mxu0 0
      %394 = vmatprep.subr.bf16.mxu0 0
      %395 = vmatpush2.bf16.msra.mxu0 0
      %396 = vmatprep.subr.bf16.mxu0 0
      %397 = vmatpush2.bf16.msra.mxu0 0
      %398 = vmatprep.subr.bf16.mxu0 0
      %399 = vmatpush2.bf16.msra.mxu0 0
      %400 = vmatprep.subr.bf16.mxu0 0
      %401 = vmatpush2.bf16.msra.mxu0 0
      %402 = vmatprep.mubr.bf16.mxu0 0
      %403 = vmatmul.mubr.bf16.gmra.mxu0 %v368
      %v404 = vpop.f32.mrf.mxu0
      %v405 = vadd.f32 %v358, %v404
      %v406 = vpop.f32.mrf.mxu0
      %v407 = vpop.f32.mrf.mxu0
      %v408 = vpop.f32.mrf.mxu0
      %409 = vdwg.mxu0
      %v410 = vpack.c.bf16 %v405, %v405
      %411 = vst [vmem:[%s341] sm:$0x1] %v410
      %v412 = vld [vmem:[%s3] sm:$0x1]
      %v413 = vld [vmem:[%s4] sm:$0x3]
      %415 = vset.pattern.permute.xlu0 0
      %416 = vperm.xlu0 %415, %v413
      %v417 = vpop.permute.xlu0 %416
      %v420 = vsel %vm366, %v412, 0
      %422 = vmatprep.subr.bf16.mxu0 0
      %423 = vmatpush1.bf16.msra.mxu0 0
      %424 = vmatprep.subr.bf16.mxu0 0
      %425 = vmatpush1.bf16.msra.mxu0 0
      %426 = vmatprep.subr.bf16.mxu0 0
      %427 = vmatpush1.bf16.msra.mxu0 0
      %428 = vmatprep.subr.bf16.mxu0 0
      %429 = vmatpush1.bf16.msra.mxu0 0
      %430 = vmatprep.subr.bf16.mxu0 0
      %431 = vmatpush1.bf16.msra.mxu0 0
      %432 = vmatprep.subr.bf16.mxu0 0
      %433 = vmatpush1.bf16.msra.mxu0 0
      %434 = vmatprep.subr.bf16.mxu0 0
      %435 = vmatpush1.bf16.msra.mxu0 0
      %436 = vmatprep.subr.bf16.mxu0 0
      %437 = vmatpush1.bf16.msra.mxu0 %v364
      %438 = vmatprep.subr.bf16.mxu0 0
      %439 = vmatpush2.bf16.msra.mxu0 0
      %440 = vmatprep.subr.bf16.mxu0 0
      %441 = vmatpush2.bf16.msra.mxu0 0
      %442 = vmatprep.subr.bf16.mxu0 0
      %443 = vmatpush2.bf16.msra.mxu0 0
      %444 = vmatprep.subr.bf16.mxu0 0
      %445 = vmatpush2.bf16.msra.mxu0 0
      %446 = vmatprep.subr.bf16.mxu0 0
      %447 = vmatpush2.bf16.msra.mxu0 0
      %448 = vmatprep.subr.bf16.mxu0 0
      %449 = vmatpush2.bf16.msra.mxu0 0
      %450 = vmatprep.subr.bf16.mxu0 0
      %451 = vmatpush2.bf16.msra.mxu0 0
      %452 = vmatprep.subr.bf16.mxu0 0
      %453 = vmatpush2.bf16.msra.mxu0 0
      %454 = vmatprep.mubr.bf16.mxu0 0
      %455 = vmatmul.mubr.bf16.gmra.mxu0 %v420
      %v456 = vpop.f32.mrf.mxu0
      %v457 = vadd.f32 %v417, %v456
      %v458 = vpop.f32.mrf.mxu0
      %v459 = vpop.f32.mrf.mxu0
      %v460 = vpop.f32.mrf.mxu0
      %461 = vdwg.mxu0
      %v462 = vpack.c.bf16 %v457, %v457
      %463 = vst [vmem:[%s344] sm:$0x1] %v462
      %v464 = vld [vmem:[%s5] sm:$0xf]
      %v465 = vld [vmem:[%s5 + $0x4] sm:$0xf]
      %v466 = vld [vmem:[%s6] sm:$0xff]
      %v467 = vld [vmem:[%s6 + $0x8] sm:$0xff]
      %469 = vset.pattern.permute.xlu0 0
      %470 = vperm.xlu0 %469, %v466
      %v471 = vpop.permute.xlu0 %470
      %474 = vset.pattern.permute.xlu0 0
      %475 = vperm.xlu0 %474, %v467
      %v476 = vpop.permute.xlu0 %475
      %v480 = vunpack.c.l.b16 %v464
      %v481 = vunpack.c.l.b16 %v465
      %v482 = vpack.c.b16 %v481, %v480
      %v484 = vsel %vm366, %v482, 0
      %486 = vmatprep.subr.bf16.mxu0 0
      %487 = vmatpush1.bf16.msra.mxu0 0
      %488 = vmatprep.subr.bf16.mxu0 0
      %489 = vmatpush1.bf16.msra.mxu0 0
      %490 = vmatprep.subr.bf16.mxu0 0
      %491 = vmatpush1.bf16.msra.mxu0 0
      %492 = vmatprep.subr.bf16.mxu0 0
      %493 = vmatpush1.bf16.msra.mxu0 0
      %494 = vmatprep.subr.bf16.mxu0 0
      %495 = vmatpush1.bf16.msra.mxu0 0
      %496 = vmatprep.subr.bf16.mxu0 0
      %497 = vmatpush1.bf16.msra.mxu0 0
      %498 = vmatprep.subr.bf16.mxu0 0
      %499 = vmatpush1.bf16.msra.mxu0 0
      %500 = vmatprep.subr.bf16.mxu0 0
      %501 = vmatpush1.bf16.msra.mxu0 %v364
      %502 = vmatprep.subr.bf16.mxu0 0
      %503 = vmatpush2.bf16.msra.mxu0 0
      %504 = vmatprep.subr.bf16.mxu0 0
      %505 = vmatpush2.bf16.msra.mxu0 0
      %506 = vmatprep.subr.bf16.mxu0 0
      %507 = vmatpush2.bf16.msra.mxu0 0
      %508 = vmatprep.subr.bf16.mxu0 0
      %509 = vmatpush2.bf16.msra.mxu0 0
      %510 = vmatprep.subr.bf16.mxu0 0
      %511 = vmatpush2.bf16.msra.mxu0 0
      %512 = vmatprep.subr.bf16.mxu0 0
      %513 = vmatpush2.bf16.msra.mxu0 0
      %514 = vmatprep.subr.bf16.mxu0 0
      %515 = vmatpush2.bf16.msra.mxu0 0
      %516 = vmatprep.subr.bf16.mxu0 0
      %517 = vmatpush2.bf16.msra.mxu0 0
      %518 = vmatprep.mubr.bf16.mxu0 0
      %519 = vmatmul.mubr.bf16.gmra.mxu0 %v484
      %v520 = vpop.f32.mrf.mxu0
      %v521 = vadd.f32 %v471, %v520
      %v522 = vpop.f32.mrf.mxu0
      %v523 = vpop.f32.mrf.mxu0
      %v524 = vadd.f32 %v476, %v523
      %v525 = vpop.f32.mrf.mxu0
      %526 = vdwg.mxu0
      %v527 = vpack.c.bf16 %v524, %v521
      %v529 = vunpack.c.l.b16 %v527
      %v530 = vunpack.c.h.b16 %v527
      %v531 = vpack.c.b16 %v529, %v529
      %v532 = vpack.c.b16 %v530, %v530
      %535 = vst [vmem:[%s349] sm:$0xf] %v531
      %536 = vst [vmem:[%s349 + $0x4] sm:$0xf] %v532
      %p537 = scmp.lt.s32.totalorder %s21, 1
      %s538 = scalar_select %p537, %s21, 1
      %s539 = scalar_lea.vmem %s7, %s538
      %p540 = scmp.lt.s32.totalorder %s21, 1
      %s541 = scalar_select %p540, %s21, 1
      %s542 = scalar_lea.vmem %s8, %s541
      %p543 = scmp.lt.s32.totalorder %s21, 1
      %s544 = scalar_select %p543, %s21, 1
      %s545 = smul.addr %s544, 2
      %s546 = smul.addr %s545, 4
      %s547 = scalar_lea.vmem %s9, %s546
      // Predicated region
      $region49: #{danet_head.10} parent=47 // pred_check
        %p548 = pneg %p191
      $region50: #{danet_head.10} parent=47 // pred_check_branch
        %550 = sbr.rel (%p548) target = $region52
      $region51: #{danet_head.10} parent=47 // pred_region
        _
      $region52: #{danet_head.10} parent=47 // pred_fallthru
        _
      // Predicated region
      $region53: #{danet_head.10} parent=47 // pred_check
        %p551 = pneg %p217
      $region54: #{danet_head.10} parent=47 // pred_check_branch
        %553 = sbr.rel (%p551) target = $region56
      $region55: #{danet_head.10} parent=47 // pred_region
        _
      $region56: #{danet_head.10} parent=47 // pred_fallthru
        _
      // Predicated region
      $region57: #{danet_head.10} parent=47 // pred_check
        %p554 = pneg %p243
      $region58: #{danet_head.10} parent=47 // pred_check_branch
        %556 = sbr.rel (%p554) target = $region60
      $region59: #{danet_head.10} parent=47 // pred_region
        _
      $region60: #{danet_head.10} parent=47 // pred_fallthru
        _
    $region48: #{danet_head.10} parent=5 // pred_fallthru
      _
    %p557 = scmp.le.s32.totalorder 2, %s16
    // Predicated region
    $region61: #{danet_head.10} parent=5 // pred_check
      %p558 = pneg %p557
    $region62: #{danet_head.10} parent=5 // pred_check_branch
      %560 = sbr.rel (%p558) target = $region64
    $region63: #{danet_head.10} parent=5 // pred_region
      %s561 = ssub.s32 %s16, 2
      // Predicated region
      $region65: #{danet_head.10} parent=63 // pred_check
        %p562 = pneg %p197
      $region66: #{danet_head.10} parent=63 // pred_check_branch
        %564 = sbr.rel (%p562) target = $region68
      $region67: #{danet_head.10} parent=63 // pred_region
        %p565 = scmp.lt.s32.totalorder %s22, 1
        %s566 = scalar_select %p565, %s22, 1
        %s567 = scalar_lea.vmem %s7, %s566
      $region68: #{danet_head.10} parent=63 // pred_fallthru
        _
      // Predicated region
      $region69: #{danet_head.10} parent=63 // pred_check
        %p568 = pneg %p223
      $region70: #{danet_head.10} parent=63 // pred_check_branch
        %570 = sbr.rel (%p568) target = $region72
      $region71: #{danet_head.10} parent=63 // pred_region
        %p571 = scmp.lt.s32.totalorder %s22, 1
        %s572 = scalar_select %p571, %s22, 1
        %s573 = scalar_lea.vmem %s8, %s572
      $region72: #{danet_head.10} parent=63 // pred_fallthru
        _
      // Predicated region
      $region73: #{danet_head.10} parent=63 // pred_check
        %p574 = pneg %p249
      $region74: #{danet_head.10} parent=63 // pred_check_branch
        %576 = sbr.rel (%p574) target = $region76
      $region75: #{danet_head.10} parent=63 // pred_region
        %p577 = scmp.lt.s32.totalorder %s22, 1
        %s578 = scalar_select %p577, %s22, 1
        %s579 = smul.addr %s578, 2
        %s580 = smul.addr %s579, 4
        %s581 = scalar_lea.vmem %s9, %s580
      $region76: #{danet_head.10} parent=63 // pred_fallthru
        _
    $region64: #{danet_head.10} parent=5 // pred_fallthru
      _
  $region6: #{danet_head.10} parent=0 // loop_footer
    %s20 = sadd.s32 1, %s16
  $region7: #{danet_head.10} parent=0 // loop_footer_branch
    %15 = sbr.rel target = $region3
  $region8: #{danet_head.10} parent=0 // loop_exit
    _

// kernel: danet_head.9
$region0: #{danet_head.9}
  #allocation0 [shape = 'u32[]', space=smem, size = 0x4, offset = 0x4, fixed_abs, tag = 'smem constant byte address 0x4 - core index']
  #allocation1 [shape = 'u32[144,128]{1,0:T(1,128)}', space=vmem, size = 0x12000, scoped, tag = 'internal scratch']
  #allocation2 [shape = 'f32[16,128]{1,0:T(8,128)}', space=vmem, size = 0x2000, scoped, tag = 'scratch operand']
  %s0 = inlined_call_operand.vmem [shape: bf16[2,64,256], index: 0, kind: input, shape index: {}]
  %s1 = inlined_call_operand.vmem [shape: bf16[9,16,64], index: 1, kind: input, shape index: {}]
  %s2 = inlined_call_operand.vmem [shape: f32[16,1], index: 2, kind: input, shape index: {}]
  %s3 = inlined_call_operand.vmem [shape: f32[1,128], index: 3, kind: input, shape index: {}]
  %s4 = inlined_call_operand.vmem [shape: bf16[2,16,128], index: 4, kind: output, shape index: {}]
  %s5 = sld [smem:[#allocation0]]
  $region57: #{danet_head.9} parent=0
    _
  %s7 = ssub.s32 1, %s5
  %s8 = scalar_select 0, %s7, %s5
  loop: start=0, step=1, limit=4
  $region2: #{danet_head.9} parent=0 // loop_pre_header
    _
  $region3: #{danet_head.9} parent=0 // loop_header
    %s10 = sphi 0, %s14
    %p11 = scmp.ge.s32.totalorder %s10, 4
    %s17 = sphi 0, %s29
    %s18 = sphi 0, %s25
    %s19 = sphi 0, %s17
    %s20 = sphi 0, %s18
    %s21 = sphi 0, %s19
    %s22 = sphi 0, %s20
    %s34 = sphi 0, %s36
    %s37 = sphi 0, %s34
    %s38 = sphi 0, %s37
    %s54 = sphi 0, %s38
    %s60 = sphi 0, %s62
    %s63 = sphi 0, %s60
    %s64 = sphi 0, %s63
    %s80 = sphi 0, %s64
    %s84 = sphi 0, %s84
    %s86 = sphi 0, %s84
    %s87 = sphi 0, %s86
    %s101 = sphi 0, %s87
    %s105 = sphi 0, %s105
    %s107 = sphi 0, %s105
    %s108 = sphi 0, %s107
    %s122 = sphi 0, %s108
    %s128 = sphi 0, %s130
    %s131 = sphi 0, %s128
    %s132 = sphi 0, %s131
    %s148 = sphi 0, %s132
  $region4: #{danet_head.9} parent=0 // loop_header_branch
    %13 = sbr.rel (%p11) target = $region8
  $region5: #{danet_head.9} parent=0 // loop_body
    %s15 = ssub.s32 %s10, 1
    %s16 = ssub.s32 %s10, 2
    %s23 = sadd.s32 1, %s18
    %p24 = scmp.ge.s32.totalorder %s23, 1
    %s25 = scalar_select %p24, 0, %s23
    %s26 = sadd.s32 1, %s17
    %s27 = scalar_select %p24, %s26, %s17
    %p28 = scmp.ge.s32.totalorder %s27, 2
    %s29 = scalar_select %p28, 0, %s27
    %s30 = ssub.s32 %s17, %s29
    %s31 = ssub.s32 %s18, %s25
    %s32 = sor.u32 %s30, %s31
    %p33 = scmp.eq.s32.totalorder %s32, 0
    %s35 = sadd.s32 %s34, 1
    %s36 = scalar_select %p33, %s34, %s35
    %p39 = pneg %p33
    %p40 = scmp.eq.s32.totalorder %s10, 1
    %p41 = por %p39, %p40
    %p42 = scmp.ne.s32.totalorder %s34, %s37
    %p43 = scmp.eq.s32.totalorder %s10, 0
    %p44 = por %p42, %p43
    %p45 = scmp.ne.s32.totalorder %s34, %s37
    %p46 = scmp.eq.s32.totalorder %s15, 1
    %p47 = por %p45, %p46
    %p48 = scmp.ne.s32.totalorder %s37, %s38
    %p49 = scmp.eq.s32.totalorder %s15, 0
    %p50 = por %p48, %p49
    %p51 = scmp.ne.s32.totalorder %s37, %s38
    %p52 = scmp.eq.s32.totalorder %s16, 1
    %p53 = por %p51, %p52
    %p55 = scmp.ne.s32.totalorder %s38, %s54
    %p56 = scmp.eq.s32.totalorder %s16, 0
    %p57 = por %p55, %p56
    %s58 = ssub.s32 %s18, %s25
    %p59 = scmp.eq.s32.totalorder %s58, 0
    %s61 = sadd.s32 %s60, 1
    %s62 = scalar_select %p59, %s60, %s61
    %p65 = pneg %p59
    %p66 = scmp.eq.s32.totalorder %s10, 1
    %p67 = por %p65, %p66
    %p68 = scmp.ne.s32.totalorder %s60, %s63
    %p69 = scmp.eq.s32.totalorder %s10, 0
    %p70 = por %p68, %p69
    %p71 = scmp.ne.s32.totalorder %s60, %s63
    %p72 = scmp.eq.s32.totalorder %s15, 1
    %p73 = por %p71, %p72
    %p74 = scmp.ne.s32.totalorder %s63, %s64
    %p75 = scmp.eq.s32.totalorder %s15, 0
    %p76 = por %p74, %p75
    %p77 = scmp.ne.s32.totalorder %s63, %s64
    %p78 = scmp.eq.s32.totalorder %s16, 1
    %p79 = por %p77, %p78
    %p81 = scmp.ne.s32.totalorder %s64, %s80
    %p82 = scmp.eq.s32.totalorder %s16, 0
    %p83 = por %p81, %p82
    %s85 = sadd.s32 %s84, 1
    %p88 = scmp.eq.s32.totalorder %s10, 1
    %p89 = scmp.ne.s32.totalorder %s84, %s86
    %p90 = scmp.eq.s32.totalorder %s10, 0
    %p91 = por %p89, %p90
    %p92 = scmp.ne.s32.totalorder %s84, %s86
    %p93 = scmp.eq.s32.totalorder %s15, 1
    %p94 = por %p92, %p93
    %p95 = scmp.ne.s32.totalorder %s86, %s87
    %p96 = scmp.eq.s32.totalorder %s15, 0
    %p97 = por %p95, %p96
    %p98 = scmp.ne.s32.totalorder %s86, %s87
    %p99 = scmp.eq.s32.totalorder %s16, 1
    %p100 = por %p98, %p99
    %p102 = scmp.ne.s32.totalorder %s87, %s101
    %p103 = scmp.eq.s32.totalorder %s16, 0
    %p104 = por %p102, %p103
    %s106 = sadd.s32 %s105, 1
    %p109 = scmp.eq.s32.totalorder %s10, 1
    %p110 = scmp.ne.s32.totalorder %s105, %s107
    %p111 = scmp.eq.s32.totalorder %s10, 0
    %p112 = por %p110, %p111
    %p113 = scmp.ne.s32.totalorder %s105, %s107
    %p114 = scmp.eq.s32.totalorder %s15, 1
    %p115 = por %p113, %p114
    %p116 = scmp.ne.s32.totalorder %s107, %s108
    %p117 = scmp.eq.s32.totalorder %s15, 0
    %p118 = por %p116, %p117
    %p119 = scmp.ne.s32.totalorder %s107, %s108
    %p120 = scmp.eq.s32.totalorder %s16, 1
    %p121 = por %p119, %p120
    %p123 = scmp.ne.s32.totalorder %s108, %s122
    %p124 = scmp.eq.s32.totalorder %s16, 0
    %p125 = por %p123, %p124
    %s126 = ssub.s32 %s17, %s29
    %p127 = scmp.eq.s32.totalorder %s126, 0
    %s129 = sadd.s32 %s128, 1
    %s130 = scalar_select %p127, %s128, %s129
    %p133 = pneg %p127
    %p134 = scmp.eq.s32.totalorder %s10, 1
    %p135 = por %p133, %p134
    %p136 = scmp.ne.s32.totalorder %s128, %s131
    %p137 = scmp.eq.s32.totalorder %s10, 0
    %p138 = por %p136, %p137
    %p139 = scmp.ne.s32.totalorder %s128, %s131
    %p140 = scmp.eq.s32.totalorder %s15, 1
    %p141 = por %p139, %p140
    %p142 = scmp.ne.s32.totalorder %s131, %s132
    %p143 = scmp.eq.s32.totalorder %s15, 0
    %p144 = por %p142, %p143
    %p145 = scmp.ne.s32.totalorder %s131, %s132
    %p146 = scmp.eq.s32.totalorder %s16, 1
    %p147 = por %p145, %p146
    %p149 = scmp.ne.s32.totalorder %s132, %s148
    %p150 = scmp.eq.s32.totalorder %s16, 0
    %p151 = por %p149, %p150
    %p152 = scmp.le.s32.totalorder 1, %s10
    %p153 = scmp.lt.s32.totalorder %s10, 3
    %p154 = pnand %p152, %p153
    %p155 = pneg %p154
    // Predicated region
    $region9: #{danet_head.9} parent=5 // pred_check
      _
    $region10: #{danet_head.9} parent=5 // pred_check_branch
      %157 = sbr.rel (%p154) target = $region12
    $region11: #{danet_head.9} parent=5 // pred_region
      %s158 = ssub.s32 %s10, 1
      // Predicated region
      $region13: #{danet_head.9} parent=11 // pred_check
        %p159 = pneg %p76
      $region14: #{danet_head.9} parent=11 // pred_check_branch
        %161 = sbr.rel (%p159) target = $region16
      $region15: #{danet_head.9} parent=11 // pred_region
        %p162 = scmp.lt.s32.totalorder %s20, 0
        %s163 = scalar_select %p162, %s20, 0
        %s164 = smul.addr %s163, 4
        %s165 = scalar_lea.vmem %s1, %s164
      $region16: #{danet_head.9} parent=11 // pred_fallthru
        _
      // Predicated region
      $region17: #{danet_head.9} parent=11 // pred_check
        %p166 = pneg %p97
      $region18: #{danet_head.9} parent=11 // pred_check_branch
        %168 = sbr.rel (%p166) target = $region20
      $region19: #{danet_head.9} parent=11 // pred_region
        _
      $region20: #{danet_head.9} parent=11 // pred_fallthru
        _
      // Predicated region
      $region21: #{danet_head.9} parent=11 // pred_check
        %p169 = pneg %p118
      $region22: #{danet_head.9} parent=11 // pred_check_branch
        %171 = sbr.rel (%p169) target = $region24
      $region23: #{danet_head.9} parent=11 // pred_region
        _
      $region24: #{danet_head.9} parent=11 // pred_fallthru
        _
    $region12: #{danet_head.9} parent=5 // pred_fallthru
      _
    %p172 = scmp.lt.s32.totalorder %s10, 2
    // Predicated region
    $region25: #{danet_head.9} parent=5 // pred_check
      %p173 = pneg %p172
    $region26: #{danet_head.9} parent=5 // pred_check_branch
      %175 = sbr.rel (%p173) target = $region28
    $region27: #{danet_head.9} parent=5 // pred_region
      // Predicated region
      $region29: #{danet_head.9} parent=27 // pred_check
        %p176 = pneg %p44
      $region30: #{danet_head.9} parent=27 // pred_check_branch
        %178 = sbr.rel (%p176) target = $region32
      $region31: #{danet_head.9} parent=27 // pred_region
        %s179 = smul.u32 8, %s18
        %p180 = scmp.lt.s32.totalorder %s17, 1
        %s181 = scalar_select %p180, %s17, 1
        %p182 = scmp.lt.s32.totalorder %s179, 7
        %s183 = scalar_select %p182, %s179, 7
        %s184 = smul.addr %s183, 2
        %s185 = smul.addr %s181, 16
        %s186 = sadd.s32 %s184, %s185
        %s187 = smul.addr %s186, 4
        %s188 = scalar_lea.vmem %s0, %s187
        %s189 = smul.u32 8, %s18
      $region32: #{danet_head.9} parent=27 // pred_fallthru
        _
    $region28: #{danet_head.9} parent=5 // pred_fallthru
      _
    %p190 = scmp.le.s32.totalorder 1, %s10
    %p191 = scmp.lt.s32.totalorder %s10, 3
    %p192 = pnand %p190, %p191
    %p193 = pneg %p192
    // Predicated region
    $region33: #{danet_head.9} parent=5 // pred_check
      _
    $region34: #{danet_head.9} parent=5 // pred_check_branch
      %195 = sbr.rel (%p192) target = $region36
    $region35: #{danet_head.9} parent=5 // pred_region
      %s196 = ssub.s32 %s10, 1
      %s197 = smul.u32 8, %s20
      %p198 = scmp.lt.s32.totalorder %s19, 1
      %s199 = scalar_select %p198, %s19, 1
      %p200 = scmp.lt.s32.totalorder %s197, 7
      %s201 = scalar_select %p200, %s197, 7
      %s202 = smul.addr %s201, 2
      %s203 = smul.addr %s199, 16
      %s204 = sadd.s32 %s202, %s203
      %s205 = smul.addr %s204, 4
      %s206 = scalar_lea.vmem %s0, %s205
      %p207 = pneg %p50
      %p208 = pneg %p47
      %p209 = scmp.lt.s32.totalorder %s20, 0
      %s210 = scalar_select %p209, %s20, 0
      %s211 = smul.addr %s210, 4
      %s212 = scalar_lea.vmem %s1, %s211
      %p213 = pneg %p76
      %p214 = pneg %p73
      %p215 = pneg %p97
      %p216 = pneg %p94
      %p217 = pneg %p118
      %p218 = pneg %p115
      %p219 = pneg %p144
      %p220 = pneg %p141
      %p221 = scmp.lt.s32.totalorder %s19, 1
      %s222 = scalar_select %p221, %s19, 1
      %s223 = smul.addr %s222, 2
      %s224 = smul.addr %s223, 4
      %s225 = scalar_lea.vmem %s4, %s224
      %s226 = smul.u32 8, %s20
      %p227 = scmp.lt.s32.totalorder %s19, 1
      %s228 = scalar_select %p227, %s19, 1
      %p229 = scmp.lt.s32.totalorder %s226, 7
      %s230 = scalar_select %p229, %s226, 7
      %s231 = smul.addr %s230, 2
      %s232 = smul.addr %s228, 16
      %s233 = sadd.s32 %s231, %s232
      %s234 = smul.addr %s233, 4
      %s235 = scalar_lea.vmem %s0, %s234
      %s236 = smul.u32 8, %s20
      %p237 = scmp.lt.s32.totalorder %s20, 0
      %s238 = scalar_select %p237, %s20, 0
      %s239 = smul.addr %s238, 4
      %s240 = scalar_lea.vmem %s1, %s239
      %p241 = scmp.lt.s32.totalorder %s19, 1
      %s242 = scalar_select %p241, %s19, 1
      %s243 = smul.addr %s242, 2
      %s244 = smul.addr %s243, 4
      %s245 = scalar_lea.vmem %s4, %s244
      %p247 = scmp.eq.s32.totalorder %s20, 0
      // Predicated region
      $region37: #{danet_head.9} parent=35 // pred_check
        %p248 = pneg %p247
      $region38: #{danet_head.9} parent=35 // pred_check_branch
        %250 = sbr.rel (%p248) target = $region40
      $region39: #{danet_head.9} parent=35 // pred_region
        %251 = vst [vmem:[#allocation2] sm:$0xff] 0.0
        %252 = vst [vmem:[#allocation2 + $0x8] sm:$0xff] 0.0
      $region40: #{danet_head.9} parent=35 // pred_fallthru
        _
      %v253 = vld [vmem:[#allocation2] sm:$0xff]
      %v254 = vld [vmem:[#allocation2 + $0x8] sm:$0xff]
      %v255 = vld [vmem:[%s235] sm:$0xf]
      %v256 = vld [vmem:[%s235 + $0x8] sm:$0xf]
      %v257 = vld [vmem:[%s235 + $0x10] sm:$0xf]
      %v258 = vld [vmem:[%s235 + $0x18] sm:$0xf]
      %v259 = vld [vmem:[%s235 + $0x20] sm:$0xf]
      %v260 = vld [vmem:[%s235 + $0x28] sm:$0xf]
      %v261 = vld [vmem:[%s235 + $0x30] sm:$0xf]
      %v262 = vld [vmem:[%s235 + $0x38] sm:$0xf]
      %v263 = vld [vmem:[%s240] sm:$0xf]
      %v264 = vld [vmem:[%s240 + $0x4] sm:$0xf]
      %v267 = vunpack.c.l.b16 %v263
      %v268 = vunpack.c.l.b16 %v264
      %v269 = vpack.c.b16 %v268, %v267
      %v278 = vunpack.c.l.b16 %v255
      %v279 = vunpack.c.l.b16 %v256
      %v280 = vunpack.c.l.b16 %v257
      %v281 = vunpack.c.l.b16 %v258
      %v282 = vunpack.c.l.b16 %v259
      %v283 = vunpack.c.l.b16 %v260
      %v284 = vunpack.c.l.b16 %v261
      %v285 = vunpack.c.l.b16 %v262
      %v286 = vpack.c.b16 %v279, %v278
      %v287 = vpack.c.b16 %v281, %v280
      %v288 = vpack.c.b16 %v283, %v282
      %v289 = vpack.c.b16 %v285, %v284
      %vm294 = vcmask 523264
      %v296 = vsel %vm294, %v269, 0
      %298 = vmatprep.subr.bf16.mxu0 0
      %299 = vmatpush1.bf16.msra.mxu0 0
      %300 = vmatprep.subr.bf16.mxu0 0
      %301 = vmatpush1.bf16.msra.mxu0 0
      %302 = vmatprep.subr.bf16.mxu0 0
      %303 = vmatpush1.bf16.msra.mxu0 0
      %304 = vmatprep.subr.bf16.mxu0 0
      %305 = vmatpush1.bf16.msra.mxu0 0
      %306 = vmatprep.subr.bf16.mxu0 0
      %307 = vmatpush1.bf16.msra.mxu0 %v289
      %308 = vmatprep.subr.bf16.mxu0 0
      %309 = vmatpush1.bf16.msra.mxu0 %v288
      %310 = vmatprep.subr.bf16.mxu0 0
      %311 = vmatpush1.bf16.msra.mxu0 %v287
      %312 = vmatprep.subr.bf16.mxu0 0
      %313 = vmatpush1.bf16.msra.mxu0 %v286
      %314 = vmatprep.subr.bf16.mxu0 0
      %315 = vmatpush2.bf16.msra.mxu0 0
      %316 = vmatprep.subr.bf16.mxu0 0
      %317 = vmatpush2.bf16.msra.mxu0 0
      %318 = vmatprep.subr.bf16.mxu0 0
      %319 = vmatpush2.bf16.msra.mxu0 0
      %320 = vmatprep.subr.bf16.mxu0 0
      %321 = vmatpush2.bf16.msra.mxu0 0
      %322 = vmatprep.subr.bf16.mxu0 0
      %323 = vmatpush2.bf16.msra.mxu0 0
      %324 = vmatprep.subr.bf16.mxu0 0
      %325 = vmatpush2.bf16.msra.mxu0 0
      %326 = vmatprep.subr.bf16.mxu0 0
      %327 = vmatpush2.bf16.msra.mxu0 0
      %328 = vmatprep.subr.bf16.mxu0 0
      %329 = vmatpush2.bf16.msra.mxu0 0
      %330 = vmatprep.mubr.bf16.mxu0 0
      %331 = vmatmul.mubr.bf16.gmra.mxu0 %v296
      %v332 = vpop.f32.mrf.mxu0
      %v333 = vadd.f32 0.0, %v332
      %v334 = vpop.f32.mrf.mxu0
      %v335 = vpop.f32.mrf.mxu0
      %v336 = vadd.f32 0.0, %v335
      %v337 = vpop.f32.mrf.mxu0
      %338 = vdwg.mxu0
      %v339 = vadd.f32 %v253, %v333
      %v340 = vadd.f32 %v254, %v336
      %v341 = vld [vmem:[%s235] sm:$0xff]
      %v342 = vld [vmem:[%s235 + $0x8] sm:$0xff]
      %v343 = vld [vmem:[%s235 + $0x10] sm:$0xff]
      %v344 = vld [vmem:[%s235 + $0x18] sm:$0xff]
      %v345 = vld [vmem:[%s235 + $0x20] sm:$0xff]
      %v346 = vld [vmem:[%s235 + $0x28] sm:$0xff]
      %v347 = vld [vmem:[%s235 + $0x30] sm:$0xff]
      %v348 = vld [vmem:[%s235 + $0x38] sm:$0xff]
      %s349 = scalar_lea.vmem %s240, 8
      %v350 = vld [vmem:[%s349] sm:$0xf]
      %v351 = vld [vmem:[%s349 + $0x4] sm:$0xf]
      %v354 = vunpack.c.l.b16 %v350
      %v355 = vunpack.c.l.b16 %v351
      %v356 = vpack.c.b16 %v355, %v354
      %v365 = vunpack.c.l.b16 %v341
      %v366 = vunpack.c.h.b16 %v341
      %v367 = vunpack.c.l.b16 %v342
      %v368 = vunpack.c.h.b16 %v342
      %v369 = vunpack.c.l.b16 %v343
      %v370 = vunpack.c.h.b16 %v343
      %v371 = vunpack.c.l.b16 %v344
      %v372 = vunpack.c.h.b16 %v344
      %v373 = vunpack.c.l.b16 %v345
      %v374 = vunpack.c.h.b16 %v345
      %v375 = vunpack.c.l.b16 %v346
      %v376 = vunpack.c.h.b16 %v346
      %v377 = vunpack.c.l.b16 %v347
      %v378 = vunpack.c.h.b16 %v347
      %v379 = vunpack.c.l.b16 %v348
      %v380 = vunpack.c.h.b16 %v348
      %v381 = vpack.c.b16 %v367, %v365
      %v382 = vpack.c.b16 %v368, %v366
      %v383 = vpack.c.b16 %v371, %v369
      %v384 = vpack.c.b16 %v372, %v370
      %v385 = vpack.c.b16 %v375, %v373
      %v386 = vpack.c.b16 %v376, %v374
      %v387 = vpack.c.b16 %v379, %v377
      %v388 = vpack.c.b16 %v380, %v378
      %389 = vrot.lane.b32.xlu0 %v381, 127
      %v390 = vpop.permute.xlu0 %389
      %391 = vrot.lane.b32.xlu0 %v382, 127
      %v392 = vpop.permute.xlu0 %391
      %393 = vrot.lane.b32.xlu0 %v383, 127
      %v394 = vpop.permute.xlu0 %393
      %395 = vrot.lane.b32.xlu0 %v384, 127
      %v396 = vpop.permute.xlu0 %395
      %397 = vrot.lane.b32.xlu0 %v385, 127
      %v398 = vpop.permute.xlu0 %397
      %399 = vrot.lane.b32.xlu0 %v386, 127
      %v400 = vpop.permute.xlu0 %399
      %401 = vrot.lane.b32.xlu0 %v387, 127
      %v402 = vpop.permute.xlu0 %401
      %403 = vrot.lane.b32.xlu0 %v388, 127
      %v404 = vpop.permute.xlu0 %403
      %vm405 = vcmask 1039360
      %v406 = vsel %vm405, %v390, %v392
      %v407 = vsel %vm405, %v394, %v396
      %v408 = vsel %vm405, %v398, %v400
      %v409 = vsel %vm405, %v402, %v404
      %v415 = vsel %vm294, %v356, 0
      %417 = vmatprep.subr.bf16.mxu0 0
      %418 = vmatpush1.bf16.msra.mxu0 0
      %419 = vmatprep.subr.bf16.mxu0 0
      %420 = vmatpush1.bf16.msra.mxu0 0
      %421 = vmatprep.subr.bf16.mxu0 0
      %422 = vmatpush1.bf16.msra.mxu0 0
      %423 = vmatprep.subr.bf16.mxu0 0
      %424 = vmatpush1.bf16.msra.mxu0 0
      %425 = vmatprep.subr.bf16.mxu0 0
      %426 = vmatpush1.bf16.msra.mxu0 %v409
      %427 = vmatprep.subr.bf16.mxu0 0
      %428 = vmatpush1.bf16.msra.mxu0 %v408
      %429 = vmatprep.subr.bf16.mxu0 0
      %430 = vmatpush1.bf16.msra.mxu0 %v407
      %431 = vmatprep.subr.bf16.mxu0 0
      %432 = vmatpush1.bf16.msra.mxu0 %v406
      %433 = vmatprep.subr.bf16.mxu0 0
      %434 = vmatpush2.bf16.msra.mxu0 0
      %435 = vmatprep.subr.bf16.mxu0 0
      %436 = vmatpush2.bf16.msra.mxu0 0
      %437 = vmatprep.subr.bf16.mxu0 0
      %438 = vmatpush2.bf16.msra.mxu0 0
      %439 = vmatprep.subr.bf16.mxu0 0
      %440 = vmatpush2.bf16.msra.mxu0 0
      %441 = vmatprep.subr.bf16.mxu0 0
      %442 = vmatpush2.bf16.msra.mxu0 0
      %443 = vmatprep.subr.bf16.mxu0 0
      %444 = vmatpush2.bf16.msra.mxu0 0
      %445 = vmatprep.subr.bf16.mxu0 0
      %446 = vmatpush2.bf16.msra.mxu0 0
      %447 = vmatprep.subr.bf16.mxu0 0
      %448 = vmatpush2.bf16.msra.mxu0 0
      %449 = vmatprep.mubr.bf16.mxu0 0
      %450 = vmatmul.mubr.bf16.gmra.mxu0 %v415
      %v451 = vpop.f32.mrf.mxu0
      %v452 = vadd.f32 0.0, %v451
      %v453 = vpop.f32.mrf.mxu0
      %v454 = vpop.f32.mrf.mxu0
      %v455 = vadd.f32 0.0, %v454
      %v456 = vpop.f32.mrf.mxu0
      %457 = vdwg.mxu0
      %v458 = vadd.f32 %v339, %v452
      %v459 = vadd.f32 %v340, %v455
      %s460 = scalar_lea.vmem %s240, 16
      %v461 = vld [vmem:[%s460] sm:$0xf]
      %v462 = vld [vmem:[%s460 + $0x4] sm:$0xf]
      %v465 = vunpack.c.l.b16 %v461
      %v466 = vunpack.c.l.b16 %v462
      %v467 = vpack.c.b16 %v466, %v465
      %468 = vrot.lane.b32.xlu0 %v381, 126
      %v469 = vpop.permute.xlu0 %468
      %470 = vrot.lane.b32.xlu0 %v382, 126
      %v471 = vpop.permute.xlu0 %470
      %472 = vrot.lane.b32.xlu0 %v383, 126
      %v473 = vpop.permute.xlu0 %472
      %474 = vrot.lane.b32.xlu0 %v384, 126
      %v475 = vpop.permute.xlu0 %474
      %476 = vrot.lane.b32.xlu0 %v385, 126
      %v477 = vpop.permute.xlu0 %476
      %478 = vrot.lane.b32.xlu0 %v386, 126
      %v479 = vpop.permute.xlu0 %478
      %480 = vrot.lane.b32.xlu0 %v387, 126
      %v481 = vpop.permute.xlu0 %480
      %482 = vrot.lane.b32.xlu0 %v388, 126
      %v483 = vpop.permute.xlu0 %482
      %vm484 = vcmask 1031168
      %v485 = vsel %vm484, %v469, %v471
      %v486 = vsel %vm484, %v473, %v475
      %v487 = vsel %vm484, %v477, %v479
      %v488 = vsel %vm484, %v481, %v483
      %v494 = vsel %vm294, %v467, 0
      %496 = vmatprep.subr.bf16.mxu0 0
      %497 = vmatpush1.bf16.msra.mxu0 0
      %498 = vmatprep.subr.bf16.mxu0 0
      %499 = vmatpush1.bf16.msra.mxu0 0
      %500 = vmatprep.subr.bf16.mxu0 0
      %501 = vmatpush1.bf16.msra.mxu0 0
      %502 = vmatprep.subr.bf16.mxu0 0
      %503 = vmatpush1.bf16.msra.mxu0 0
      %504 = vmatprep.subr.bf16.mxu0 0
      %505 = vmatpush1.bf16.msra.mxu0 %v488
      %506 = vmatprep.subr.bf16.mxu0 0
      %507 = vmatpush1.bf16.msra.mxu0 %v487
      %508 = vmatprep.subr.bf16.mxu0 0
      %509 = vmatpush1.bf16.msra.mxu0 %v486
      %510 = vmatprep.subr.bf16.mxu0 0
      %511 = vmatpush1.bf16.msra.mxu0 %v485
      %512 = vmatprep.subr.bf16.mxu0 0
      %513 = vmatpush2.bf16.msra.mxu0 0
      %514 = vmatprep.subr.bf16.mxu0 0
      %515 = vmatpush2.bf16.msra.mxu0 0
      %516 = vmatprep.subr.bf16.mxu0 0
      %517 = vmatpush2.bf16.msra.mxu0 0
      %518 = vmatprep.subr.bf16.mxu0 0
      %519 = vmatpush2.bf16.msra.mxu0 0
      %520 = vmatprep.subr.bf16.mxu0 0
      %521 = vmatpush2.bf16.msra.mxu0 0
      %522 = vmatprep.subr.bf16.mxu0 0
      %523 = vmatpush2.bf16.msra.mxu0 0
      %524 = vmatprep.subr.bf16.mxu0 0
      %525 = vmatpush2.bf16.msra.mxu0 0
      %526 = vmatprep.subr.bf16.mxu0 0
      %527 = vmatpush2.bf16.msra.mxu0 0
      %528 = vmatprep.mubr.bf16.mxu0 0
      %529 = vmatmul.mubr.bf16.gmra.mxu0 %v494
      %v530 = vpop.f32.mrf.mxu0
      %v531 = vadd.f32 0.0, %v530
      %v532 = vpop.f32.mrf.mxu0
      %v533 = vpop.f32.mrf.mxu0
      %v534 = vadd.f32 0.0, %v533
      %v535 = vpop.f32.mrf.mxu0
      %536 = vdwg.mxu0
      %v537 = vadd.f32 %v458, %v531
      %v538 = vadd.f32 %v459, %v534
      %s539 = scalar_lea.vmem %s240, 24
      %v540 = vld [vmem:[%s539] sm:$0xf]
      %v541 = vld [vmem:[%s539 + $0x4] sm:$0xf]
      %v544 = vunpack.c.l.b16 %v540
      %v545 = vunpack.c.l.b16 %v541
      %v546 = vpack.c.b16 %v545, %v544
      %547 = vrot.lane.b32.xlu0 %v381, 121
      %v548 = vpop.permute.xlu0 %547
      %549 = vrot.lane.b32.xlu0 %v382, 121
      %v550 = vpop.permute.xlu0 %549
      %551 = vrot.lane.b32.xlu0 %v383, 121
      %v552 = vpop.permute.xlu0 %551
      %553 = vrot.lane.b32.xlu0 %v384, 121
      %v554 = vpop.permute.xlu0 %553
      %555 = vrot.lane.b32.xlu0 %v385, 121
      %v556 = vpop.permute.xlu0 %555
      %557 = vrot.lane.b32.xlu0 %v386, 121
      %v558 = vpop.permute.xlu0 %557
      %559 = vrot.lane.b32.xlu0 %v387, 121
      %v560 = vpop.permute.xlu0 %559
      %561 = vrot.lane.b32.xlu0 %v388, 121
      %v562 = vpop.permute.xlu0 %561
      %vm563 = vcmask 990208
      %v564 = vsel %vm563, %v548, %v550
      %v565 = vsel %vm563, %v552, %v554
      %v566 = vsel %vm563, %v556, %v558
      %v567 = vsel %vm563, %v560, %v562
      %v573 = vsel %vm294, %v546, 0
      %575 = vmatprep.subr.bf16.mxu0 0
      %576 = vmatpush1.bf16.msra.mxu0 0
      %577 = vmatprep.subr.bf16.mxu0 0
      %578 = vmatpush1.bf16.msra.mxu0 0
      %579 = vmatprep.subr.bf16.mxu0 0
      %580 = vmatpush1.bf16.msra.mxu0 0
      %581 = vmatprep.subr.bf16.mxu0 0
      %582 = vmatpush1.bf16.msra.mxu0 0
      %583 = vmatprep.subr.bf16.mxu0 0
      %584 = vmatpush1.bf16.msra.mxu0 %v567
      %585 = vmatprep.subr.bf16.mxu0 0
      %586 = vmatpush1.bf16.msra.mxu0 %v566
      %587 = vmatprep.subr.bf16.mxu0 0
      %588 = vmatpush1.bf16.msra.mxu0 %v565
      %589 = vmatprep.subr.bf16.mxu0 0
      %590 = vmatpush1.bf16.msra.mxu0 %v564
      %591 = vmatprep.subr.bf16.mxu0 0
      %592 = vmatpush2.bf16.msra.mxu0 0
      %593 = vmatprep.subr.bf16.mxu0 0
      %594 = vmatpush2.bf16.msra.mxu0 0
      %595 = vmatprep.subr.bf16.mxu0 0
      %596 = vmatpush2.bf16.msra.mxu0 0
      %597 = vmatprep.subr.bf16.mxu0 0
      %598 = vmatpush2.bf16.msra.mxu0 0
      %599 = vmatprep.subr.bf16.mxu0 0
      %600 = vmatpush2.bf16.msra.mxu0 0
      %601 = vmatprep.subr.bf16.mxu0 0
      %602 = vmatpush2.bf16.msra.mxu0 0
      %603 = vmatprep.subr.bf16.mxu0 0
      %604 = vmatpush2.bf16.msra.mxu0 0
      %605 = vmatprep.subr.bf16.mxu0 0
      %606 = vmatpush2.bf16.msra.mxu0 0
      %607 = vmatprep.mubr.bf16.mxu0 0
      %608 = vmatmul.mubr.bf16.gmra.mxu0 %v573
      %v609 = vpop.f32.mrf.mxu0
      %v610 = vadd.f32 0.0, %v609
      %v611 = vpop.f32.mrf.mxu0
      %v612 = vpop.f32.mrf.mxu0
      %v613 = vadd.f32 0.0, %v612
      %v614 = vpop.f32.mrf.mxu0
      %615 = vdwg.mxu0
      %v616 = vadd.f32 %v537, %v610
      %v617 = vadd.f32 %v538, %v613
      %s618 = scalar_lea.vmem %s240, 32
      %v619 = vld [vmem:[%s618] sm:$0xf]
      %v620 = vld [vmem:[%s618 + $0x4] sm:$0xf]
      %v623 = vunpack.c.l.b16 %v619
      %v624 = vunpack.c.l.b16 %v620
      %v625 = vpack.c.b16 %v624, %v623
      %626 = vrot.lane.b32.xlu0 %v381, 120
      %v627 = vpop.permute.xlu0 %626
      %628 = vrot.lane.b32.xlu0 %v382, 120
      %v629 = vpop.permute.xlu0 %628
      %630 = vrot.lane.b32.xlu0 %v383, 120
      %v631 = vpop.permute.xlu0 %630
      %632 = vrot.lane.b32.xlu0 %v384, 120
      %v633 = vpop.permute.xlu0 %632
      %634 = vrot.lane.b32.xlu0 %v385, 120
      %v635 = vpop.permute.xlu0 %634
      %636 = vrot.lane.b32.xlu0 %v386, 120
      %v637 = vpop.permute.xlu0 %636
      %638 = vrot.lane.b32.xlu0 %v387, 120
      %v639 = vpop.permute.xlu0 %638
      %640 = vrot.lane.b32.xlu0 %v388, 120
      %v641 = vpop.permute.xlu0 %640
      %vm642 = vcmask 982016
      %v643 = vsel %vm642, %v627, %v629
      %v644 = vsel %vm642, %v631, %v633
      %v645 = vsel %vm642, %v635, %v637
      %v646 = vsel %vm642, %v639, %v641
      %v652 = vsel %vm294, %v625, 0
      %654 = vmatprep.subr.bf16.mxu0 0
      %655 = vmatpush1.bf16.msra.mxu0 0
      %656 = vmatprep.subr.bf16.mxu0 0
      %657 = vmatpush1.bf16.msra.mxu0 0
      %658 = vmatprep.subr.bf16.mxu0 0
      %659 = vmatpush1.bf16.msra.mxu0 0
      %660 = vmatprep.subr.bf16.mxu0 0
      %661 = vmatpush1.bf16.msra.mxu0 0
      %662 = vmatprep.subr.bf16.mxu0 0
      %663 = vmatpush1.bf16.msra.mxu0 %v646
      %664 = vmatprep.subr.bf16.mxu0 0
      %665 = vmatpush1.bf16.msra.mxu0 %v645
      %666 = vmatprep.subr.bf16.mxu0 0
      %667 = vmatpush1.bf16.msra.mxu0 %v644
      %668 = vmatprep.subr.bf16.mxu0 0
      %669 = vmatpush1.bf16.msra.mxu0 %v643
      %670 = vmatprep.subr.bf16.mxu0 0
      %671 = vmatpush2.bf16.msra.mxu0 0
      %672 = vmatprep.subr.bf16.mxu0 0
      %673 = vmatpush2.bf16.msra.mxu0 0
      %674 = vmatprep.subr.bf16.mxu0 0
      %675 = vmatpush2.bf16.msra.mxu0 0
      %676 = vmatprep.subr.bf16.mxu0 0
      %677 = vmatpush2.bf16.msra.mxu0 0
      %678 = vmatprep.subr.bf16.mxu0 0
      %679 = vmatpush2.bf16.msra.mxu0 0
      %680 = vmatprep.subr.bf16.mxu0 0
      %681 = vmatpush2.bf16.msra.mxu0 0
      %682 = vmatprep.subr.bf16.mxu0 0
      %683 = vmatpush2.bf16.msra.mxu0 0
      %684 = vmatprep.subr.bf16.mxu0 0
      %685 = vmatpush2.bf16.msra.mxu0 0
      %686 = vmatprep.mubr.bf16.mxu0 0
      %687 = vmatmul.mubr.bf16.gmra.mxu0 %v652
      %v688 = vpop.f32.mrf.mxu0
      %v689 = vadd.f32 0.0, %v688
      %v690 = vpop.f32.mrf.mxu0
      %v691 = vpop.f32.mrf.mxu0
      %v692 = vadd.f32 0.0, %v691
      %v693 = vpop.f32.mrf.mxu0
      %694 = vdwg.mxu0
      %v695 = vadd.f32 %v616, %v689
      %v696 = vadd.f32 %v617, %v692
      %s697 = scalar_lea.vmem %s240, 40
      %v698 = vld [vmem:[%s697] sm:$0xf]
      %v699 = vld [vmem:[%s697 + $0x4] sm:$0xf]
      %v702 = vunpack.c.l.b16 %v698
      %v703 = vunpack.c.l.b16 %v699
      %v704 = vpack.c.b16 %v703, %v702
      %705 = vrot.lane.b32.xlu0 %v381, 119
      %v706 = vpop.permute.xlu0 %705
      %707 = vrot.lane.b32.xlu0 %v382, 119
      %v708 = vpop.permute.xlu0 %707
      %709 = vrot.lane.b32.xlu0 %v383, 119
      %v710 = vpop.permute.xlu0 %709
      %711 = vrot.lane.b32.xlu0 %v384, 119
      %v712 = vpop.permute.xlu0 %711
      %713 = vrot.lane.b32.xlu0 %v385, 119
      %v714 = vpop.permute.xlu0 %713
      %715 = vrot.lane.b32.xlu0 %v386, 119
      %v716 = vpop.permute.xlu0 %715
      %717 = vrot.lane.b32.xlu0 %v387, 119
      %v718 = vpop.permute.xlu0 %717
      %719 = vrot.lane.b32.xlu0 %v388, 119
      %v720 = vpop.permute.xlu0 %719
      %vm721 = vcmask 973824
      %v722 = vsel %vm721, %v706, %v708
      %v723 = vsel %vm721, %v710, %v712
      %v724 = vsel %vm721, %v714, %v716
      %v725 = vsel %vm721, %v718, %v720
      %v731 = vsel %vm294, %v704, 0
      %733 = vmatprep.subr.bf16.mxu0 0
      %734 = vmatpush1.bf16.msra.mxu0 0
      %735 = vmatprep.subr.bf16.mxu0 0
      %736 = vmatpush1.bf16.msra.mxu0 0
      %737 = vmatprep.subr.bf16.mxu0 0
      %738 = vmatpush1.bf16.msra.mxu0 0
      %739 = vmatprep.subr.bf16.mxu0 0
      %740 = vmatpush1.bf16.msra.mxu0 0
      %741 = vmatprep.subr.bf16.mxu0 0
      %742 = vmatpush1.bf16.msra.mxu0 %v725
      %743 = vmatprep.subr.bf16.mxu0 0
      %744 = vmatpush1.bf16.msra.mxu0 %v724
      %745 = vmatprep.subr.bf16.mxu0 0
      %746 = vmatpush1.bf16.msra.mxu0 %v723
      %747 = vmatprep.subr.bf16.mxu0 0
      %748 = vmatpush1.bf16.msra.mxu0 %v722
      %749 = vmatprep.subr.bf16.mxu0 0
      %750 = vmatpush2.bf16.msra.mxu0 0
      %751 = vmatprep.subr.bf16.mxu0 0
      %752 = vmatpush2.bf16.msra.mxu0 0
      %753 = vmatprep.subr.bf16.mxu0 0
      %754 = vmatpush2.bf16.msra.mxu0 0
      %755 = vmatprep.subr.bf16.mxu0 0
      %756 = vmatpush2.bf16.msra.mxu0 0
      %757 = vmatprep.subr.bf16.mxu0 0
      %758 = vmatpush2.bf16.msra.mxu0 0
      %759 = vmatprep.subr.bf16.mxu0 0
      %760 = vmatpush2.bf16.msra.mxu0 0
      %761 = vmatprep.subr.bf16.mxu0 0
      %762 = vmatpush2.bf16.msra.mxu0 0
      %763 = vmatprep.subr.bf16.mxu0 0
      %764 = vmatpush2.bf16.msra.mxu0 0
      %765 = vmatprep.mubr.bf16.mxu0 0
      %766 = vmatmul.mubr.bf16.gmra.mxu0 %v731
      %v767 = vpop.f32.mrf.mxu0
      %v768 = vadd.f32 0.0, %v767
      %v769 = vpop.f32.mrf.mxu0
      %v770 = vpop.f32.mrf.mxu0
      %v771 = vadd.f32 0.0, %v770
      %v772 = vpop.f32.mrf.mxu0
      %773 = vdwg.mxu0
      %v774 = vadd.f32 %v695, %v768
      %v775 = vadd.f32 %v696, %v771
      %s776 = scalar_lea.vmem %s240, 48
      %v777 = vld [vmem:[%s776] sm:$0xf]
      %v778 = vld [vmem:[%s776 + $0x4] sm:$0xf]
      %v781 = vunpack.c.l.b16 %v777
      %v782 = vunpack.c.l.b16 %v778
      %v783 = vpack.c.b16 %v782, %v781
      %784 = vrot.lane.b32.xlu0 %v381, 114
      %v785 = vpop.permute.xlu0 %784
      %786 = vrot.lane.b32.xlu0 %v382, 114
      %v787 = vpop.permute.xlu0 %786
      %788 = vrot.lane.b32.xlu0 %v383, 114
      %v789 = vpop.permute.xlu0 %788
      %790 = vrot.lane.b32.xlu0 %v384, 114
      %v791 = vpop.permute.xlu0 %790
      %792 = vrot.lane.b32.xlu0 %v385, 114
      %v793 = vpop.permute.xlu0 %792
      %794 = vrot.lane.b32.xlu0 %v386, 114
      %v795 = vpop.permute.xlu0 %794
      %796 = vrot.lane.b32.xlu0 %v387, 114
      %v797 = vpop.permute.xlu0 %796
      %798 = vrot.lane.b32.xlu0 %v388, 114
      %v799 = vpop.permute.xlu0 %798
      %vm800 = vcmask 932864
      %v801 = vsel %vm800, %v785, %v787
      %v802 = vsel %vm800, %v789, %v791
      %v803 = vsel %vm800, %v793, %v795
      %v804 = vsel %vm800, %v797, %v799
      %v810 = vsel %vm294, %v783, 0
      %812 = vmatprep.subr.bf16.mxu0 0
      %813 = vmatpush1.bf16.msra.mxu0 0
      %814 = vmatprep.subr.bf16.mxu0 0
      %815 = vmatpush1.bf16.msra.mxu0 0
      %816 = vmatprep.subr.bf16.mxu0 0
      %817 = vmatpush1.bf16.msra.mxu0 0
      %818 = vmatprep.subr.bf16.mxu0 0
      %819 = vmatpush1.bf16.msra.mxu0 0
      %820 = vmatprep.subr.bf16.mxu0 0
      %821 = vmatpush1.bf16.msra.mxu0 %v804
      %822 = vmatprep.subr.bf16.mxu0 0
      %823 = vmatpush1.bf16.msra.mxu0 %v803
      %824 = vmatprep.subr.bf16.mxu0 0
      %825 = vmatpush1.bf16.msra.mxu0 %v802
      %826 = vmatprep.subr.bf16.mxu0 0
      %827 = vmatpush1.bf16.msra.mxu0 %v801
      %828 = vmatprep.subr.bf16.mxu0 0
      %829 = vmatpush2.bf16.msra.mxu0 0
      %830 = vmatprep.subr.bf16.mxu0 0
      %831 = vmatpush2.bf16.msra.mxu0 0
      %832 = vmatprep.subr.bf16.mxu0 0
      %833 = vmatpush2.bf16.msra.mxu0 0
      %834 = vmatprep.subr.bf16.mxu0 0
      %835 = vmatpush2.bf16.msra.mxu0 0
      %836 = vmatprep.subr.bf16.mxu0 0
      %837 = vmatpush2.bf16.msra.mxu0 0
      %838 = vmatprep.subr.bf16.mxu0 0
      %839 = vmatpush2.bf16.msra.mxu0 0
      %840 = vmatprep.subr.bf16.mxu0 0
      %841 = vmatpush2.bf16.msra.mxu0 0
      %842 = vmatprep.subr.bf16.mxu0 0
      %843 = vmatpush2.bf16.msra.mxu0 0
      %844 = vmatprep.mubr.bf16.mxu0 0
      %845 = vmatmul.mubr.bf16.gmra.mxu0 %v810
      %v846 = vpop.f32.mrf.mxu0
      %v847 = vadd.f32 0.0, %v846
      %v848 = vpop.f32.mrf.mxu0
      %v849 = vpop.f32.mrf.mxu0
      %v850 = vadd.f32 0.0, %v849
      %v851 = vpop.f32.mrf.mxu0
      %852 = vdwg.mxu0
      %v853 = vadd.f32 %v774, %v847
      %v854 = vadd.f32 %v775, %v850
      %s855 = scalar_lea.vmem %s240, 56
      %v856 = vld [vmem:[%s855] sm:$0xf]
      %v857 = vld [vmem:[%s855 + $0x4] sm:$0xf]
      %v860 = vunpack.c.l.b16 %v856
      %v861 = vunpack.c.l.b16 %v857
      %v862 = vpack.c.b16 %v861, %v860
      %863 = vrot.lane.b32.xlu0 %v381, 113
      %v864 = vpop.permute.xlu0 %863
      %865 = vrot.lane.b32.xlu0 %v382, 113
      %v866 = vpop.permute.xlu0 %865
      %867 = vrot.lane.b32.xlu0 %v383, 113
      %v868 = vpop.permute.xlu0 %867
      %869 = vrot.lane.b32.xlu0 %v384, 113
      %v870 = vpop.permute.xlu0 %869
      %871 = vrot.lane.b32.xlu0 %v385, 113
      %v872 = vpop.permute.xlu0 %871
      %873 = vrot.lane.b32.xlu0 %v386, 113
      %v874 = vpop.permute.xlu0 %873
      %875 = vrot.lane.b32.xlu0 %v387, 113
      %v876 = vpop.permute.xlu0 %875
      %877 = vrot.lane.b32.xlu0 %v388, 113
      %v878 = vpop.permute.xlu0 %877
      %vm879 = vcmask 924672
      %v880 = vsel %vm879, %v864, %v866
      %v881 = vsel %vm879, %v868, %v870
      %v882 = vsel %vm879, %v872, %v874
      %v883 = vsel %vm879, %v876, %v878
      %v889 = vsel %vm294, %v862, 0
      %891 = vmatprep.subr.bf16.mxu0 0
      %892 = vmatpush1.bf16.msra.mxu0 0
      %893 = vmatprep.subr.bf16.mxu0 0
      %894 = vmatpush1.bf16.msra.mxu0 0
      %895 = vmatprep.subr.bf16.mxu0 0
      %896 = vmatpush1.bf16.msra.mxu0 0
      %897 = vmatprep.subr.bf16.mxu0 0
      %898 = vmatpush1.bf16.msra.mxu0 0
      %899 = vmatprep.subr.bf16.mxu0 0
      %900 = vmatpush1.bf16.msra.mxu0 %v883
      %901 = vmatprep.subr.bf16.mxu0 0
      %902 = vmatpush1.bf16.msra.mxu0 %v882
      %903 = vmatprep.subr.bf16.mxu0 0
      %904 = vmatpush1.bf16.msra.mxu0 %v881
      %905 = vmatprep.subr.bf16.mxu0 0
      %906 = vmatpush1.bf16.msra.mxu0 %v880
      %907 = vmatprep.subr.bf16.mxu0 0
      %908 = vmatpush2.bf16.msra.mxu0 0
      %909 = vmatprep.subr.bf16.mxu0 0
      %910 = vmatpush2.bf16.msra.mxu0 0
      %911 = vmatprep.subr.bf16.mxu0 0
      %912 = vmatpush2.bf16.msra.mxu0 0
      %913 = vmatprep.subr.bf16.mxu0 0
      %914 = vmatpush2.bf16.msra.mxu0 0
      %915 = vmatprep.subr.bf16.mxu0 0
      %916 = vmatpush2.bf16.msra.mxu0 0
      %917 = vmatprep.subr.bf16.mxu0 0
      %918 = vmatpush2.bf16.msra.mxu0 0
      %919 = vmatprep.subr.bf16.mxu0 0
      %920 = vmatpush2.bf16.msra.mxu0 0
      %921 = vmatprep.subr.bf16.mxu0 0
      %922 = vmatpush2.bf16.msra.mxu0 0
      %923 = vmatprep.mubr.bf16.mxu0 0
      %924 = vmatmul.mubr.bf16.gmra.mxu0 %v889
      %v925 = vpop.f32.mrf.mxu0
      %v926 = vadd.f32 0.0, %v925
      %v927 = vpop.f32.mrf.mxu0
      %v928 = vpop.f32.mrf.mxu0
      %v929 = vadd.f32 0.0, %v928
      %v930 = vpop.f32.mrf.mxu0
      %931 = vdwg.mxu0
      %v932 = vadd.f32 %v853, %v926
      %v933 = vadd.f32 %v854, %v929
      %s934 = scalar_lea.vmem %s240, 64
      %v935 = vld [vmem:[%s934] sm:$0xf]
      %v936 = vld [vmem:[%s934 + $0x4] sm:$0xf]
      %v939 = vunpack.c.l.b16 %v935
      %v940 = vunpack.c.l.b16 %v936
      %v941 = vpack.c.b16 %v940, %v939
      %942 = vrot.lane.b32.xlu0 %v381, 112
      %v943 = vpop.permute.xlu0 %942
      %944 = vrot.lane.b32.xlu0 %v382, 112
      %v945 = vpop.permute.xlu0 %944
      %946 = vrot.lane.b32.xlu0 %v383, 112
      %v947 = vpop.permute.xlu0 %946
      %948 = vrot.lane.b32.xlu0 %v384, 112
      %v949 = vpop.permute.xlu0 %948
      %950 = vrot.lane.b32.xlu0 %v385, 112
      %v951 = vpop.permute.xlu0 %950
      %952 = vrot.lane.b32.xlu0 %v386, 112
      %v953 = vpop.permute.xlu0 %952
      %954 = vrot.lane.b32.xlu0 %v387, 112
      %v955 = vpop.permute.xlu0 %954
      %956 = vrot.lane.b32.xlu0 %v388, 112
      %v957 = vpop.permute.xlu0 %956
      %vm958 = vcmask 916480
      %v959 = vsel %vm958, %v943, %v945
      %v960 = vsel %vm958, %v947, %v949
      %v961 = vsel %vm958, %v951, %v953
      %v962 = vsel %vm958, %v955, %v957
      %v968 = vsel %vm294, %v941, 0
      %970 = vmatprep.subr.bf16.mxu0 0
      %971 = vmatpush1.bf16.msra.mxu0 0
      %972 = vmatprep.subr.bf16.mxu0 0
      %973 = vmatpush1.bf16.msra.mxu0 0
      %974 = vmatprep.subr.bf16.mxu0 0
      %975 = vmatpush1.bf16.msra.mxu0 0
      %976 = vmatprep.subr.bf16.mxu0 0
      %977 = vmatpush1.bf16.msra.mxu0 0
      %978 = vmatprep.subr.bf16.mxu0 0
      %979 = vmatpush1.bf16.msra.mxu0 %v962
      %980 = vmatprep.subr.bf16.mxu0 0
      %981 = vmatpush1.bf16.msra.mxu0 %v961
      %982 = vmatprep.subr.bf16.mxu0 0
      %983 = vmatpush1.bf16.msra.mxu0 %v960
      %984 = vmatprep.subr.bf16.mxu0 0
      %985 = vmatpush1.bf16.msra.mxu0 %v959
      %986 = vmatprep.subr.bf16.mxu0 0
      %987 = vmatpush2.bf16.msra.mxu0 0
      %988 = vmatprep.subr.bf16.mxu0 0
      %989 = vmatpush2.bf16.msra.mxu0 0
      %990 = vmatprep.subr.bf16.mxu0 0
      %991 = vmatpush2.bf16.msra.mxu0 0
      %992 = vmatprep.subr.bf16.mxu0 0
      %993 = vmatpush2.bf16.msra.mxu0 0
      %994 = vmatprep.subr.bf16.mxu0 0
      %995 = vmatpush2.bf16.msra.mxu0 0
      %996 = vmatprep.subr.bf16.mxu0 0
      %997 = vmatpush2.bf16.msra.mxu0 0
      %998 = vmatprep.subr.bf16.mxu0 0
      %999 = vmatpush2.bf16.msra.mxu0 0
      %1000 = vmatprep.subr.bf16.mxu0 0
      %1001 = vmatpush2.bf16.msra.mxu0 0
      %1002 = vmatprep.mubr.bf16.mxu0 0
      %1003 = vmatmul.mubr.bf16.gmra.mxu0 %v968
      %v1004 = vpop.f32.mrf.mxu0
      %v1005 = vadd.f32 0.0, %v1004
      %v1006 = vpop.f32.mrf.mxu0
      %v1007 = vpop.f32.mrf.mxu0
      %v1008 = vadd.f32 0.0, %v1007
      %v1009 = vpop.f32.mrf.mxu0
      %1010 = vdwg.mxu0
      %v1011 = vadd.f32 %v932, %v1005
      %v1012 = vadd.f32 %v933, %v1008
      %1013 = vst [vmem:[#allocation2] sm:$0xff] %v1011
      %1014 = vst [vmem:[#allocation2 + $0x8] sm:$0xff] %v1012
      // Predicated region
      $region41: #{danet_head.9} parent=35 // pred_check
        %p1015 = pneg %p247
      $region42: #{danet_head.9} parent=35 // pred_check_branch
        %1017 = sbr.rel (%p1015) target = $region44
      $region43: #{danet_head.9} parent=35 // pred_region
        %v1018 = vld [vmem:[#allocation2] sm:$0xff]
        %v1019 = vld [vmem:[#allocation2 + $0x8] sm:$0xff]
        %v1020 = vld [vmem:[%s2] sm:$0xff]
        %v1021 = vld [vmem:[%s2 + $0x8] sm:$0xff]
        %1023 = vset.pattern.permute.xlu0 0
        %1024 = vperm.xlu0 %1023, %v1020
        %v1025 = vpop.permute.xlu0 %1024
        %1028 = vset.pattern.permute.xlu0 0
        %1029 = vperm.xlu0 %1028, %v1021
        %v1030 = vpop.permute.xlu0 %1029
        %v1032 = vadd.f32 %v1018, %v1025
        %v1033 = vadd.f32 %v1019, %v1030
        %v1034 = vmax.f32 %v1032, 0.0
        %v1035 = vmax.f32 %v1033, 0.0
        %v1036 = vld [vmem:[%s3] sm:$0x1]
        %v1038 = vlaneseq
        %v1039 = vshrl.u32 %v1038, 7
        %v1040 = vsub.s32 0, %v1039
        %v1041 = vrot.slane %v1036, %v1040
        %v1043 = vmul.f32 %v1034, %v1041
        %v1044 = vmul.f32 %v1035, %v1041
        %v1045 = vpack.c.bf16 %v1044, %v1043
        %v1047 = vunpack.c.l.b16 %v1045
        %v1048 = vunpack.c.h.b16 %v1045
        %v1049 = vpack.c.b16 %v1047, %v1047
        %v1050 = vpack.c.b16 %v1048, %v1048
        %1053 = vst [vmem:[%s245] sm:$0xf] %v1049
        %1054 = vst [vmem:[%s245 + $0x4] sm:$0xf] %v1050
      $region44: #{danet_head.9} parent=35 // pred_fallthru
        _
      %p1055 = scmp.lt.s32.totalorder %s19, 1
      %s1056 = scalar_select %p1055, %s19, 1
      %s1057 = smul.addr %s1056, 2
      %s1058 = smul.addr %s1057, 4
      %s1059 = scalar_lea.vmem %s4, %s1058
      // Predicated region
      $region45: #{danet_head.9} parent=35 // pred_check
        %p1060 = pneg %p141
      $region46: #{danet_head.9} parent=35 // pred_check_branch
        %1062 = sbr.rel (%p1060) target = $region48
      $region47: #{danet_head.9} parent=35 // pred_region
        _
      $region48: #{danet_head.9} parent=35 // pred_fallthru
        _
    $region36: #{danet_head.9} parent=5 // pred_fallthru
      _
    %p1063 = scmp.le.s32.totalorder 2, %s10
    // Predicated region
    $region49: #{danet_head.9} parent=5 // pred_check
      %p1064 = pneg %p1063
    $region50: #{danet_head.9} parent=5 // pred_check_branch
      %1066 = sbr.rel (%p1064) target = $region52
    $region51: #{danet_head.9} parent=5 // pred_region
      %s1067 = ssub.s32 %s10, 2
      // Predicated region
      $region53: #{danet_head.9} parent=51 // pred_check
        %p1068 = pneg %p147
      $region54: #{danet_head.9} parent=51 // pred_check_branch
        %1070 = sbr.rel (%p1068) target = $region56
      $region55: #{danet_head.9} parent=51 // pred_region
        %p1071 = scmp.lt.s32.totalorder %s21, 1
        %s1072 = scalar_select %p1071, %s21, 1
        %s1073 = smul.addr %s1072, 2
        %s1074 = smul.addr %s1073, 4
        %s1075 = scalar_lea.vmem %s4, %s1074
      $region56: #{danet_head.9} parent=51 // pred_fallthru
        _
    $region52: #{danet_head.9} parent=5 // pred_fallthru
      _
  $region6: #{danet_head.9} parent=0 // loop_footer
    %s14 = sadd.s32 1, %s10
  $region7: #{danet_head.9} parent=0 // loop_footer_branch
    %9 = sbr.rel target = $region3
  $region8: #{danet_head.9} parent=0 // loop_exit
    _

// kernel: danet_head.12
$region0: #{danet_head.12}
  #allocation0 [shape = 'u32[]', space=smem, size = 0x4, offset = 0x4, fixed_abs, tag = 'smem constant byte address 0x4 - core index']
  #allocation1 [shape = 'u32[144,128]{1,0:T(1,128)}', space=vmem, size = 0x12000, scoped, tag = 'internal scratch']
  #allocation2 [shape = 'f32[16,128]{1,0:T(8,128)}', space=vmem, size = 0x2000, scoped, tag = 'scratch operand']
  %s0 = inlined_call_operand.vmem [shape: bf16[2,16,256], index: 0, kind: input, shape index: {}]
  %s1 = inlined_call_operand.vmem [shape: bf16[9,16,16], index: 1, kind: input, shape index: {}]
  %s2 = inlined_call_operand.vmem [shape: f32[16,1], index: 2, kind: input, shape index: {}]
  %s3 = inlined_call_operand.vmem [shape: f32[1,128], index: 3, kind: input, shape index: {}]
  %s4 = inlined_call_operand.vmem [shape: bf16[2,16,128], index: 4, kind: output, shape index: {}]
  %s5 = sld [smem:[#allocation0]]
  $region57: #{danet_head.12} parent=0
    _
  %s7 = ssub.s32 1, %s5
  %s8 = scalar_select 0, %s7, %s5
  loop: start=0, step=1, limit=4
  $region2: #{danet_head.12} parent=0 // loop_pre_header
    _
  $region3: #{danet_head.12} parent=0 // loop_header
    %s10 = sphi 0, %s14
    %p11 = scmp.ge.s32.totalorder %s10, 4
    %s17 = sphi 0, %s29
    %s18 = sphi 0, %s25
    %s19 = sphi 0, %s17
    %s20 = sphi 0, %s18
    %s21 = sphi 0, %s19
    %s22 = sphi 0, %s20
    %s34 = sphi 0, %s36
    %s37 = sphi 0, %s34
    %s38 = sphi 0, %s37
    %s54 = sphi 0, %s38
    %s60 = sphi 0, %s62
    %s63 = sphi 0, %s60
    %s64 = sphi 0, %s63
    %s80 = sphi 0, %s64
    %s84 = sphi 0, %s84
    %s86 = sphi 0, %s84
    %s87 = sphi 0, %s86
    %s101 = sphi 0, %s87
    %s105 = sphi 0, %s105
    %s107 = sphi 0, %s105
    %s108 = sphi 0, %s107
    %s122 = sphi 0, %s108
    %s128 = sphi 0, %s130
    %s131 = sphi 0, %s128
    %s132 = sphi 0, %s131
    %s148 = sphi 0, %s132
  $region4: #{danet_head.12} parent=0 // loop_header_branch
    %13 = sbr.rel (%p11) target = $region8
  $region5: #{danet_head.12} parent=0 // loop_body
    %s15 = ssub.s32 %s10, 1
    %s16 = ssub.s32 %s10, 2
    %s23 = sadd.s32 1, %s18
    %p24 = scmp.ge.s32.totalorder %s23, 1
    %s25 = scalar_select %p24, 0, %s23
    %s26 = sadd.s32 1, %s17
    %s27 = scalar_select %p24, %s26, %s17
    %p28 = scmp.ge.s32.totalorder %s27, 2
    %s29 = scalar_select %p28, 0, %s27
    %s30 = ssub.s32 %s17, %s29
    %s31 = ssub.s32 %s18, %s25
    %s32 = sor.u32 %s30, %s31
    %p33 = scmp.eq.s32.totalorder %s32, 0
    %s35 = sadd.s32 %s34, 1
    %s36 = scalar_select %p33, %s34, %s35
    %p39 = pneg %p33
    %p40 = scmp.eq.s32.totalorder %s10, 1
    %p41 = por %p39, %p40
    %p42 = scmp.ne.s32.totalorder %s34, %s37
    %p43 = scmp.eq.s32.totalorder %s10, 0
    %p44 = por %p42, %p43
    %p45 = scmp.ne.s32.totalorder %s34, %s37
    %p46 = scmp.eq.s32.totalorder %s15, 1
    %p47 = por %p45, %p46
    %p48 = scmp.ne.s32.totalorder %s37, %s38
    %p49 = scmp.eq.s32.totalorder %s15, 0
    %p50 = por %p48, %p49
    %p51 = scmp.ne.s32.totalorder %s37, %s38
    %p52 = scmp.eq.s32.totalorder %s16, 1
    %p53 = por %p51, %p52
    %p55 = scmp.ne.s32.totalorder %s38, %s54
    %p56 = scmp.eq.s32.totalorder %s16, 0
    %p57 = por %p55, %p56
    %s58 = ssub.s32 %s18, %s25
    %p59 = scmp.eq.s32.totalorder %s58, 0
    %s61 = sadd.s32 %s60, 1
    %s62 = scalar_select %p59, %s60, %s61
    %p65 = pneg %p59
    %p66 = scmp.eq.s32.totalorder %s10, 1
    %p67 = por %p65, %p66
    %p68 = scmp.ne.s32.totalorder %s60, %s63
    %p69 = scmp.eq.s32.totalorder %s10, 0
    %p70 = por %p68, %p69
    %p71 = scmp.ne.s32.totalorder %s60, %s63
    %p72 = scmp.eq.s32.totalorder %s15, 1
    %p73 = por %p71, %p72
    %p74 = scmp.ne.s32.totalorder %s63, %s64
    %p75 = scmp.eq.s32.totalorder %s15, 0
    %p76 = por %p74, %p75
    %p77 = scmp.ne.s32.totalorder %s63, %s64
    %p78 = scmp.eq.s32.totalorder %s16, 1
    %p79 = por %p77, %p78
    %p81 = scmp.ne.s32.totalorder %s64, %s80
    %p82 = scmp.eq.s32.totalorder %s16, 0
    %p83 = por %p81, %p82
    %s85 = sadd.s32 %s84, 1
    %p88 = scmp.eq.s32.totalorder %s10, 1
    %p89 = scmp.ne.s32.totalorder %s84, %s86
    %p90 = scmp.eq.s32.totalorder %s10, 0
    %p91 = por %p89, %p90
    %p92 = scmp.ne.s32.totalorder %s84, %s86
    %p93 = scmp.eq.s32.totalorder %s15, 1
    %p94 = por %p92, %p93
    %p95 = scmp.ne.s32.totalorder %s86, %s87
    %p96 = scmp.eq.s32.totalorder %s15, 0
    %p97 = por %p95, %p96
    %p98 = scmp.ne.s32.totalorder %s86, %s87
    %p99 = scmp.eq.s32.totalorder %s16, 1
    %p100 = por %p98, %p99
    %p102 = scmp.ne.s32.totalorder %s87, %s101
    %p103 = scmp.eq.s32.totalorder %s16, 0
    %p104 = por %p102, %p103
    %s106 = sadd.s32 %s105, 1
    %p109 = scmp.eq.s32.totalorder %s10, 1
    %p110 = scmp.ne.s32.totalorder %s105, %s107
    %p111 = scmp.eq.s32.totalorder %s10, 0
    %p112 = por %p110, %p111
    %p113 = scmp.ne.s32.totalorder %s105, %s107
    %p114 = scmp.eq.s32.totalorder %s15, 1
    %p115 = por %p113, %p114
    %p116 = scmp.ne.s32.totalorder %s107, %s108
    %p117 = scmp.eq.s32.totalorder %s15, 0
    %p118 = por %p116, %p117
    %p119 = scmp.ne.s32.totalorder %s107, %s108
    %p120 = scmp.eq.s32.totalorder %s16, 1
    %p121 = por %p119, %p120
    %p123 = scmp.ne.s32.totalorder %s108, %s122
    %p124 = scmp.eq.s32.totalorder %s16, 0
    %p125 = por %p123, %p124
    %s126 = ssub.s32 %s17, %s29
    %p127 = scmp.eq.s32.totalorder %s126, 0
    %s129 = sadd.s32 %s128, 1
    %s130 = scalar_select %p127, %s128, %s129
    %p133 = pneg %p127
    %p134 = scmp.eq.s32.totalorder %s10, 1
    %p135 = por %p133, %p134
    %p136 = scmp.ne.s32.totalorder %s128, %s131
    %p137 = scmp.eq.s32.totalorder %s10, 0
    %p138 = por %p136, %p137
    %p139 = scmp.ne.s32.totalorder %s128, %s131
    %p140 = scmp.eq.s32.totalorder %s15, 1
    %p141 = por %p139, %p140
    %p142 = scmp.ne.s32.totalorder %s131, %s132
    %p143 = scmp.eq.s32.totalorder %s15, 0
    %p144 = por %p142, %p143
    %p145 = scmp.ne.s32.totalorder %s131, %s132
    %p146 = scmp.eq.s32.totalorder %s16, 1
    %p147 = por %p145, %p146
    %p149 = scmp.ne.s32.totalorder %s132, %s148
    %p150 = scmp.eq.s32.totalorder %s16, 0
    %p151 = por %p149, %p150
    %p152 = scmp.le.s32.totalorder 1, %s10
    %p153 = scmp.lt.s32.totalorder %s10, 3
    %p154 = pnand %p152, %p153
    %p155 = pneg %p154
    // Predicated region
    $region9: #{danet_head.12} parent=5 // pred_check
      _
    $region10: #{danet_head.12} parent=5 // pred_check_branch
      %157 = sbr.rel (%p154) target = $region12
    $region11: #{danet_head.12} parent=5 // pred_region
      %s158 = ssub.s32 %s10, 1
      // Predicated region
      $region13: #{danet_head.12} parent=11 // pred_check
        %p159 = pneg %p76
      $region14: #{danet_head.12} parent=11 // pred_check_branch
        %161 = sbr.rel (%p159) target = $region16
      $region15: #{danet_head.12} parent=11 // pred_region
        %p162 = scmp.lt.s32.totalorder %s20, 0
        %s163 = scalar_select %p162, %s20, 0
        %s164 = smul.addr %s163, 4
        %s165 = scalar_lea.vmem %s1, %s164
      $region16: #{danet_head.12} parent=11 // pred_fallthru
        _
      // Predicated region
      $region17: #{danet_head.12} parent=11 // pred_check
        %p166 = pneg %p97
      $region18: #{danet_head.12} parent=11 // pred_check_branch
        %168 = sbr.rel (%p166) target = $region20
      $region19: #{danet_head.12} parent=11 // pred_region
        _
      $region20: #{danet_head.12} parent=11 // pred_fallthru
        _
      // Predicated region
      $region21: #{danet_head.12} parent=11 // pred_check
        %p169 = pneg %p118
      $region22: #{danet_head.12} parent=11 // pred_check_branch
        %171 = sbr.rel (%p169) target = $region24
      $region23: #{danet_head.12} parent=11 // pred_region
        _
      $region24: #{danet_head.12} parent=11 // pred_fallthru
        _
    $region12: #{danet_head.12} parent=5 // pred_fallthru
      _
    %p172 = scmp.lt.s32.totalorder %s10, 2
    // Predicated region
    $region25: #{danet_head.12} parent=5 // pred_check
      %p173 = pneg %p172
    $region26: #{danet_head.12} parent=5 // pred_check_branch
      %175 = sbr.rel (%p173) target = $region28
    $region27: #{danet_head.12} parent=5 // pred_region
      // Predicated region
      $region29: #{danet_head.12} parent=27 // pred_check
        %p176 = pneg %p44
      $region30: #{danet_head.12} parent=27 // pred_check_branch
        %178 = sbr.rel (%p176) target = $region32
      $region31: #{danet_head.12} parent=27 // pred_region
        %s179 = smul.u32 2, %s18
        %p180 = scmp.lt.s32.totalorder %s17, 1
        %s181 = scalar_select %p180, %s17, 1
        %p182 = scmp.lt.s32.totalorder %s179, 1
        %s183 = scalar_select %p182, %s179, 1
        %s184 = smul.addr %s183, 2
        %s185 = smul.addr %s181, 4
        %s186 = sadd.s32 %s184, %s185
        %s187 = smul.addr %s186, 4
        %s188 = scalar_lea.vmem %s0, %s187
        %s189 = smul.u32 2, %s18
      $region32: #{danet_head.12} parent=27 // pred_fallthru
        _
    $region28: #{danet_head.12} parent=5 // pred_fallthru
      _
    %p190 = scmp.le.s32.totalorder 1, %s10
    %p191 = scmp.lt.s32.totalorder %s10, 3
    %p192 = pnand %p190, %p191
    %p193 = pneg %p192
    // Predicated region
    $region33: #{danet_head.12} parent=5 // pred_check
      _
    $region34: #{danet_head.12} parent=5 // pred_check_branch
      %195 = sbr.rel (%p192) target = $region36
    $region35: #{danet_head.12} parent=5 // pred_region
      %s196 = ssub.s32 %s10, 1
      %s197 = smul.u32 2, %s20
      %p198 = scmp.lt.s32.totalorder %s19, 1
      %s199 = scalar_select %p198, %s19, 1
      %p200 = scmp.lt.s32.totalorder %s197, 1
      %s201 = scalar_select %p200, %s197, 1
      %s202 = smul.addr %s201, 2
      %s203 = smul.addr %s199, 4
      %s204 = sadd.s32 %s202, %s203
      %s205 = smul.addr %s204, 4
      %s206 = scalar_lea.vmem %s0, %s205
      %p207 = pneg %p50
      %p208 = pneg %p47
      %p209 = scmp.lt.s32.totalorder %s20, 0
      %s210 = scalar_select %p209, %s20, 0
      %s211 = smul.addr %s210, 4
      %s212 = scalar_lea.vmem %s1, %s211
      %p213 = pneg %p76
      %p214 = pneg %p73
      %p215 = pneg %p97
      %p216 = pneg %p94
      %p217 = pneg %p118
      %p218 = pneg %p115
      %p219 = pneg %p144
      %p220 = pneg %p141
      %p221 = scmp.lt.s32.totalorder %s19, 1
      %s222 = scalar_select %p221, %s19, 1
      %s223 = smul.addr %s222, 2
      %s224 = smul.addr %s223, 4
      %s225 = scalar_lea.vmem %s4, %s224
      %s226 = smul.u32 2, %s20
      %p227 = scmp.lt.s32.totalorder %s19, 1
      %s228 = scalar_select %p227, %s19, 1
      %p229 = scmp.lt.s32.totalorder %s226, 1
      %s230 = scalar_select %p229, %s226, 1
      %s231 = smul.addr %s230, 2
      %s232 = smul.addr %s228, 4
      %s233 = sadd.s32 %s231, %s232
      %s234 = smul.addr %s233, 4
      %s235 = scalar_lea.vmem %s0, %s234
      %s236 = smul.u32 2, %s20
      %p237 = scmp.lt.s32.totalorder %s20, 0
      %s238 = scalar_select %p237, %s20, 0
      %s239 = smul.addr %s238, 4
      %s240 = scalar_lea.vmem %s1, %s239
      %p241 = scmp.lt.s32.totalorder %s19, 1
      %s242 = scalar_select %p241, %s19, 1
      %s243 = smul.addr %s242, 2
      %s244 = smul.addr %s243, 4
      %s245 = scalar_lea.vmem %s4, %s244
      %p247 = scmp.eq.s32.totalorder %s20, 0
      // Predicated region
      $region37: #{danet_head.12} parent=35 // pred_check
        %p248 = pneg %p247
      $region38: #{danet_head.12} parent=35 // pred_check_branch
        %250 = sbr.rel (%p248) target = $region40
      $region39: #{danet_head.12} parent=35 // pred_region
        %251 = vst [vmem:[#allocation2] sm:$0xff] 0.0
        %252 = vst [vmem:[#allocation2 + $0x8] sm:$0xff] 0.0
      $region40: #{danet_head.12} parent=35 // pred_fallthru
        _
      %v253 = vld [vmem:[#allocation2] sm:$0xff]
      %v254 = vld [vmem:[#allocation2 + $0x8] sm:$0xff]
      %v255 = vld [vmem:[%s235] sm:$0xf]
      %v256 = vld [vmem:[%s235 + $0x8] sm:$0xf]
      %v257 = vld [vmem:[%s240] sm:$0xf]
      %v258 = vld [vmem:[%s240 + $0x4] sm:$0xf]
      %v261 = vunpack.c.l.b16 %v257
      %v262 = vunpack.c.l.b16 %v258
      %v263 = vpack.c.b16 %v262, %v261
      %v266 = vunpack.c.l.b16 %v255
      %v267 = vunpack.c.l.b16 %v256
      %v268 = vpack.c.b16 %v267, %v266
      %vm270 = vcmask 130048
      %v272 = vsel %vm270, %v263, 0
      %274 = vmatprep.subr.bf16.mxu0 0
      %275 = vmatpush1.bf16.msra.mxu0 0
      %276 = vmatprep.subr.bf16.mxu0 0
      %277 = vmatpush1.bf16.msra.mxu0 0
      %278 = vmatprep.subr.bf16.mxu0 0
      %279 = vmatpush1.bf16.msra.mxu0 0
      %280 = vmatprep.subr.bf16.mxu0 0
      %281 = vmatpush1.bf16.msra.mxu0 0
      %282 = vmatprep.subr.bf16.mxu0 0
      %283 = vmatpush1.bf16.msra.mxu0 0
      %284 = vmatprep.subr.bf16.mxu0 0
      %285 = vmatpush1.bf16.msra.mxu0 0
      %286 = vmatprep.subr.bf16.mxu0 0
      %287 = vmatpush1.bf16.msra.mxu0 0
      %288 = vmatprep.subr.bf16.mxu0 0
      %289 = vmatpush1.bf16.msra.mxu0 %v268
      %290 = vmatprep.subr.bf16.mxu0 0
      %291 = vmatpush2.bf16.msra.mxu0 0
      %292 = vmatprep.subr.bf16.mxu0 0
      %293 = vmatpush2.bf16.msra.mxu0 0
      %294 = vmatprep.subr.bf16.mxu0 0
      %295 = vmatpush2.bf16.msra.mxu0 0
      %296 = vmatprep.subr.bf16.mxu0 0
      %297 = vmatpush2.bf16.msra.mxu0 0
      %298 = vmatprep.subr.bf16.mxu0 0
      %299 = vmatpush2.bf16.msra.mxu0 0
      %300 = vmatprep.subr.bf16.mxu0 0
      %301 = vmatpush2.bf16.msra.mxu0 0
      %302 = vmatprep.subr.bf16.mxu0 0
      %303 = vmatpush2.bf16.msra.mxu0 0
      %304 = vmatprep.subr.bf16.mxu0 0
      %305 = vmatpush2.bf16.msra.mxu0 0
      %306 = vmatprep.mubr.bf16.mxu0 0
      %307 = vmatmul.mubr.bf16.gmra.mxu0 %v272
      %v308 = vpop.f32.mrf.mxu0
      %v309 = vadd.f32 0.0, %v308
      %v310 = vpop.f32.mrf.mxu0
      %v311 = vpop.f32.mrf.mxu0
      %v312 = vadd.f32 0.0, %v311
      %v313 = vpop.f32.mrf.mxu0
      %314 = vdwg.mxu0
      %v315 = vadd.f32 %v253, %v309
      %v316 = vadd.f32 %v254, %v312
      %v317 = vld [vmem:[%s235] sm:$0xff]
      %v318 = vld [vmem:[%s235 + $0x8] sm:$0xff]
      %s319 = scalar_lea.vmem %s240, 8
      %v320 = vld [vmem:[%s319] sm:$0xf]
      %v321 = vld [vmem:[%s319 + $0x4] sm:$0xf]
      %v324 = vunpack.c.l.b16 %v320
      %v325 = vunpack.c.l.b16 %v321
      %v326 = vpack.c.b16 %v325, %v324
      %v329 = vunpack.c.l.b16 %v317
      %v330 = vunpack.c.h.b16 %v317
      %v331 = vunpack.c.l.b16 %v318
      %v332 = vunpack.c.h.b16 %v318
      %v333 = vpack.c.b16 %v331, %v329
      %v334 = vpack.c.b16 %v332, %v330
      %335 = vrot.lane.b32.xlu0 %v333, 127
      %v336 = vpop.permute.xlu0 %335
      %337 = vrot.lane.b32.xlu0 %v334, 127
      %v338 = vpop.permute.xlu0 %337
      %vm339 = vcmask 1039360
      %v340 = vsel %vm339, %v336, %v338
      %v343 = vsel %vm270, %v326, 0
      %345 = vmatprep.subr.bf16.mxu0 0
      %346 = vmatpush1.bf16.msra.mxu0 0
      %347 = vmatprep.subr.bf16.mxu0 0
      %348 = vmatpush1.bf16.msra.mxu0 0
      %349 = vmatprep.subr.bf16.mxu0 0
      %350 = vmatpush1.bf16.msra.mxu0 0
      %351 = vmatprep.subr.bf16.mxu0 0
      %352 = vmatpush1.bf16.msra.mxu0 0
      %353 = vmatprep.subr.bf16.mxu0 0
      %354 = vmatpush1.bf16.msra.mxu0 0
      %355 = vmatprep.subr.bf16.mxu0 0
      %356 = vmatpush1.bf16.msra.mxu0 0
      %357 = vmatprep.subr.bf16.mxu0 0
      %358 = vmatpush1.bf16.msra.mxu0 0
      %359 = vmatprep.subr.bf16.mxu0 0
      %360 = vmatpush1.bf16.msra.mxu0 %v340
      %361 = vmatprep.subr.bf16.mxu0 0
      %362 = vmatpush2.bf16.msra.mxu0 0
      %363 = vmatprep.subr.bf16.mxu0 0
      %364 = vmatpush2.bf16.msra.mxu0 0
      %365 = vmatprep.subr.bf16.mxu0 0
      %366 = vmatpush2.bf16.msra.mxu0 0
      %367 = vmatprep.subr.bf16.mxu0 0
      %368 = vmatpush2.bf16.msra.mxu0 0
      %369 = vmatprep.subr.bf16.mxu0 0
      %370 = vmatpush2.bf16.msra.mxu0 0
      %371 = vmatprep.subr.bf16.mxu0 0
      %372 = vmatpush2.bf16.msra.mxu0 0
      %373 = vmatprep.subr.bf16.mxu0 0
      %374 = vmatpush2.bf16.msra.mxu0 0
      %375 = vmatprep.subr.bf16.mxu0 0
      %376 = vmatpush2.bf16.msra.mxu0 0
      %377 = vmatprep.mubr.bf16.mxu0 0
      %378 = vmatmul.mubr.bf16.gmra.mxu0 %v343
      %v379 = vpop.f32.mrf.mxu0
      %v380 = vadd.f32 0.0, %v379
      %v381 = vpop.f32.mrf.mxu0
      %v382 = vpop.f32.mrf.mxu0
      %v383 = vadd.f32 0.0, %v382
      %v384 = vpop.f32.mrf.mxu0
      %385 = vdwg.mxu0
      %v386 = vadd.f32 %v315, %v380
      %v387 = vadd.f32 %v316, %v383
      %s388 = scalar_lea.vmem %s240, 16
      %v389 = vld [vmem:[%s388] sm:$0xf]
      %v390 = vld [vmem:[%s388 + $0x4] sm:$0xf]
      %v393 = vunpack.c.l.b16 %v389
      %v394 = vunpack.c.l.b16 %v390
      %v395 = vpack.c.b16 %v394, %v393
      %396 = vrot.lane.b32.xlu0 %v333, 126
      %v397 = vpop.permute.xlu0 %396
      %398 = vrot.lane.b32.xlu0 %v334, 126
      %v399 = vpop.permute.xlu0 %398
      %vm400 = vcmask 1031168
      %v401 = vsel %vm400, %v397, %v399
      %v404 = vsel %vm270, %v395, 0
      %406 = vmatprep.subr.bf16.mxu0 0
      %407 = vmatpush1.bf16.msra.mxu0 0
      %408 = vmatprep.subr.bf16.mxu0 0
      %409 = vmatpush1.bf16.msra.mxu0 0
      %410 = vmatprep.subr.bf16.mxu0 0
      %411 = vmatpush1.bf16.msra.mxu0 0
      %412 = vmatprep.subr.bf16.mxu0 0
      %413 = vmatpush1.bf16.msra.mxu0 0
      %414 = vmatprep.subr.bf16.mxu0 0
      %415 = vmatpush1.bf16.msra.mxu0 0
      %416 = vmatprep.subr.bf16.mxu0 0
      %417 = vmatpush1.bf16.msra.mxu0 0
      %418 = vmatprep.subr.bf16.mxu0 0
      %419 = vmatpush1.bf16.msra.mxu0 0
      %420 = vmatprep.subr.bf16.mxu0 0
      %421 = vmatpush1.bf16.msra.mxu0 %v401
      %422 = vmatprep.subr.bf16.mxu0 0
      %423 = vmatpush2.bf16.msra.mxu0 0
      %424 = vmatprep.subr.bf16.mxu0 0
      %425 = vmatpush2.bf16.msra.mxu0 0
      %426 = vmatprep.subr.bf16.mxu0 0
      %427 = vmatpush2.bf16.msra.mxu0 0
      %428 = vmatprep.subr.bf16.mxu0 0
      %429 = vmatpush2.bf16.msra.mxu0 0
      %430 = vmatprep.subr.bf16.mxu0 0
      %431 = vmatpush2.bf16.msra.mxu0 0
      %432 = vmatprep.subr.bf16.mxu0 0
      %433 = vmatpush2.bf16.msra.mxu0 0
      %434 = vmatprep.subr.bf16.mxu0 0
      %435 = vmatpush2.bf16.msra.mxu0 0
      %436 = vmatprep.subr.bf16.mxu0 0
      %437 = vmatpush2.bf16.msra.mxu0 0
      %438 = vmatprep.mubr.bf16.mxu0 0
      %439 = vmatmul.mubr.bf16.gmra.mxu0 %v404
      %v440 = vpop.f32.mrf.mxu0
      %v441 = vadd.f32 0.0, %v440
      %v442 = vpop.f32.mrf.mxu0
      %v443 = vpop.f32.mrf.mxu0
      %v444 = vadd.f32 0.0, %v443
      %v445 = vpop.f32.mrf.mxu0
      %446 = vdwg.mxu0
      %v447 = vadd.f32 %v386, %v441
      %v448 = vadd.f32 %v387, %v444
      %s449 = scalar_lea.vmem %s240, 24
      %v450 = vld [vmem:[%s449] sm:$0xf]
      %v451 = vld [vmem:[%s449 + $0x4] sm:$0xf]
      %v454 = vunpack.c.l.b16 %v450
      %v455 = vunpack.c.l.b16 %v451
      %v456 = vpack.c.b16 %v455, %v454
      %457 = vrot.lane.b32.xlu0 %v333, 121
      %v458 = vpop.permute.xlu0 %457
      %459 = vrot.lane.b32.xlu0 %v334, 121
      %v460 = vpop.permute.xlu0 %459
      %vm461 = vcmask 990208
      %v462 = vsel %vm461, %v458, %v460
      %v465 = vsel %vm270, %v456, 0
      %467 = vmatprep.subr.bf16.mxu0 0
      %468 = vmatpush1.bf16.msra.mxu0 0
      %469 = vmatprep.subr.bf16.mxu0 0
      %470 = vmatpush1.bf16.msra.mxu0 0
      %471 = vmatprep.subr.bf16.mxu0 0
      %472 = vmatpush1.bf16.msra.mxu0 0
      %473 = vmatprep.subr.bf16.mxu0 0
      %474 = vmatpush1.bf16.msra.mxu0 0
      %475 = vmatprep.subr.bf16.mxu0 0
      %476 = vmatpush1.bf16.msra.mxu0 0
      %477 = vmatprep.subr.bf16.mxu0 0
      %478 = vmatpush1.bf16.msra.mxu0 0
      %479 = vmatprep.subr.bf16.mxu0 0
      %480 = vmatpush1.bf16.msra.mxu0 0
      %481 = vmatprep.subr.bf16.mxu0 0
      %482 = vmatpush1.bf16.msra.mxu0 %v462
      %483 = vmatprep.subr.bf16.mxu0 0
      %484 = vmatpush2.bf16.msra.mxu0 0
      %485 = vmatprep.subr.bf16.mxu0 0
      %486 = vmatpush2.bf16.msra.mxu0 0
      %487 = vmatprep.subr.bf16.mxu0 0
      %488 = vmatpush2.bf16.msra.mxu0 0
      %489 = vmatprep.subr.bf16.mxu0 0
      %490 = vmatpush2.bf16.msra.mxu0 0
      %491 = vmatprep.subr.bf16.mxu0 0
      %492 = vmatpush2.bf16.msra.mxu0 0
      %493 = vmatprep.subr.bf16.mxu0 0
      %494 = vmatpush2.bf16.msra.mxu0 0
      %495 = vmatprep.subr.bf16.mxu0 0
      %496 = vmatpush2.bf16.msra.mxu0 0
      %497 = vmatprep.subr.bf16.mxu0 0
      %498 = vmatpush2.bf16.msra.mxu0 0
      %499 = vmatprep.mubr.bf16.mxu0 0
      %500 = vmatmul.mubr.bf16.gmra.mxu0 %v465
      %v501 = vpop.f32.mrf.mxu0
      %v502 = vadd.f32 0.0, %v501
      %v503 = vpop.f32.mrf.mxu0
      %v504 = vpop.f32.mrf.mxu0
      %v505 = vadd.f32 0.0, %v504
      %v506 = vpop.f32.mrf.mxu0
      %507 = vdwg.mxu0
      %v508 = vadd.f32 %v447, %v502
      %v509 = vadd.f32 %v448, %v505
      %s510 = scalar_lea.vmem %s240, 32
      %v511 = vld [vmem:[%s510] sm:$0xf]
      %v512 = vld [vmem:[%s510 + $0x4] sm:$0xf]
      %v515 = vunpack.c.l.b16 %v511
      %v516 = vunpack.c.l.b16 %v512
      %v517 = vpack.c.b16 %v516, %v515
      %518 = vrot.lane.b32.xlu0 %v333, 120
      %v519 = vpop.permute.xlu0 %518
      %520 = vrot.lane.b32.xlu0 %v334, 120
      %v521 = vpop.permute.xlu0 %520
      %vm522 = vcmask 982016
      %v523 = vsel %vm522, %v519, %v521
      %v526 = vsel %vm270, %v517, 0
      %528 = vmatprep.subr.bf16.mxu0 0
      %529 = vmatpush1.bf16.msra.mxu0 0
      %530 = vmatprep.subr.bf16.mxu0 0
      %531 = vmatpush1.bf16.msra.mxu0 0
      %532 = vmatprep.subr.bf16.mxu0 0
      %533 = vmatpush1.bf16.msra.mxu0 0
      %534 = vmatprep.subr.bf16.mxu0 0
      %535 = vmatpush1.bf16.msra.mxu0 0
      %536 = vmatprep.subr.bf16.mxu0 0
      %537 = vmatpush1.bf16.msra.mxu0 0
      %538 = vmatprep.subr.bf16.mxu0 0
      %539 = vmatpush1.bf16.msra.mxu0 0
      %540 = vmatprep.subr.bf16.mxu0 0
      %541 = vmatpush1.bf16.msra.mxu0 0
      %542 = vmatprep.subr.bf16.mxu0 0
      %543 = vmatpush1.bf16.msra.mxu0 %v523
      %544 = vmatprep.subr.bf16.mxu0 0
      %545 = vmatpush2.bf16.msra.mxu0 0
      %546 = vmatprep.subr.bf16.mxu0 0
      %547 = vmatpush2.bf16.msra.mxu0 0
      %548 = vmatprep.subr.bf16.mxu0 0
      %549 = vmatpush2.bf16.msra.mxu0 0
      %550 = vmatprep.subr.bf16.mxu0 0
      %551 = vmatpush2.bf16.msra.mxu0 0
      %552 = vmatprep.subr.bf16.mxu0 0
      %553 = vmatpush2.bf16.msra.mxu0 0
      %554 = vmatprep.subr.bf16.mxu0 0
      %555 = vmatpush2.bf16.msra.mxu0 0
      %556 = vmatprep.subr.bf16.mxu0 0
      %557 = vmatpush2.bf16.msra.mxu0 0
      %558 = vmatprep.subr.bf16.mxu0 0
      %559 = vmatpush2.bf16.msra.mxu0 0
      %560 = vmatprep.mubr.bf16.mxu0 0
      %561 = vmatmul.mubr.bf16.gmra.mxu0 %v526
      %v562 = vpop.f32.mrf.mxu0
      %v563 = vadd.f32 0.0, %v562
      %v564 = vpop.f32.mrf.mxu0
      %v565 = vpop.f32.mrf.mxu0
      %v566 = vadd.f32 0.0, %v565
      %v567 = vpop.f32.mrf.mxu0
      %568 = vdwg.mxu0
      %v569 = vadd.f32 %v508, %v563
      %v570 = vadd.f32 %v509, %v566
      %s571 = scalar_lea.vmem %s240, 40
      %v572 = vld [vmem:[%s571] sm:$0xf]
      %v573 = vld [vmem:[%s571 + $0x4] sm:$0xf]
      %v576 = vunpack.c.l.b16 %v572
      %v577 = vunpack.c.l.b16 %v573
      %v578 = vpack.c.b16 %v577, %v576
      %579 = vrot.lane.b32.xlu0 %v333, 119
      %v580 = vpop.permute.xlu0 %579
      %581 = vrot.lane.b32.xlu0 %v334, 119
      %v582 = vpop.permute.xlu0 %581
      %vm583 = vcmask 973824
      %v584 = vsel %vm583, %v580, %v582
      %v587 = vsel %vm270, %v578, 0
      %589 = vmatprep.subr.bf16.mxu0 0
      %590 = vmatpush1.bf16.msra.mxu0 0
      %591 = vmatprep.subr.bf16.mxu0 0
      %592 = vmatpush1.bf16.msra.mxu0 0
      %593 = vmatprep.subr.bf16.mxu0 0
      %594 = vmatpush1.bf16.msra.mxu0 0
      %595 = vmatprep.subr.bf16.mxu0 0
      %596 = vmatpush1.bf16.msra.mxu0 0
      %597 = vmatprep.subr.bf16.mxu0 0
      %598 = vmatpush1.bf16.msra.mxu0 0
      %599 = vmatprep.subr.bf16.mxu0 0
      %600 = vmatpush1.bf16.msra.mxu0 0
      %601 = vmatprep.subr.bf16.mxu0 0
      %602 = vmatpush1.bf16.msra.mxu0 0
      %603 = vmatprep.subr.bf16.mxu0 0
      %604 = vmatpush1.bf16.msra.mxu0 %v584
      %605 = vmatprep.subr.bf16.mxu0 0
      %606 = vmatpush2.bf16.msra.mxu0 0
      %607 = vmatprep.subr.bf16.mxu0 0
      %608 = vmatpush2.bf16.msra.mxu0 0
      %609 = vmatprep.subr.bf16.mxu0 0
      %610 = vmatpush2.bf16.msra.mxu0 0
      %611 = vmatprep.subr.bf16.mxu0 0
      %612 = vmatpush2.bf16.msra.mxu0 0
      %613 = vmatprep.subr.bf16.mxu0 0
      %614 = vmatpush2.bf16.msra.mxu0 0
      %615 = vmatprep.subr.bf16.mxu0 0
      %616 = vmatpush2.bf16.msra.mxu0 0
      %617 = vmatprep.subr.bf16.mxu0 0
      %618 = vmatpush2.bf16.msra.mxu0 0
      %619 = vmatprep.subr.bf16.mxu0 0
      %620 = vmatpush2.bf16.msra.mxu0 0
      %621 = vmatprep.mubr.bf16.mxu0 0
      %622 = vmatmul.mubr.bf16.gmra.mxu0 %v587
      %v623 = vpop.f32.mrf.mxu0
      %v624 = vadd.f32 0.0, %v623
      %v625 = vpop.f32.mrf.mxu0
      %v626 = vpop.f32.mrf.mxu0
      %v627 = vadd.f32 0.0, %v626
      %v628 = vpop.f32.mrf.mxu0
      %629 = vdwg.mxu0
      %v630 = vadd.f32 %v569, %v624
      %v631 = vadd.f32 %v570, %v627
      %s632 = scalar_lea.vmem %s240, 48
      %v633 = vld [vmem:[%s632] sm:$0xf]
      %v634 = vld [vmem:[%s632 + $0x4] sm:$0xf]
      %v637 = vunpack.c.l.b16 %v633
      %v638 = vunpack.c.l.b16 %v634
      %v639 = vpack.c.b16 %v638, %v637
      %640 = vrot.lane.b32.xlu0 %v333, 114
      %v641 = vpop.permute.xlu0 %640
      %642 = vrot.lane.b32.xlu0 %v334, 114
      %v643 = vpop.permute.xlu0 %642
      %vm644 = vcmask 932864
      %v645 = vsel %vm644, %v641, %v643
      %v648 = vsel %vm270, %v639, 0
      %650 = vmatprep.subr.bf16.mxu0 0
      %651 = vmatpush1.bf16.msra.mxu0 0
      %652 = vmatprep.subr.bf16.mxu0 0
      %653 = vmatpush1.bf16.msra.mxu0 0
      %654 = vmatprep.subr.bf16.mxu0 0
      %655 = vmatpush1.bf16.msra.mxu0 0
      %656 = vmatprep.subr.bf16.mxu0 0
      %657 = vmatpush1.bf16.msra.mxu0 0
      %658 = vmatprep.subr.bf16.mxu0 0
      %659 = vmatpush1.bf16.msra.mxu0 0
      %660 = vmatprep.subr.bf16.mxu0 0
      %661 = vmatpush1.bf16.msra.mxu0 0
      %662 = vmatprep.subr.bf16.mxu0 0
      %663 = vmatpush1.bf16.msra.mxu0 0
      %664 = vmatprep.subr.bf16.mxu0 0
      %665 = vmatpush1.bf16.msra.mxu0 %v645
      %666 = vmatprep.subr.bf16.mxu0 0
      %667 = vmatpush2.bf16.msra.mxu0 0
      %668 = vmatprep.subr.bf16.mxu0 0
      %669 = vmatpush2.bf16.msra.mxu0 0
      %670 = vmatprep.subr.bf16.mxu0 0
      %671 = vmatpush2.bf16.msra.mxu0 0
      %672 = vmatprep.subr.bf16.mxu0 0
      %673 = vmatpush2.bf16.msra.mxu0 0
      %674 = vmatprep.subr.bf16.mxu0 0
      %675 = vmatpush2.bf16.msra.mxu0 0
      %676 = vmatprep.subr.bf16.mxu0 0
      %677 = vmatpush2.bf16.msra.mxu0 0
      %678 = vmatprep.subr.bf16.mxu0 0
      %679 = vmatpush2.bf16.msra.mxu0 0
      %680 = vmatprep.subr.bf16.mxu0 0
      %681 = vmatpush2.bf16.msra.mxu0 0
      %682 = vmatprep.mubr.bf16.mxu0 0
      %683 = vmatmul.mubr.bf16.gmra.mxu0 %v648
      %v684 = vpop.f32.mrf.mxu0
      %v685 = vadd.f32 0.0, %v684
      %v686 = vpop.f32.mrf.mxu0
      %v687 = vpop.f32.mrf.mxu0
      %v688 = vadd.f32 0.0, %v687
      %v689 = vpop.f32.mrf.mxu0
      %690 = vdwg.mxu0
      %v691 = vadd.f32 %v630, %v685
      %v692 = vadd.f32 %v631, %v688
      %s693 = scalar_lea.vmem %s240, 56
      %v694 = vld [vmem:[%s693] sm:$0xf]
      %v695 = vld [vmem:[%s693 + $0x4] sm:$0xf]
      %v698 = vunpack.c.l.b16 %v694
      %v699 = vunpack.c.l.b16 %v695
      %v700 = vpack.c.b16 %v699, %v698
      %701 = vrot.lane.b32.xlu0 %v333, 113
      %v702 = vpop.permute.xlu0 %701
      %703 = vrot.lane.b32.xlu0 %v334, 113
      %v704 = vpop.permute.xlu0 %703
      %vm705 = vcmask 924672
      %v706 = vsel %vm705, %v702, %v704
      %v709 = vsel %vm270, %v700, 0
      %711 = vmatprep.subr.bf16.mxu0 0
      %712 = vmatpush1.bf16.msra.mxu0 0
      %713 = vmatprep.subr.bf16.mxu0 0
      %714 = vmatpush1.bf16.msra.mxu0 0
      %715 = vmatprep.subr.bf16.mxu0 0
      %716 = vmatpush1.bf16.msra.mxu0 0
      %717 = vmatprep.subr.bf16.mxu0 0
      %718 = vmatpush1.bf16.msra.mxu0 0
      %719 = vmatprep.subr.bf16.mxu0 0
      %720 = vmatpush1.bf16.msra.mxu0 0
      %721 = vmatprep.subr.bf16.mxu0 0
      %722 = vmatpush1.bf16.msra.mxu0 0
      %723 = vmatprep.subr.bf16.mxu0 0
      %724 = vmatpush1.bf16.msra.mxu0 0
      %725 = vmatprep.subr.bf16.mxu0 0
      %726 = vmatpush1.bf16.msra.mxu0 %v706
      %727 = vmatprep.subr.bf16.mxu0 0
      %728 = vmatpush2.bf16.msra.mxu0 0
      %729 = vmatprep.subr.bf16.mxu0 0
      %730 = vmatpush2.bf16.msra.mxu0 0
      %731 = vmatprep.subr.bf16.mxu0 0
      %732 = vmatpush2.bf16.msra.mxu0 0
      %733 = vmatprep.subr.bf16.mxu0 0
      %734 = vmatpush2.bf16.msra.mxu0 0
      %735 = vmatprep.subr.bf16.mxu0 0
      %736 = vmatpush2.bf16.msra.mxu0 0
      %737 = vmatprep.subr.bf16.mxu0 0
      %738 = vmatpush2.bf16.msra.mxu0 0
      %739 = vmatprep.subr.bf16.mxu0 0
      %740 = vmatpush2.bf16.msra.mxu0 0
      %741 = vmatprep.subr.bf16.mxu0 0
      %742 = vmatpush2.bf16.msra.mxu0 0
      %743 = vmatprep.mubr.bf16.mxu0 0
      %744 = vmatmul.mubr.bf16.gmra.mxu0 %v709
      %v745 = vpop.f32.mrf.mxu0
      %v746 = vadd.f32 0.0, %v745
      %v747 = vpop.f32.mrf.mxu0
      %v748 = vpop.f32.mrf.mxu0
      %v749 = vadd.f32 0.0, %v748
      %v750 = vpop.f32.mrf.mxu0
      %751 = vdwg.mxu0
      %v752 = vadd.f32 %v691, %v746
      %v753 = vadd.f32 %v692, %v749
      %s754 = scalar_lea.vmem %s240, 64
      %v755 = vld [vmem:[%s754] sm:$0xf]
      %v756 = vld [vmem:[%s754 + $0x4] sm:$0xf]
      %v759 = vunpack.c.l.b16 %v755
      %v760 = vunpack.c.l.b16 %v756
      %v761 = vpack.c.b16 %v760, %v759
      %762 = vrot.lane.b32.xlu0 %v333, 112
      %v763 = vpop.permute.xlu0 %762
      %764 = vrot.lane.b32.xlu0 %v334, 112
      %v765 = vpop.permute.xlu0 %764
      %vm766 = vcmask 916480
      %v767 = vsel %vm766, %v763, %v765
      %v770 = vsel %vm270, %v761, 0
      %772 = vmatprep.subr.bf16.mxu0 0
      %773 = vmatpush1.bf16.msra.mxu0 0
      %774 = vmatprep.subr.bf16.mxu0 0
      %775 = vmatpush1.bf16.msra.mxu0 0
      %776 = vmatprep.subr.bf16.mxu0 0
      %777 = vmatpush1.bf16.msra.mxu0 0
      %778 = vmatprep.subr.bf16.mxu0 0
      %779 = vmatpush1.bf16.msra.mxu0 0
      %780 = vmatprep.subr.bf16.mxu0 0
      %781 = vmatpush1.bf16.msra.mxu0 0
      %782 = vmatprep.subr.bf16.mxu0 0
      %783 = vmatpush1.bf16.msra.mxu0 0
      %784 = vmatprep.subr.bf16.mxu0 0
      %785 = vmatpush1.bf16.msra.mxu0 0
      %786 = vmatprep.subr.bf16.mxu0 0
      %787 = vmatpush1.bf16.msra.mxu0 %v767
      %788 = vmatprep.subr.bf16.mxu0 0
      %789 = vmatpush2.bf16.msra.mxu0 0
      %790 = vmatprep.subr.bf16.mxu0 0
      %791 = vmatpush2.bf16.msra.mxu0 0
      %792 = vmatprep.subr.bf16.mxu0 0
      %793 = vmatpush2.bf16.msra.mxu0 0
      %794 = vmatprep.subr.bf16.mxu0 0
      %795 = vmatpush2.bf16.msra.mxu0 0
      %796 = vmatprep.subr.bf16.mxu0 0
      %797 = vmatpush2.bf16.msra.mxu0 0
      %798 = vmatprep.subr.bf16.mxu0 0
      %799 = vmatpush2.bf16.msra.mxu0 0
      %800 = vmatprep.subr.bf16.mxu0 0
      %801 = vmatpush2.bf16.msra.mxu0 0
      %802 = vmatprep.subr.bf16.mxu0 0
      %803 = vmatpush2.bf16.msra.mxu0 0
      %804 = vmatprep.mubr.bf16.mxu0 0
      %805 = vmatmul.mubr.bf16.gmra.mxu0 %v770
      %v806 = vpop.f32.mrf.mxu0
      %v807 = vadd.f32 0.0, %v806
      %v808 = vpop.f32.mrf.mxu0
      %v809 = vpop.f32.mrf.mxu0
      %v810 = vadd.f32 0.0, %v809
      %v811 = vpop.f32.mrf.mxu0
      %812 = vdwg.mxu0
      %v813 = vadd.f32 %v752, %v807
      %v814 = vadd.f32 %v753, %v810
      %815 = vst [vmem:[#allocation2] sm:$0xff] %v813
      %816 = vst [vmem:[#allocation2 + $0x8] sm:$0xff] %v814
      // Predicated region
      $region41: #{danet_head.12} parent=35 // pred_check
        %p817 = pneg %p247
      $region42: #{danet_head.12} parent=35 // pred_check_branch
        %819 = sbr.rel (%p817) target = $region44
      $region43: #{danet_head.12} parent=35 // pred_region
        %v820 = vld [vmem:[#allocation2] sm:$0xff]
        %v821 = vld [vmem:[#allocation2 + $0x8] sm:$0xff]
        %v822 = vld [vmem:[%s2] sm:$0xff]
        %v823 = vld [vmem:[%s2 + $0x8] sm:$0xff]
        %825 = vset.pattern.permute.xlu0 0
        %826 = vperm.xlu0 %825, %v822
        %v827 = vpop.permute.xlu0 %826
        %830 = vset.pattern.permute.xlu0 0
        %831 = vperm.xlu0 %830, %v823
        %v832 = vpop.permute.xlu0 %831
        %v834 = vadd.f32 %v820, %v827
        %v835 = vadd.f32 %v821, %v832
        %v836 = vmax.f32 %v834, 0.0
        %v837 = vmax.f32 %v835, 0.0
        %v838 = vld [vmem:[%s3] sm:$0x1]
        %v840 = vlaneseq
        %v841 = vshrl.u32 %v840, 7
        %v842 = vsub.s32 0, %v841
        %v843 = vrot.slane %v838, %v842
        %v845 = vmul.f32 %v836, %v843
        %v846 = vmul.f32 %v837, %v843
        %v847 = vpack.c.bf16 %v846, %v845
        %v849 = vunpack.c.l.b16 %v847
        %v850 = vunpack.c.h.b16 %v847
        %v851 = vpack.c.b16 %v849, %v849
        %v852 = vpack.c.b16 %v850, %v850
        %855 = vst [vmem:[%s245] sm:$0xf] %v851
        %856 = vst [vmem:[%s245 + $0x4] sm:$0xf] %v852
      $region44: #{danet_head.12} parent=35 // pred_fallthru
        _
      %p857 = scmp.lt.s32.totalorder %s19, 1
      %s858 = scalar_select %p857, %s19, 1
      %s859 = smul.addr %s858, 2
      %s860 = smul.addr %s859, 4
      %s861 = scalar_lea.vmem %s4, %s860
      // Predicated region
      $region45: #{danet_head.12} parent=35 // pred_check
        %p862 = pneg %p141
      $region46: #{danet_head.12} parent=35 // pred_check_branch
        %864 = sbr.rel (%p862) target = $region48
      $region47: #{danet_head.12} parent=35 // pred_region
        _
      $region48: #{danet_head.12} parent=35 // pred_fallthru
        _
    $region36: #{danet_head.12} parent=5 // pred_fallthru
      _
    %p865 = scmp.le.s32.totalorder 2, %s10
    // Predicated region
    $region49: #{danet_head.12} parent=5 // pred_check
      %p866 = pneg %p865
    $region50: #{danet_head.12} parent=5 // pred_check_branch
      %868 = sbr.rel (%p866) target = $region52
    $region51: #{danet_head.12} parent=5 // pred_region
      %s869 = ssub.s32 %s10, 2
      // Predicated region
      $region53: #{danet_head.12} parent=51 // pred_check
        %p870 = pneg %p147
      $region54: #{danet_head.12} parent=51 // pred_check_branch
        %872 = sbr.rel (%p870) target = $region56
      $region55: #{danet_head.12} parent=51 // pred_region
        %p873 = scmp.lt.s32.totalorder %s21, 1
        %s874 = scalar_select %p873, %s21, 1
        %s875 = smul.addr %s874, 2
        %s876 = smul.addr %s875, 4
        %s877 = scalar_lea.vmem %s4, %s876
      $region56: #{danet_head.12} parent=51 // pred_fallthru
        _
    $region52: #{danet_head.12} parent=5 // pred_fallthru
      _
  $region6: #{danet_head.12} parent=0 // loop_footer
    %s14 = sadd.s32 1, %s10
  $region7: #{danet_head.12} parent=0 // loop_footer_branch
    %9 = sbr.rel target = $region3
  $region8: #{danet_head.12} parent=0 // loop_exit
    _

// kernel: danet_head.16
$region0: #{danet_head.16}
  #allocation0 [shape = 'u32[]', space=smem, size = 0x4, offset = 0x4, fixed_abs, tag = 'smem constant byte address 0x4 - core index']
  #allocation1 [shape = 'u32[144,128]{1,0:T(1,128)}', space=vmem, size = 0x12000, scoped, tag = 'internal scratch']
  %s0 = inlined_call_operand.vmem [shape: bf16[2,16,128], index: 0, kind: input, shape index: {}]
  %s1 = inlined_call_operand.vmem [shape: bf16[2,16,128], index: 1, kind: input, shape index: {}]
  %s2 = inlined_call_operand.vmem [shape: bf16[2,16], index: 2, kind: input, shape index: {}]
  %s3 = inlined_call_operand.vmem [shape: f32[2,1], index: 3, kind: input, shape index: {}]
  %s4 = inlined_call_operand.vmem [shape: f32[2,2,128], index: 4, kind: output, shape index: {}]
  %s5 = sld [smem:[#allocation0]]
  $region49: #{danet_head.16} parent=0
    _
  %s7 = ssub.s32 1, %s5
  %s8 = scalar_select 0, %s7, %s5
  loop: start=0, step=1, limit=4
  $region2: #{danet_head.16} parent=0 // loop_pre_header
    _
  $region3: #{danet_head.16} parent=0 // loop_header
    %s10 = sphi 0, %s14
    %p11 = scmp.ge.s32.totalorder %s10, 4
    %s20 = sphi 0, %s22
    %s23 = sphi 0, %s20
    %s24 = sphi 0, %s23
    %s40 = sphi 0, %s24
    %s46 = sphi 0, %s48
    %s49 = sphi 0, %s46
    %s50 = sphi 0, %s49
    %s66 = sphi 0, %s50
    %s70 = sphi 0, %s70
    %s72 = sphi 0, %s70
    %s73 = sphi 0, %s72
    %s87 = sphi 0, %s73
    %s91 = sphi 0, %s91
    %s93 = sphi 0, %s91
    %s94 = sphi 0, %s93
    %s108 = sphi 0, %s94
    %s114 = sphi 0, %s116
    %s117 = sphi 0, %s114
    %s118 = sphi 0, %s117
    %s134 = sphi 0, %s118
  $region4: #{danet_head.16} parent=0 // loop_header_branch
    %13 = sbr.rel (%p11) target = $region8
  $region5: #{danet_head.16} parent=0 // loop_body
    %s15 = ssub.s32 %s10, 1
    %s16 = ssub.s32 %s10, 2
    %s17 = sadd.s32 %s10, 1
    %s18 = ssub.s32 %s10, %s17
    %p19 = scmp.eq.s32.totalorder %s18, 0
    %s21 = sadd.s32 %s20, 1
    %s22 = scalar_select %p19, %s20, %s21
    %p25 = pneg %p19
    %p26 = scmp.eq.s32.totalorder %s10, 1
    %p27 = por %p25, %p26
    %p28 = scmp.ne.s32.totalorder %s20, %s23
    %p29 = scmp.eq.s32.totalorder %s10, 0
    %p30 = por %p28, %p29
    %p31 = scmp.ne.s32.totalorder %s20, %s23
    %p32 = scmp.eq.s32.totalorder %s15, 1
    %p33 = por %p31, %p32
    %p34 = scmp.ne.s32.totalorder %s23, %s24
    %p35 = scmp.eq.s32.totalorder %s15, 0
    %p36 = por %p34, %p35
    %p37 = scmp.ne.s32.totalorder %s23, %s24
    %p38 = scmp.eq.s32.totalorder %s16, 1
    %p39 = por %p37, %p38
    %p41 = scmp.ne.s32.totalorder %s24, %s40
    %p42 = scmp.eq.s32.totalorder %s16, 0
    %p43 = por %p41, %p42
    %s44 = ssub.s32 %s10, %s17
    %p45 = scmp.eq.s32.totalorder %s44, 0
    %s47 = sadd.s32 %s46, 1
    %s48 = scalar_select %p45, %s46, %s47
    %p51 = pneg %p45
    %p52 = scmp.eq.s32.totalorder %s10, 1
    %p53 = por %p51, %p52
    %p54 = scmp.ne.s32.totalorder %s46, %s49
    %p55 = scmp.eq.s32.totalorder %s10, 0
    %p56 = por %p54, %p55
    %p57 = scmp.ne.s32.totalorder %s46, %s49
    %p58 = scmp.eq.s32.totalorder %s15, 1
    %p59 = por %p57, %p58
    %p60 = scmp.ne.s32.totalorder %s49, %s50
    %p61 = scmp.eq.s32.totalorder %s15, 0
    %p62 = por %p60, %p61
    %p63 = scmp.ne.s32.totalorder %s49, %s50
    %p64 = scmp.eq.s32.totalorder %s16, 1
    %p65 = por %p63, %p64
    %p67 = scmp.ne.s32.totalorder %s50, %s66
    %p68 = scmp.eq.s32.totalorder %s16, 0
    %p69 = por %p67, %p68
    %s71 = sadd.s32 %s70, 1
    %p74 = scmp.eq.s32.totalorder %s10, 1
    %p75 = scmp.ne.s32.totalorder %s70, %s72
    %p76 = scmp.eq.s32.totalorder %s10, 0
    %p77 = por %p75, %p76
    %p78 = scmp.ne.s32.totalorder %s70, %s72
    %p79 = scmp.eq.s32.totalorder %s15, 1
    %p80 = por %p78, %p79
    %p81 = scmp.ne.s32.totalorder %s72, %s73
    %p82 = scmp.eq.s32.totalorder %s15, 0
    %p83 = por %p81, %p82
    %p84 = scmp.ne.s32.totalorder %s72, %s73
    %p85 = scmp.eq.s32.totalorder %s16, 1
    %p86 = por %p84, %p85
    %p88 = scmp.ne.s32.totalorder %s73, %s87
    %p89 = scmp.eq.s32.totalorder %s16, 0
    %p90 = por %p88, %p89
    %s92 = sadd.s32 %s91, 1
    %p95 = scmp.eq.s32.totalorder %s10, 1
    %p96 = scmp.ne.s32.totalorder %s91, %s93
    %p97 = scmp.eq.s32.totalorder %s10, 0
    %p98 = por %p96, %p97
    %p99 = scmp.ne.s32.totalorder %s91, %s93
    %p100 = scmp.eq.s32.totalorder %s15, 1
    %p101 = por %p99, %p100
    %p102 = scmp.ne.s32.totalorder %s93, %s94
    %p103 = scmp.eq.s32.totalorder %s15, 0
    %p104 = por %p102, %p103
    %p105 = scmp.ne.s32.totalorder %s93, %s94
    %p106 = scmp.eq.s32.totalorder %s16, 1
    %p107 = por %p105, %p106
    %p109 = scmp.ne.s32.totalorder %s94, %s108
    %p110 = scmp.eq.s32.totalorder %s16, 0
    %p111 = por %p109, %p110
    %s112 = ssub.s32 %s10, %s17
    %p113 = scmp.eq.s32.totalorder %s112, 0
    %s115 = sadd.s32 %s114, 1
    %s116 = scalar_select %p113, %s114, %s115
    %p119 = pneg %p113
    %p120 = scmp.eq.s32.totalorder %s10, 1
    %p121 = por %p119, %p120
    %p122 = scmp.ne.s32.totalorder %s114, %s117
    %p123 = scmp.eq.s32.totalorder %s10, 0
    %p124 = por %p122, %p123
    %p125 = scmp.ne.s32.totalorder %s114, %s117
    %p126 = scmp.eq.s32.totalorder %s15, 1
    %p127 = por %p125, %p126
    %p128 = scmp.ne.s32.totalorder %s117, %s118
    %p129 = scmp.eq.s32.totalorder %s15, 0
    %p130 = por %p128, %p129
    %p131 = scmp.ne.s32.totalorder %s117, %s118
    %p132 = scmp.eq.s32.totalorder %s16, 1
    %p133 = por %p131, %p132
    %p135 = scmp.ne.s32.totalorder %s118, %s134
    %p136 = scmp.eq.s32.totalorder %s16, 0
    %p137 = por %p135, %p136
    %p138 = scmp.le.s32.totalorder 1, %s10
    %p139 = scmp.lt.s32.totalorder %s10, 3
    %p140 = pnand %p138, %p139
    %p141 = pneg %p140
    // Predicated region
    $region9: #{danet_head.16} parent=5 // pred_check
      _
    $region10: #{danet_head.16} parent=5 // pred_check_branch
      %143 = sbr.rel (%p140) target = $region12
    $region11: #{danet_head.16} parent=5 // pred_region
      %s144 = ssub.s32 %s10, 1
      // Predicated region
      $region13: #{danet_head.16} parent=11 // pred_check
        %p145 = pneg %p83
      $region14: #{danet_head.16} parent=11 // pred_check_branch
        %147 = sbr.rel (%p145) target = $region16
      $region15: #{danet_head.16} parent=11 // pred_region
        _
      $region16: #{danet_head.16} parent=11 // pred_fallthru
        _
      // Predicated region
      $region17: #{danet_head.16} parent=11 // pred_check
        %p148 = pneg %p104
      $region18: #{danet_head.16} parent=11 // pred_check_branch
        %150 = sbr.rel (%p148) target = $region20
      $region19: #{danet_head.16} parent=11 // pred_region
        _
      $region20: #{danet_head.16} parent=11 // pred_fallthru
        _
    $region12: #{danet_head.16} parent=5 // pred_fallthru
      _
    %p151 = scmp.lt.s32.totalorder %s10, 2
    // Predicated region
    $region21: #{danet_head.16} parent=5 // pred_check
      %p152 = pneg %p151
    $region22: #{danet_head.16} parent=5 // pred_check_branch
      %154 = sbr.rel (%p152) target = $region24
    $region23: #{danet_head.16} parent=5 // pred_region
      // Predicated region
      $region25: #{danet_head.16} parent=23 // pred_check
        %p155 = pneg %p30
      $region26: #{danet_head.16} parent=23 // pred_check_branch
        %157 = sbr.rel (%p155) target = $region28
      $region27: #{danet_head.16} parent=23 // pred_region
        %p158 = scmp.lt.s32.totalorder %s10, 1
        %s159 = scalar_select %p158, %s10, 1
        %s160 = smul.addr %s159, 2
        %s161 = smul.addr %s160, 4
        %s162 = scalar_lea.vmem %s0, %s161
      $region28: #{danet_head.16} parent=23 // pred_fallthru
        _
      // Predicated region
      $region29: #{danet_head.16} parent=23 // pred_check
        %p163 = pneg %p56
      $region30: #{danet_head.16} parent=23 // pred_check_branch
        %165 = sbr.rel (%p163) target = $region32
      $region31: #{danet_head.16} parent=23 // pred_region
        %p166 = scmp.lt.s32.totalorder %s10, 1
        %s167 = scalar_select %p166, %s10, 1
        %s168 = smul.addr %s167, 2
        %s169 = smul.addr %s168, 4
        %s170 = scalar_lea.vmem %s1, %s169
      $region32: #{danet_head.16} parent=23 // pred_fallthru
        _
    $region24: #{danet_head.16} parent=5 // pred_fallthru
      _
    %p171 = scmp.le.s32.totalorder 1, %s10
    %p172 = scmp.lt.s32.totalorder %s10, 3
    %p173 = pnand %p171, %p172
    %p174 = pneg %p173
    // Predicated region
    $region33: #{danet_head.16} parent=5 // pred_check
      _
    $region34: #{danet_head.16} parent=5 // pred_check_branch
      %176 = sbr.rel (%p173) target = $region36
    $region35: #{danet_head.16} parent=5 // pred_region
      %s177 = ssub.s32 %s10, 1
      %p178 = scmp.lt.s32.totalorder %s15, 1
      %s179 = scalar_select %p178, %s15, 1
      %s180 = smul.addr %s179, 2
      %s181 = smul.addr %s180, 4
      %s182 = scalar_lea.vmem %s0, %s181
      %p183 = pneg %p36
      %p184 = pneg %p33
      %p185 = scmp.lt.s32.totalorder %s15, 1
      %s186 = scalar_select %p185, %s15, 1
      %s187 = smul.addr %s186, 2
      %s188 = smul.addr %s187, 4
      %s189 = scalar_lea.vmem %s1, %s188
      %p190 = pneg %p62
      %p191 = pneg %p59
      %p192 = pneg %p83
      %p193 = pneg %p80
      %p194 = pneg %p104
      %p195 = pneg %p101
      %p196 = pneg %p130
      %p197 = pneg %p127
      %p198 = scmp.lt.s32.totalorder %s15, 1
      %s199 = scalar_select %p198, %s15, 1
      %s200 = smul.addr %s199, 2
      %s201 = scalar_lea.vmem %s4, %s200
      %p202 = scmp.lt.s32.totalorder %s15, 1
      %s203 = scalar_select %p202, %s15, 1
      %s204 = smul.addr %s203, 2
      %s205 = smul.addr %s204, 4
      %s206 = scalar_lea.vmem %s0, %s205
      %p207 = scmp.lt.s32.totalorder %s15, 1
      %s208 = scalar_select %p207, %s15, 1
      %s209 = smul.addr %s208, 2
      %s210 = smul.addr %s209, 4
      %s211 = scalar_lea.vmem %s1, %s210
      %p212 = scmp.lt.s32.totalorder %s15, 1
      %s213 = scalar_select %p212, %s15, 1
      %s214 = smul.addr %s213, 2
      %s215 = scalar_lea.vmem %s4, %s214
      %v217 = vld [vmem:[%s206] sm:$0xf]
      %v218 = vld [vmem:[%s206 + $0x4] sm:$0xf]
      %v219 = vld [vmem:[%s211] sm:$0xf]
      %v220 = vld [vmem:[%s211 + $0x4] sm:$0xf]
      %v221 = vadd.bf16 %v217, %v219
      %v222 = vadd.bf16 %v218, %v220
      %v223 = vld [vmem:[%s2] sm:$0x1]
      %v224 = vld [vmem:[%s3] sm:$0x3]
      %226 = vset.pattern.permute.xlu0 0
      %227 = vperm.xlu0 %226, %v224
      %v228 = vpop.permute.xlu0 %227
      %v232 = vunpack.c.l.b16 %v221
      %v233 = vunpack.c.l.b16 %v222
      %v234 = vpack.c.b16 %v233, %v232
      %vm236 = vcmask 130048
      %v238 = vsel %vm236, %v223, 0
      %240 = vmatprep.subr.bf16.mxu0 0
      %241 = vmatpush1.bf16.msra.mxu0 0
      %242 = vmatprep.subr.bf16.mxu0 0
      %243 = vmatpush1.bf16.msra.mxu0 0
      %244 = vmatprep.subr.bf16.mxu0 0
      %245 = vmatpush1.bf16.msra.mxu0 0
      %246 = vmatprep.subr.bf16.mxu0 0
      %247 = vmatpush1.bf16.msra.mxu0 0
      %248 = vmatprep.subr.bf16.mxu0 0
      %249 = vmatpush1.bf16.msra.mxu0 0
      %250 = vmatprep.subr.bf16.mxu0 0
      %251 = vmatpush1.bf16.msra.mxu0 0
      %252 = vmatprep.subr.bf16.mxu0 0
      %253 = vmatpush1.bf16.msra.mxu0 0
      %254 = vmatprep.subr.bf16.mxu0 0
      %255 = vmatpush1.bf16.msra.mxu0 %v234
      %256 = vmatprep.subr.bf16.mxu0 0
      %257 = vmatpush2.bf16.msra.mxu0 0
      %258 = vmatprep.subr.bf16.mxu0 0
      %259 = vmatpush2.bf16.msra.mxu0 0
      %260 = vmatprep.subr.bf16.mxu0 0
      %261 = vmatpush2.bf16.msra.mxu0 0
      %262 = vmatprep.subr.bf16.mxu0 0
      %263 = vmatpush2.bf16.msra.mxu0 0
      %264 = vmatprep.subr.bf16.mxu0 0
      %265 = vmatpush2.bf16.msra.mxu0 0
      %266 = vmatprep.subr.bf16.mxu0 0
      %267 = vmatpush2.bf16.msra.mxu0 0
      %268 = vmatprep.subr.bf16.mxu0 0
      %269 = vmatpush2.bf16.msra.mxu0 0
      %270 = vmatprep.subr.bf16.mxu0 0
      %271 = vmatpush2.bf16.msra.mxu0 0
      %272 = vmatprep.mubr.bf16.mxu0 0
      %273 = vmatmul.mubr.bf16.gmra.mxu0 %v238
      %v274 = vpop.f32.mrf.mxu0
      %v275 = vadd.f32 %v228, %v274
      %v276 = vpop.f32.mrf.mxu0
      %v277 = vpop.f32.mrf.mxu0
      %v278 = vpop.f32.mrf.mxu0
      %279 = vdwg.mxu0
      %280 = vst [vmem:[%s215] sm:$0x3] %v275
      %p281 = scmp.lt.s32.totalorder %s15, 1
      %s282 = scalar_select %p281, %s15, 1
      %s283 = smul.addr %s282, 2
      %s284 = scalar_lea.vmem %s4, %s283
      // Predicated region
      $region37: #{danet_head.16} parent=35 // pred_check
        %p285 = pneg %p127
      $region38: #{danet_head.16} parent=35 // pred_check_branch
        %287 = sbr.rel (%p285) target = $region40
      $region39: #{danet_head.16} parent=35 // pred_region
        _
      $region40: #{danet_head.16} parent=35 // pred_fallthru
        _
    $region36: #{danet_head.16} parent=5 // pred_fallthru
      _
    %p288 = scmp.le.s32.totalorder 2, %s10
    // Predicated region
    $region41: #{danet_head.16} parent=5 // pred_check
      %p289 = pneg %p288
    $region42: #{danet_head.16} parent=5 // pred_check_branch
      %291 = sbr.rel (%p289) target = $region44
    $region43: #{danet_head.16} parent=5 // pred_region
      %s292 = ssub.s32 %s10, 2
      // Predicated region
      $region45: #{danet_head.16} parent=43 // pred_check
        %p293 = pneg %p133
      $region46: #{danet_head.16} parent=43 // pred_check_branch
        %295 = sbr.rel (%p293) target = $region48
      $region47: #{danet_head.16} parent=43 // pred_region
        %p296 = scmp.lt.s32.totalorder %s16, 1
        %s297 = scalar_select %p296, %s16, 1
        %s298 = smul.addr %s297, 2
        %s299 = scalar_lea.vmem %s4, %s298
      $region48: #{danet_head.16} parent=43 // pred_fallthru
        _
    $region44: #{danet_head.16} parent=5 // pred_fallthru
      _
  $region6: #{danet_head.16} parent=0 // loop_footer
    %s14 = sadd.s32 1, %s10
  $region7: #{danet_head.16} parent=0 // loop_footer_branch
    %9 = sbr.rel target = $region3
  $region8: #{danet_head.16} parent=0 // loop_exit
    _

// kernel: danet_head.14
$region0: #{danet_head.14}
  #allocation0 [shape = 'u32[]', space=smem, size = 0x4, offset = 0x4, fixed_abs, tag = 'smem constant byte address 0x4 - core index']
  #allocation1 [shape = 'u32[144,128]{1,0:T(1,128)}', space=vmem, size = 0x12000, scoped, tag = 'internal scratch']
  #allocation2 [shape = 'f32[1,1]{1,0:T(1,128)S(6)}', space=smem, size = 0x200, scoped, tag = 'scoped memory for danet_head.14']
  %s0 = inlined_call_operand.vmem [shape: bf16[2,16,128], index: 0, kind: input, shape index: {}]
  %s1 = inlined_call_operand.<no memory space> [shape: f32[1,1], index: 1, kind: input, shape index: {}]
  %s2 = inlined_call_operand.vmem [shape: bf16[2,16,128], index: 2, kind: output, shape index: {}]
  %s3 = sld [smem:[#allocation0]]
  $region41: #{danet_head.14} parent=0
    _
  %s5 = ssub.s32 1, %s3
  %s6 = scalar_select 0, %s5, %s3
  %7 = sst [smem:[#allocation2]] %s1
  loop: start=0, step=1, limit=4
  $region2: #{danet_head.14} parent=0 // loop_pre_header
    _
  $region3: #{danet_head.14} parent=0 // loop_header
    %s9 = sphi 0, %s13
    %p10 = scmp.ge.s32.totalorder %s9, 4
    %s19 = sphi 0, %s21
    %s22 = sphi 0, %s19
    %s23 = sphi 0, %s22
    %s39 = sphi 0, %s23
    %s43 = sphi 0, %s43
    %s45 = sphi 0, %s43
    %s46 = sphi 0, %s45
    %s60 = sphi 0, %s46
    %s66 = sphi 0, %s68
    %s69 = sphi 0, %s66
    %s70 = sphi 0, %s69
    %s86 = sphi 0, %s70
  $region4: #{danet_head.14} parent=0 // loop_header_branch
    %12 = sbr.rel (%p10) target = $region8
  $region5: #{danet_head.14} parent=0 // loop_body
    %s14 = ssub.s32 %s9, 1
    %s15 = ssub.s32 %s9, 2
    %s16 = sadd.s32 %s9, 1
    %s17 = ssub.s32 %s9, %s16
    %p18 = scmp.eq.s32.totalorder %s17, 0
    %s20 = sadd.s32 %s19, 1
    %s21 = scalar_select %p18, %s19, %s20
    %p24 = pneg %p18
    %p25 = scmp.eq.s32.totalorder %s9, 1
    %p26 = por %p24, %p25
    %p27 = scmp.ne.s32.totalorder %s19, %s22
    %p28 = scmp.eq.s32.totalorder %s9, 0
    %p29 = por %p27, %p28
    %p30 = scmp.ne.s32.totalorder %s19, %s22
    %p31 = scmp.eq.s32.totalorder %s14, 1
    %p32 = por %p30, %p31
    %p33 = scmp.ne.s32.totalorder %s22, %s23
    %p34 = scmp.eq.s32.totalorder %s14, 0
    %p35 = por %p33, %p34
    %p36 = scmp.ne.s32.totalorder %s22, %s23
    %p37 = scmp.eq.s32.totalorder %s15, 1
    %p38 = por %p36, %p37
    %p40 = scmp.ne.s32.totalorder %s23, %s39
    %p41 = scmp.eq.s32.totalorder %s15, 0
    %p42 = por %p40, %p41
    %s44 = sadd.s32 %s43, 1
    %p47 = scmp.eq.s32.totalorder %s9, 1
    %p48 = scmp.ne.s32.totalorder %s43, %s45
    %p49 = scmp.eq.s32.totalorder %s9, 0
    %p50 = por %p48, %p49
    %p51 = scmp.ne.s32.totalorder %s43, %s45
    %p52 = scmp.eq.s32.totalorder %s14, 1
    %p53 = por %p51, %p52
    %p54 = scmp.ne.s32.totalorder %s45, %s46
    %p55 = scmp.eq.s32.totalorder %s14, 0
    %p56 = por %p54, %p55
    %p57 = scmp.ne.s32.totalorder %s45, %s46
    %p58 = scmp.eq.s32.totalorder %s15, 1
    %p59 = por %p57, %p58
    %p61 = scmp.ne.s32.totalorder %s46, %s60
    %p62 = scmp.eq.s32.totalorder %s15, 0
    %p63 = por %p61, %p62
    %s64 = ssub.s32 %s9, %s16
    %p65 = scmp.eq.s32.totalorder %s64, 0
    %s67 = sadd.s32 %s66, 1
    %s68 = scalar_select %p65, %s66, %s67
    %p71 = pneg %p65
    %p72 = scmp.eq.s32.totalorder %s9, 1
    %p73 = por %p71, %p72
    %p74 = scmp.ne.s32.totalorder %s66, %s69
    %p75 = scmp.eq.s32.totalorder %s9, 0
    %p76 = por %p74, %p75
    %p77 = scmp.ne.s32.totalorder %s66, %s69
    %p78 = scmp.eq.s32.totalorder %s14, 1
    %p79 = por %p77, %p78
    %p80 = scmp.ne.s32.totalorder %s69, %s70
    %p81 = scmp.eq.s32.totalorder %s14, 0
    %p82 = por %p80, %p81
    %p83 = scmp.ne.s32.totalorder %s69, %s70
    %p84 = scmp.eq.s32.totalorder %s15, 1
    %p85 = por %p83, %p84
    %p87 = scmp.ne.s32.totalorder %s70, %s86
    %p88 = scmp.eq.s32.totalorder %s15, 0
    %p89 = por %p87, %p88
    %p90 = scmp.le.s32.totalorder 1, %s9
    %p91 = scmp.lt.s32.totalorder %s9, 3
    %p92 = pnand %p90, %p91
    %p93 = pneg %p92
    // Predicated region
    $region9: #{danet_head.14} parent=5 // pred_check
      _
    $region10: #{danet_head.14} parent=5 // pred_check_branch
      %95 = sbr.rel (%p92) target = $region12
    $region11: #{danet_head.14} parent=5 // pred_region
      %s96 = ssub.s32 %s9, 1
      // Predicated region
      $region13: #{danet_head.14} parent=11 // pred_check
        %p97 = pneg %p56
      $region14: #{danet_head.14} parent=11 // pred_check_branch
        %99 = sbr.rel (%p97) target = $region16
      $region15: #{danet_head.14} parent=11 // pred_region
        _
      $region16: #{danet_head.14} parent=11 // pred_fallthru
        _
    $region12: #{danet_head.14} parent=5 // pred_fallthru
      _
    %p100 = scmp.lt.s32.totalorder %s9, 2
    // Predicated region
    $region17: #{danet_head.14} parent=5 // pred_check
      %p101 = pneg %p100
    $region18: #{danet_head.14} parent=5 // pred_check_branch
      %103 = sbr.rel (%p101) target = $region20
    $region19: #{danet_head.14} parent=5 // pred_region
      // Predicated region
      $region21: #{danet_head.14} parent=19 // pred_check
        %p104 = pneg %p29
      $region22: #{danet_head.14} parent=19 // pred_check_branch
        %106 = sbr.rel (%p104) target = $region24
      $region23: #{danet_head.14} parent=19 // pred_region
        %p107 = scmp.lt.s32.totalorder %s9, 1
        %s108 = scalar_select %p107, %s9, 1
        %s109 = smul.addr %s108, 2
        %s110 = smul.addr %s109, 4
        %s111 = scalar_lea.vmem %s0, %s110
      $region24: #{danet_head.14} parent=19 // pred_fallthru
        _
    $region20: #{danet_head.14} parent=5 // pred_fallthru
      _
    %p112 = scmp.le.s32.totalorder 1, %s9
    %p113 = scmp.lt.s32.totalorder %s9, 3
    %p114 = pnand %p112, %p113
    %p115 = pneg %p114
    // Predicated region
    $region25: #{danet_head.14} parent=5 // pred_check
      _
    $region26: #{danet_head.14} parent=5 // pred_check_branch
      %117 = sbr.rel (%p114) target = $region28
    $region27: #{danet_head.14} parent=5 // pred_region
      %s118 = ssub.s32 %s9, 1
      %p119 = scmp.lt.s32.totalorder %s14, 1
      %s120 = scalar_select %p119, %s14, 1
      %s121 = smul.addr %s120, 2
      %s122 = smul.addr %s121, 4
      %s123 = scalar_lea.vmem %s0, %s122
      %p124 = pneg %p35
      %p125 = pneg %p32
      %p126 = pneg %p56
      %p127 = pneg %p53
      %p128 = pneg %p82
      %p129 = pneg %p79
      %p130 = scmp.lt.s32.totalorder %s14, 1
      %s131 = scalar_select %p130, %s14, 1
      %s132 = smul.addr %s131, 2
      %s133 = smul.addr %s132, 4
      %s134 = scalar_lea.vmem %s2, %s133
      %p135 = scmp.lt.s32.totalorder %s14, 1
      %s136 = scalar_select %p135, %s14, 1
      %s137 = smul.addr %s136, 2
      %s138 = smul.addr %s137, 4
      %s139 = scalar_lea.vmem %s0, %s138
      %p140 = scmp.lt.s32.totalorder %s14, 1
      %s141 = scalar_select %p140, %s14, 1
      %s142 = smul.addr %s141, 2
      %s143 = smul.addr %s142, 4
      %s144 = scalar_lea.vmem %s2, %s143
      %v146 = vld [vmem:[%s139] sm:$0xf]
      %v147 = vld [vmem:[%s139 + $0x4] sm:$0xf]
      %v150 = vunpack.c.l.b16 %v146
      %v151 = vunpack.c.l.b16 %v147
      %v152 = vpack.c.b16 %v151, %v150
      %154 = vmatprep.subr.bf16.mxu0 0
      %155 = vmatpush1.bf16.xpose.msra.mxu0 0
      %156 = vmatprep.subr.bf16.mxu0 0
      %157 = vmatpush1.bf16.xpose.msra.mxu0 0
      %158 = vmatprep.subr.bf16.mxu0 0
      %159 = vmatpush1.bf16.xpose.msra.mxu0 0
      %160 = vmatprep.subr.bf16.mxu0 0
      %161 = vmatpush1.bf16.xpose.msra.mxu0 0
      %162 = vmatprep.subr.bf16.mxu0 0
      %163 = vmatpush1.bf16.xpose.msra.mxu0 0
      %164 = vmatprep.subr.bf16.mxu0 0
      %165 = vmatpush1.bf16.xpose.msra.mxu0 0
      %166 = vmatprep.subr.bf16.mxu0 0
      %167 = vmatpush1.bf16.xpose.msra.mxu0 0
      %168 = vmatprep.subr.bf16.mxu0 0
      %169 = vmatpush1.bf16.xpose.msra.mxu0 %v152
      %170 = vmatprep.subr.bf16.mxu0 0
      %171 = vmatpush2.bf16.xpose.msra.mxu0 0
      %172 = vmatprep.subr.bf16.mxu0 0
      %173 = vmatpush2.bf16.xpose.msra.mxu0 0
      %174 = vmatprep.subr.bf16.mxu0 0
      %175 = vmatpush2.bf16.xpose.msra.mxu0 0
      %176 = vmatprep.subr.bf16.mxu0 0
      %177 = vmatpush2.bf16.xpose.msra.mxu0 0
      %178 = vmatprep.subr.bf16.mxu0 0
      %179 = vmatpush2.bf16.xpose.msra.mxu0 0
      %180 = vmatprep.subr.bf16.mxu0 0
      %181 = vmatpush2.bf16.xpose.msra.mxu0 0
      %182 = vmatprep.subr.bf16.mxu0 0
      %183 = vmatpush2.bf16.xpose.msra.mxu0 0
      %184 = vmatprep.subr.bf16.mxu0 0
      %185 = vmatpush2.bf16.xpose.msra.mxu0 0
      %186 = vmatprep.mubr.bf16.mxu0 0
      %187 = vmatmul.mubr.bf16.gmra.mxu0 %v152
      %v188 = vpop.f32.mrf.mxu0
      %v189 = vadd.f32 0.0, %v188
      %v190 = vpop.f32.mrf.mxu0
      %v191 = vpop.f32.mrf.mxu0
      %v192 = vadd.f32 0.0, %v191
      %v193 = vpop.f32.mrf.mxu0
      %194 = vdwg.mxu0
      %vm195 = vcmask 130048
      %v196 = vsel %vm195, %v189, -inf
      %197 = vmax.xlane.f32.xlu0 %v196
      %v198 = vpop.xlane.xlu0 %197
      %v199 = vsel %vm195, %v192, -inf
      %200 = vmax.xlane.f32.xlu0 %v199
      %v201 = vpop.xlane.xlu0 %200
      %v202 = vsub.f32 %v198, %v189
      %v203 = vsub.f32 %v201, %v192
      %v204 = vsel %vm195, %v202, -inf
      %205 = vmax.xlane.f32.xlu0 %v204
      %v206 = vpop.xlane.xlu0 %205
      %v207 = vsel %vm195, %v203, -inf
      %208 = vmax.xlane.f32.xlu0 %v207
      %v209 = vpop.xlane.xlu0 %208
      %v210 = vsub.f32 %v202, %v206
      %v211 = vsub.f32 %v203, %v209
      %v212 = vmul.f32 %v210, 1.442695
      %v213 = vpow.pop %v212
      %v214 = vmul.f32 %v211, 1.442695
      %v215 = vpow.pop %v214
      %v216 = vsel %vm195, %v213, 0.0
      %217 = vadd.xlane.f32.xlu0 %v216
      %v218 = vpop.xlane.xlu0 %217
      %v219 = vsel %vm195, %v215, 0.0
      %220 = vadd.xlane.f32.xlu0 %v219
      %v221 = vpop.xlane.xlu0 %220
      %v222 = vrcp.pop %v218
      %v223 = vmul.f32 %v213, %v222
      %v224 = vrcp.pop %v221
      %v225 = vmul.f32 %v215, %v224
      %v226 = vunpack.c.l.bf16 %v146
      %v227 = vunpack.c.l.bf16 %v147
      %v229 = vsel %vm195, %v223, 0
      %v232 = vsel %vm195, %v225, 0
      %234 = vmatprep.subr.mxu0 0.0
      %235 = vmatpush1.msra.mxu0 0.0
      %236 = vmatprep.subr.mxu0 0.0
      %237 = vmatpush1.msra.mxu0 0.0
      %238 = vmatprep.subr.mxu0 0.0
      %239 = vmatpush1.msra.mxu0 0.0
      %240 = vmatprep.subr.mxu0 0.0
      %241 = vmatpush1.msra.mxu0 0.0
      %242 = vmatprep.subr.mxu0 0.0
      %243 = vmatpush1.msra.mxu0 0.0
      %244 = vmatprep.subr.mxu0 0.0
      %245 = vmatpush1.msra.mxu0 0.0
      %246 = vmatprep.subr.mxu0 0.0
      %247 = vmatpush1.msra.mxu0 0.0
      %248 = vmatprep.subr.mxu0 0.0
      %249 = vmatpush1.msra.mxu0 0.0
      %250 = vmatprep.subr.mxu0 0.0
      %251 = vmatpush1.msra.mxu0 0.0
      %252 = vmatprep.subr.mxu0 0.0
      %253 = vmatpush1.msra.mxu0 0.0
      %254 = vmatprep.subr.mxu0 0.0
      %255 = vmatpush1.msra.mxu0 0.0
      %256 = vmatprep.subr.mxu0 0.0
      %257 = vmatpush1.msra.mxu0 0.0
      %258 = vmatprep.subr.mxu0 0.0
      %259 = vmatpush1.msra.mxu0 0.0
      %260 = vmatprep.subr.mxu0 0.0
      %261 = vmatpush1.msra.mxu0 0.0
      %262 = vmatprep.subr.mxu0 0.0
      %263 = vmatpush1.msra.mxu0 %v227
      %264 = vmatprep.subr.mxu0 0.0
      %265 = vmatpush1.msra.mxu0 %v226
      %266 = vmatprep.subr.mxu0 0.0
      %267 = vmatpush2.msra.mxu0 0.0
      %268 = vmatprep.subr.mxu0 0.0
      %269 = vmatpush2.msra.mxu0 0.0
      %270 = vmatprep.subr.mxu0 0.0
      %271 = vmatpush2.msra.mxu0 0.0
      %272 = vmatprep.subr.mxu0 0.0
      %273 = vmatpush2.msra.mxu0 0.0
      %274 = vmatprep.subr.mxu0 0.0
      %275 = vmatpush2.msra.mxu0 0.0
      %276 = vmatprep.subr.mxu0 0.0
      %277 = vmatpush2.msra.mxu0 0.0
      %278 = vmatprep.subr.mxu0 0.0
      %279 = vmatpush2.msra.mxu0 0.0
      %280 = vmatprep.subr.mxu0 0.0
      %281 = vmatpush2.msra.mxu0 0.0
      %282 = vmatprep.subr.mxu0 0.0
      %283 = vmatpush2.msra.mxu0 0.0
      %284 = vmatprep.subr.mxu0 0.0
      %285 = vmatpush2.msra.mxu0 0.0
      %286 = vmatprep.subr.mxu0 0.0
      %287 = vmatpush2.msra.mxu0 0.0
      %288 = vmatprep.subr.mxu0 0.0
      %289 = vmatpush2.msra.mxu0 0.0
      %290 = vmatprep.subr.mxu0 0.0
      %291 = vmatpush2.msra.mxu0 0.0
      %292 = vmatprep.subr.mxu0 0.0
      %293 = vmatpush2.msra.mxu0 0.0
      %294 = vmatprep.subr.mxu0 0.0
      %295 = vmatpush2.msra.mxu0 0.0
      %296 = vmatprep.subr.mxu0 0.0
      %297 = vmatpush2.msra.mxu0 0.0
      %298 = vmatprep.mubr.f32.mxu0 0.0
      %299 = vmatmul.mubr.f32.gmra.mxu0 %v229
      %v300 = vpop.f32.mrf.mxu0
      %v301 = vadd.f32 0.0, %v300
      %v302 = vpop.f32.mrf.mxu0
      %303 = vmatprep.mubr.f32.mxu0 0.0
      %304 = vmatmul.mubr.f32.gmra.mxu0 %v232
      %v305 = vpop.f32.mrf.mxu0
      %v306 = vadd.f32 0.0, %v305
      %v307 = vpop.f32.mrf.mxu0
      %308 = vdwg.mxu0
      %s309 = sld [smem:[#allocation2]]
      %v310 = vstv %s309
      %v311 = vmul.f32 %v310, %v301
      %v312 = vmul.f32 %v310, %v306
      %v313 = vadd.f32 %v311, %v226
      %v314 = vadd.f32 %v312, %v227
      %v315 = vpack.c.bf16 %v314, %v313
      %v317 = vunpack.c.l.b16 %v315
      %v318 = vunpack.c.h.b16 %v315
      %v319 = vpack.c.b16 %v317, %v317
      %v320 = vpack.c.b16 %v318, %v318
      %323 = vst [vmem:[%s144] sm:$0xf] %v319
      %324 = vst [vmem:[%s144 + $0x4] sm:$0xf] %v320
      %p325 = scmp.lt.s32.totalorder %s14, 1
      %s326 = scalar_select %p325, %s14, 1
      %s327 = smul.addr %s326, 2
      %s328 = smul.addr %s327, 4
      %s329 = scalar_lea.vmem %s2, %s328
      // Predicated region
      $region29: #{danet_head.14} parent=27 // pred_check
        %p330 = pneg %p79
      $region30: #{danet_head.14} parent=27 // pred_check_branch
        %332 = sbr.rel (%p330) target = $region32
      $region31: #{danet_head.14} parent=27 // pred_region
        _
      $region32: #{danet_head.14} parent=27 // pred_fallthru
        _
    $region28: #{danet_head.14} parent=5 // pred_fallthru
      _
    %p333 = scmp.le.s32.totalorder 2, %s9
    // Predicated region
    $region33: #{danet_head.14} parent=5 // pred_check
      %p334 = pneg %p333
    $region34: #{danet_head.14} parent=5 // pred_check_branch
      %336 = sbr.rel (%p334) target = $region36
    $region35: #{danet_head.14} parent=5 // pred_region
      %s337 = ssub.s32 %s9, 2
      // Predicated region
      $region37: #{danet_head.14} parent=35 // pred_check
        %p338 = pneg %p85
      $region38: #{danet_head.14} parent=35 // pred_check_branch
        %340 = sbr.rel (%p338) target = $region40
      $region39: #{danet_head.14} parent=35 // pred_region
        %p341 = scmp.lt.s32.totalorder %s15, 1
        %s342 = scalar_select %p341, %s15, 1
        %s343 = smul.addr %s342, 2
        %s344 = smul.addr %s343, 4
        %s345 = scalar_lea.vmem %s2, %s344
      $region40: #{danet_head.14} parent=35 // pred_fallthru
        _
    $region36: #{danet_head.14} parent=5 // pred_fallthru
      _
  $region6: #{danet_head.14} parent=0 // loop_footer
    %s13 = sadd.s32 1, %s9
  $region7: #{danet_head.14} parent=0 // loop_footer_branch
    %8 = sbr.rel target = $region3
  $region8: #{danet_head.14} parent=0 // loop_exit
    _

// kernel: danet_head.17
$region0: #{danet_head.17}
  #allocation0 [shape = 'u32[]', space=smem, size = 0x4, offset = 0x4, fixed_abs, tag = 'smem constant byte address 0x4 - core index']
  #allocation1 [shape = 'u32[144,128]{1,0:T(1,128)}', space=vmem, size = 0x12000, scoped, tag = 'internal scratch']
  %s0 = inlined_call_operand.vmem [shape: f32[2,2,5,128], index: 0, kind: input, shape index: {}]
  %s1 = inlined_call_operand.vmem [shape: f32[40,5], index: 1, kind: input, shape index: {}]
  %s2 = inlined_call_operand.vmem [shape: f32[128,128], index: 2, kind: input, shape index: {}]
  %s3 = inlined_call_operand.vmem [shape: f32[2,2,40,128], index: 3, kind: output, shape index: {}]
  %s4 = sld [smem:[#allocation0]]
  $region45: #{danet_head.17} parent=0
    _
  %s6 = ssub.s32 1, %s4
  %s7 = scalar_select 0, %s6, %s4
  loop: start=0, step=1, limit=6
  $region2: #{danet_head.17} parent=0 // loop_pre_header
    _
  $region3: #{danet_head.17} parent=0 // loop_header
    %s9 = sphi 0, %s13
    %p10 = scmp.ge.s32.totalorder %s9, 6
    %s16 = sphi 0, %s35
    %s17 = sphi 0, %s31
    %s18 = sphi 0, %s27
    %s19 = sphi 0, %s16
    %s20 = sphi 0, %s17
    %s21 = sphi 0, %s18
    %s22 = sphi 0, %s19
    %s23 = sphi 0, %s20
    %s24 = sphi 0, %s21
    %s40 = sphi 0, %s42
    %s43 = sphi 0, %s40
    %s44 = sphi 0, %s43
    %s60 = sphi 0, %s44
    %s66 = sphi 0, %s68
    %s69 = sphi 0, %s66
    %s70 = sphi 0, %s69
    %s86 = sphi 0, %s70
    %s90 = sphi 0, %s90
    %s92 = sphi 0, %s90
    %s93 = sphi 0, %s92
    %s107 = sphi 0, %s93
    %s117 = sphi 0, %s119
    %s120 = sphi 0, %s117
    %s121 = sphi 0, %s120
    %s137 = sphi 0, %s121
  $region4: #{danet_head.17} parent=0 // loop_header_branch
    %12 = sbr.rel (%p10) target = $region8
  $region5: #{danet_head.17} parent=0 // loop_body
    %s14 = ssub.s32 %s9, 1
    %s15 = ssub.s32 %s9, 2
    %s25 = sadd.s32 1, %s18
    %p26 = scmp.ge.s32.totalorder %s25, 1
    %s27 = scalar_select %p26, 0, %s25
    %s28 = sadd.s32 1, %s17
    %s29 = scalar_select %p26, %s28, %s17
    %p30 = scmp.ge.s32.totalorder %s29, 2
    %s31 = scalar_select %p30, 0, %s29
    %s32 = sadd.s32 1, %s16
    %s33 = scalar_select %p30, %s32, %s16
    %p34 = scmp.ge.s32.totalorder %s33, 2
    %s35 = scalar_select %p34, 0, %s33
    %s36 = ssub.s32 %s16, %s35
    %s37 = ssub.s32 %s17, %s31
    %s38 = sor.u32 %s36, %s37
    %p39 = scmp.eq.s32.totalorder %s38, 0
    %s41 = sadd.s32 %s40, 1
    %s42 = scalar_select %p39, %s40, %s41
    %p45 = pneg %p39
    %p46 = scmp.eq.s32.totalorder %s9, 3
    %p47 = por %p45, %p46
    %p48 = scmp.ne.s32.totalorder %s40, %s43
    %p49 = scmp.eq.s32.totalorder %s9, 0
    %p50 = por %p48, %p49
    %p51 = scmp.ne.s32.totalorder %s40, %s43
    %p52 = scmp.eq.s32.totalorder %s14, 3
    %p53 = por %p51, %p52
    %p54 = scmp.ne.s32.totalorder %s43, %s44
    %p55 = scmp.eq.s32.totalorder %s14, 0
    %p56 = por %p54, %p55
    %p57 = scmp.ne.s32.totalorder %s43, %s44
    %p58 = scmp.eq.s32.totalorder %s15, 3
    %p59 = por %p57, %p58
    %p61 = scmp.ne.s32.totalorder %s44, %s60
    %p62 = scmp.eq.s32.totalorder %s15, 0
    %p63 = por %p61, %p62
    %s64 = ssub.s32 %s18, %s27
    %p65 = scmp.eq.s32.totalorder %s64, 0
    %s67 = sadd.s32 %s66, 1
    %s68 = scalar_select %p65, %s66, %s67
    %p71 = pneg %p65
    %p72 = scmp.eq.s32.totalorder %s9, 3
    %p73 = por %p71, %p72
    %p74 = scmp.ne.s32.totalorder %s66, %s69
    %p75 = scmp.eq.s32.totalorder %s9, 0
    %p76 = por %p74, %p75
    %p77 = scmp.ne.s32.totalorder %s66, %s69
    %p78 = scmp.eq.s32.totalorder %s14, 3
    %p79 = por %p77, %p78
    %p80 = scmp.ne.s32.totalorder %s69, %s70
    %p81 = scmp.eq.s32.totalorder %s14, 0
    %p82 = por %p80, %p81
    %p83 = scmp.ne.s32.totalorder %s69, %s70
    %p84 = scmp.eq.s32.totalorder %s15, 3
    %p85 = por %p83, %p84
    %p87 = scmp.ne.s32.totalorder %s70, %s86
    %p88 = scmp.eq.s32.totalorder %s15, 0
    %p89 = por %p87, %p88
    %s91 = sadd.s32 %s90, 1
    %p94 = scmp.eq.s32.totalorder %s9, 3
    %p95 = scmp.ne.s32.totalorder %s90, %s92
    %p96 = scmp.eq.s32.totalorder %s9, 0
    %p97 = por %p95, %p96
    %p98 = scmp.ne.s32.totalorder %s90, %s92
    %p99 = scmp.eq.s32.totalorder %s14, 3
    %p100 = por %p98, %p99
    %p101 = scmp.ne.s32.totalorder %s92, %s93
    %p102 = scmp.eq.s32.totalorder %s14, 0
    %p103 = por %p101, %p102
    %p104 = scmp.ne.s32.totalorder %s92, %s93
    %p105 = scmp.eq.s32.totalorder %s15, 3
    %p106 = por %p104, %p105
    %p108 = scmp.ne.s32.totalorder %s93, %s107
    %p109 = scmp.eq.s32.totalorder %s15, 0
    %p110 = por %p108, %p109
    %s111 = ssub.s32 %s16, %s35
    %s112 = ssub.s32 %s17, %s31
    %s113 = sor.u32 %s111, %s112
    %s114 = ssub.s32 %s18, %s27
    %s115 = sor.u32 %s113, %s114
    %p116 = scmp.eq.s32.totalorder %s115, 0
    %s118 = sadd.s32 %s117, 1
    %s119 = scalar_select %p116, %s117, %s118
    %p122 = pneg %p116
    %p123 = scmp.eq.s32.totalorder %s9, 3
    %p124 = por %p122, %p123
    %p125 = scmp.ne.s32.totalorder %s117, %s120
    %p126 = scmp.eq.s32.totalorder %s9, 0
    %p127 = por %p125, %p126
    %p128 = scmp.ne.s32.totalorder %s117, %s120
    %p129 = scmp.eq.s32.totalorder %s14, 3
    %p130 = por %p128, %p129
    %p131 = scmp.ne.s32.totalorder %s120, %s121
    %p132 = scmp.eq.s32.totalorder %s14, 0
    %p133 = por %p131, %p132
    %p134 = scmp.ne.s32.totalorder %s120, %s121
    %p135 = scmp.eq.s32.totalorder %s15, 3
    %p136 = por %p134, %p135
    %p138 = scmp.ne.s32.totalorder %s121, %s137
    %p139 = scmp.eq.s32.totalorder %s15, 0
    %p140 = por %p138, %p139
    %p141 = scmp.le.s32.totalorder 1, %s9
    %p142 = scmp.lt.s32.totalorder %s9, 5
    %p143 = pnand %p141, %p142
    %p144 = pneg %p143
    // Predicated region
    $region9: #{danet_head.17} parent=5 // pred_check
      _
    $region10: #{danet_head.17} parent=5 // pred_check_branch
      %146 = sbr.rel (%p143) target = $region12
    $region11: #{danet_head.17} parent=5 // pred_region
      %s147 = ssub.s32 %s9, 1
      // Predicated region
      $region13: #{danet_head.17} parent=11 // pred_check
        %p148 = pneg %p82
      $region14: #{danet_head.17} parent=11 // pred_check_branch
        %150 = sbr.rel (%p148) target = $region16
      $region15: #{danet_head.17} parent=11 // pred_region
        %s151 = smul.u32 5, %s21
        %p152 = scmp.lt.s32.totalorder %s151, 4
        %s153 = scalar_select %p152, %s151, 4
        %s154 = smul.addr %s153, 8
        %s155 = scalar_lea.vmem %s1, %s154
        %s156 = smul.u32 5, %s21
      $region16: #{danet_head.17} parent=11 // pred_fallthru
        _
      // Predicated region
      $region17: #{danet_head.17} parent=11 // pred_check
        %p157 = pneg %p103
      $region18: #{danet_head.17} parent=11 // pred_check_branch
        %159 = sbr.rel (%p157) target = $region20
      $region19: #{danet_head.17} parent=11 // pred_region
        _
      $region20: #{danet_head.17} parent=11 // pred_fallthru
        _
    $region12: #{danet_head.17} parent=5 // pred_fallthru
      _
    %p160 = scmp.lt.s32.totalorder %s9, 4
    // Predicated region
    $region21: #{danet_head.17} parent=5 // pred_check
      %p161 = pneg %p160
    $region22: #{danet_head.17} parent=5 // pred_check_branch
      %163 = sbr.rel (%p161) target = $region24
    $region23: #{danet_head.17} parent=5 // pred_region
      // Predicated region
      $region25: #{danet_head.17} parent=23 // pred_check
        %p164 = pneg %p50
      $region26: #{danet_head.17} parent=23 // pred_check_branch
        %166 = sbr.rel (%p164) target = $region28
      $region27: #{danet_head.17} parent=23 // pred_region
        %p167 = scmp.lt.s32.totalorder %s16, 1
        %s168 = scalar_select %p167, %s16, 1
        %p169 = scmp.lt.s32.totalorder %s17, 1
        %s170 = scalar_select %p169, %s17, 1
        %s171 = smul.addr %s168, 2
        %s172 = sadd.s32 %s170, %s171
        %s173 = smul.addr %s172, 8
        %s174 = scalar_lea.vmem %s0, %s173
      $region28: #{danet_head.17} parent=23 // pred_fallthru
        _
    $region24: #{danet_head.17} parent=5 // pred_fallthru
      _
    %p175 = scmp.le.s32.totalorder 1, %s9
    %p176 = scmp.lt.s32.totalorder %s9, 5
    %p177 = pnand %p175, %p176
    %p178 = pneg %p177
    // Predicated region
    $region29: #{danet_head.17} parent=5 // pred_check
      _
    $region30: #{danet_head.17} parent=5 // pred_check_branch
      %180 = sbr.rel (%p177) target = $region32
    $region31: #{danet_head.17} parent=5 // pred_region
      %s181 = ssub.s32 %s9, 1
      %p182 = scmp.lt.s32.totalorder %s19, 1
      %s183 = scalar_select %p182, %s19, 1
      %p184 = scmp.lt.s32.totalorder %s20, 1
      %s185 = scalar_select %p184, %s20, 1
      %s186 = smul.addr %s183, 2
      %s187 = sadd.s32 %s185, %s186
      %s188 = smul.addr %s187, 8
      %s189 = scalar_lea.vmem %s0, %s188
      %p190 = pneg %p56
      %p191 = pneg %p53
      %s192 = smul.u32 5, %s21
      %p193 = scmp.lt.s32.totalorder %s192, 4
      %s194 = scalar_select %p193, %s192, 4
      %s195 = smul.addr %s194, 8
      %s196 = scalar_lea.vmem %s1, %s195
      %p197 = pneg %p82
      %p198 = pneg %p79
      %p199 = pneg %p103
      %p200 = pneg %p100
      %p201 = pneg %p133
      %p202 = pneg %p130
      %s203 = smul.u32 5, %s21
      %p204 = scmp.lt.s32.totalorder %s19, 1
      %s205 = scalar_select %p204, %s19, 1
      %p206 = scmp.lt.s32.totalorder %s20, 1
      %s207 = scalar_select %p206, %s20, 1
      %p208 = scmp.lt.s32.totalorder %s203, 4
      %s209 = scalar_select %p208, %s203, 4
      %s210 = smul.addr %s207, 5
      %s211 = sadd.s32 %s209, %s210
      %s212 = smul.addr %s205, 10
      %s213 = sadd.s32 %s211, %s212
      %s214 = smul.addr %s213, 8
      %s215 = scalar_lea.vmem %s3, %s214
      %p216 = scmp.lt.s32.totalorder %s19, 1
      %s217 = scalar_select %p216, %s19, 1
      %p218 = scmp.lt.s32.totalorder %s20, 1
      %s219 = scalar_select %p218, %s20, 1
      %s220 = smul.addr %s217, 2
      %s221 = sadd.s32 %s219, %s220
      %s222 = smul.addr %s221, 8
      %s223 = scalar_lea.vmem %s0, %s222
      %s224 = smul.u32 5, %s21
      %p225 = scmp.lt.s32.totalorder %s224, 4
      %s226 = scalar_select %p225, %s224, 4
      %s227 = smul.addr %s226, 8
      %s228 = scalar_lea.vmem %s1, %s227
      %s229 = smul.u32 5, %s21
      %s230 = smul.u32 5, %s21
      %p231 = scmp.lt.s32.totalorder %s19, 1
      %s232 = scalar_select %p231, %s19, 1
      %p233 = scmp.lt.s32.totalorder %s20, 1
      %s234 = scalar_select %p233, %s20, 1
      %p235 = scmp.lt.s32.totalorder %s230, 4
      %s236 = scalar_select %p235, %s230, 4
      %s237 = smul.addr %s234, 5
      %s238 = sadd.s32 %s236, %s237
      %s239 = smul.addr %s232, 10
      %s240 = sadd.s32 %s238, %s239
      %s241 = smul.addr %s240, 8
      %s242 = scalar_lea.vmem %s3, %s241
      %s243 = smul.u32 5, %s21
      %v244 = vld [vmem:[%s228] sm:$0xff]
      %v245 = vld [vmem:[%s228 + $0x8] sm:$0xff]
      %v246 = vld [vmem:[%s228 + $0x10] sm:$0xff]
      %v247 = vld [vmem:[%s228 + $0x18] sm:$0xff]
      %v248 = vld [vmem:[%s228 + $0x20] sm:$0xff]
      %v249 = vld [vmem:[%s223] sm:$0x1f]
      %vm250 = vcmask 39936
      %v252 = vsel %vm250, %v244, 0
      %v255 = vsel %vm250, %v245, 0
      %v258 = vsel %vm250, %v246, 0
      %v261 = vsel %vm250, %v247, 0
      %v264 = vsel %vm250, %v248, 0
      %vm266 = vcmask 1044480
      %v268 = vsel %vm266, %v249, 0
      %270 = vmatprep.subr.mxu0 0.0
      %271 = vmatpush1.msra.mxu0 0.0
      %272 = vmatprep.subr.mxu0 0.0
      %273 = vmatpush1.msra.mxu0 0.0
      %274 = vmatprep.subr.mxu0 0.0
      %275 = vmatpush1.msra.mxu0 0.0
      %276 = vmatprep.subr.mxu0 0.0
      %277 = vmatpush1.msra.mxu0 0.0
      %278 = vmatprep.subr.mxu0 0.0
      %279 = vmatpush1.msra.mxu0 0.0
      %280 = vmatprep.subr.mxu0 0.0
      %281 = vmatpush1.msra.mxu0 0.0
      %282 = vmatprep.subr.mxu0 0.0
      %283 = vmatpush1.msra.mxu0 0.0
      %284 = vmatprep.subr.mxu0 0.0
      %285 = vmatpush1.msra.mxu0 0.0
      %286 = vmatprep.subr.mxu0 0.0
      %287 = vmatpush1.msra.mxu0 0.0
      %288 = vmatprep.subr.mxu0 0.0
      %289 = vmatpush1.msra.mxu0 0.0
      %290 = vmatprep.subr.mxu0 0.0
      %291 = vmatpush1.msra.mxu0 0.0
      %292 = vmatprep.subr.mxu0 0.0
      %293 = vmatpush1.msra.mxu0 0.0
      %294 = vmatprep.subr.mxu0 0.0
      %295 = vmatpush1.msra.mxu0 0.0
      %296 = vmatprep.subr.mxu0 0.0
      %297 = vmatpush1.msra.mxu0 0.0
      %298 = vmatprep.subr.mxu0 0.0
      %299 = vmatpush1.msra.mxu0 0.0
      %300 = vmatprep.subr.mxu0 0.0
      %301 = vmatpush1.msra.mxu0 %v268
      %302 = vmatprep.subr.mxu0 0.0
      %303 = vmatpush2.msra.mxu0 0.0
      %304 = vmatprep.subr.mxu0 0.0
      %305 = vmatpush2.msra.mxu0 0.0
      %306 = vmatprep.subr.mxu0 0.0
      %307 = vmatpush2.msra.mxu0 0.0
      %308 = vmatprep.subr.mxu0 0.0
      %309 = vmatpush2.msra.mxu0 0.0
      %310 = vmatprep.subr.mxu0 0.0
      %311 = vmatpush2.msra.mxu0 0.0
      %312 = vmatprep.subr.mxu0 0.0
      %313 = vmatpush2.msra.mxu0 0.0
      %314 = vmatprep.subr.mxu0 0.0
      %315 = vmatpush2.msra.mxu0 0.0
      %316 = vmatprep.subr.mxu0 0.0
      %317 = vmatpush2.msra.mxu0 0.0
      %318 = vmatprep.subr.mxu0 0.0
      %319 = vmatpush2.msra.mxu0 0.0
      %320 = vmatprep.subr.mxu0 0.0
      %321 = vmatpush2.msra.mxu0 0.0
      %322 = vmatprep.subr.mxu0 0.0
      %323 = vmatpush2.msra.mxu0 0.0
      %324 = vmatprep.subr.mxu0 0.0
      %325 = vmatpush2.msra.mxu0 0.0
      %326 = vmatprep.subr.mxu0 0.0
      %327 = vmatpush2.msra.mxu0 0.0
      %328 = vmatprep.subr.mxu0 0.0
      %329 = vmatpush2.msra.mxu0 0.0
      %330 = vmatprep.subr.mxu0 0.0
      %331 = vmatpush2.msra.mxu0 0.0
      %332 = vmatprep.subr.mxu0 0.0
      %333 = vmatpush2.msra.mxu0 0.0
      %334 = vmatprep.mubr.f32.mxu0 0.0
      %335 = vmatmul.mubr.f32.gmra.mxu0 %v252
      %v336 = vpop.f32.mrf.mxu0
      %v337 = vadd.f32 0.0, %v336
      %v338 = vpop.f32.mrf.mxu0
      %339 = vmatprep.mubr.f32.mxu0 0.0
      %340 = vmatmul.mubr.f32.gmra.mxu0 %v255
      %v341 = vpop.f32.mrf.mxu0
      %v342 = vadd.f32 0.0, %v341
      %v343 = vpop.f32.mrf.mxu0
      %344 = vmatprep.mubr.f32.mxu0 0.0
      %345 = vmatmul.mubr.f32.gmra.mxu0 %v258
      %v346 = vpop.f32.mrf.mxu0
      %v347 = vadd.f32 0.0, %v346
      %v348 = vpop.f32.mrf.mxu0
      %349 = vmatprep.mubr.f32.mxu0 0.0
      %350 = vmatmul.mubr.f32.gmra.mxu0 %v261
      %v351 = vpop.f32.mrf.mxu0
      %v352 = vadd.f32 0.0, %v351
      %v353 = vpop.f32.mrf.mxu0
      %354 = vmatprep.mubr.f32.mxu0 0.0
      %355 = vmatmul.mubr.f32.gmra.mxu0 %v264
      %v356 = vpop.f32.mrf.mxu0
      %v357 = vadd.f32 0.0, %v356
      %v358 = vpop.f32.mrf.mxu0
      %359 = vdwg.mxu0
      %v360 = vld [vmem:[%s2] sm:$0xff]
      %v361 = vld [vmem:[%s2 + $0x8] sm:$0xff]
      %v362 = vld [vmem:[%s2 + $0x10] sm:$0xff]
      %v363 = vld [vmem:[%s2 + $0x18] sm:$0xff]
      %v364 = vld [vmem:[%s2 + $0x20] sm:$0xff]
      %v365 = vld [vmem:[%s2 + $0x28] sm:$0xff]
      %v366 = vld [vmem:[%s2 + $0x30] sm:$0xff]
      %v367 = vld [vmem:[%s2 + $0x38] sm:$0xff]
      %v368 = vld [vmem:[%s2 + $0x40] sm:$0xff]
      %v369 = vld [vmem:[%s2 + $0x48] sm:$0xff]
      %v370 = vld [vmem:[%s2 + $0x50] sm:$0xff]
      %v371 = vld [vmem:[%s2 + $0x58] sm:$0xff]
      %v372 = vld [vmem:[%s2 + $0x60] sm:$0xff]
      %v373 = vld [vmem:[%s2 + $0x68] sm:$0xff]
      %v374 = vld [vmem:[%s2 + $0x70] sm:$0xff]
      %v375 = vld [vmem:[%s2 + $0x78] sm:$0xff]
      %376 = vmatprep.subr.mxu0 0.0
      %377 = vmatpush1.msra.mxu0 %v375
      %378 = vmatprep.subr.mxu0 0.0
      %379 = vmatpush1.msra.mxu0 %v374
      %380 = vmatprep.subr.mxu0 0.0
      %381 = vmatpush1.msra.mxu0 %v373
      %382 = vmatprep.subr.mxu0 0.0
      %383 = vmatpush1.msra.mxu0 %v372
      %384 = vmatprep.subr.mxu0 0.0
      %385 = vmatpush1.msra.mxu0 %v371
      %386 = vmatprep.subr.mxu0 0.0
      %387 = vmatpush1.msra.mxu0 %v370
      %388 = vmatprep.subr.mxu0 0.0
      %389 = vmatpush1.msra.mxu0 %v369
      %390 = vmatprep.subr.mxu0 0.0
      %391 = vmatpush1.msra.mxu0 %v368
      %392 = vmatprep.subr.mxu0 0.0
      %393 = vmatpush1.msra.mxu0 %v367
      %394 = vmatprep.subr.mxu0 0.0
      %395 = vmatpush1.msra.mxu0 %v366
      %396 = vmatprep.subr.mxu0 0.0
      %397 = vmatpush1.msra.mxu0 %v365
      %398 = vmatprep.subr.mxu0 0.0
      %399 = vmatpush1.msra.mxu0 %v364
      %400 = vmatprep.subr.mxu0 0.0
      %401 = vmatpush1.msra.mxu0 %v363
      %402 = vmatprep.subr.mxu0 0.0
      %403 = vmatpush1.msra.mxu0 %v362
      %404 = vmatprep.subr.mxu0 0.0
      %405 = vmatpush1.msra.mxu0 %v361
      %406 = vmatprep.subr.mxu0 0.0
      %407 = vmatpush1.msra.mxu0 %v360
      %408 = vmatprep.subr.mxu0 0.0
      %409 = vmatpush2.msra.mxu0 0.0
      %410 = vmatprep.subr.mxu0 0.0
      %411 = vmatpush2.msra.mxu0 0.0
      %412 = vmatprep.subr.mxu0 0.0
      %413 = vmatpush2.msra.mxu0 0.0
      %414 = vmatprep.subr.mxu0 0.0
      %415 = vmatpush2.msra.mxu0 0.0
      %416 = vmatprep.subr.mxu0 0.0
      %417 = vmatpush2.msra.mxu0 0.0
      %418 = vmatprep.subr.mxu0 0.0
      %419 = vmatpush2.msra.mxu0 0.0
      %420 = vmatprep.subr.mxu0 0.0
      %421 = vmatpush2.msra.mxu0 0.0
      %422 = vmatprep.subr.mxu0 0.0
      %423 = vmatpush2.msra.mxu0 0.0
      %424 = vmatprep.subr.mxu0 0.0
      %425 = vmatpush2.msra.mxu0 0.0
      %426 = vmatprep.subr.mxu0 0.0
      %427 = vmatpush2.msra.mxu0 0.0
      %428 = vmatprep.subr.mxu0 0.0
      %429 = vmatpush2.msra.mxu0 0.0
      %430 = vmatprep.subr.mxu0 0.0
      %431 = vmatpush2.msra.mxu0 0.0
      %432 = vmatprep.subr.mxu0 0.0
      %433 = vmatpush2.msra.mxu0 0.0
      %434 = vmatprep.subr.mxu0 0.0
      %435 = vmatpush2.msra.mxu0 0.0
      %436 = vmatprep.subr.mxu0 0.0
      %437 = vmatpush2.msra.mxu0 0.0
      %438 = vmatprep.subr.mxu0 0.0
      %439 = vmatpush2.msra.mxu0 0.0
      %440 = vmatprep.mubr.f32.mxu0 0.0
      %441 = vmatmul.mubr.f32.gmra.mxu0 %v337
      %v442 = vpop.f32.mrf.mxu0
      %v443 = vadd.f32 0.0, %v442
      %v444 = vpop.f32.mrf.mxu0
      %445 = vmatprep.mubr.f32.mxu0 0.0
      %446 = vmatmul.mubr.f32.gmra.mxu0 %v342
      %v447 = vpop.f32.mrf.mxu0
      %v448 = vadd.f32 0.0, %v447
      %v449 = vpop.f32.mrf.mxu0
      %450 = vmatprep.mubr.f32.mxu0 0.0
      %451 = vmatmul.mubr.f32.gmra.mxu0 %v347
      %v452 = vpop.f32.mrf.mxu0
      %v453 = vadd.f32 0.0, %v452
      %v454 = vpop.f32.mrf.mxu0
      %455 = vmatprep.mubr.f32.mxu0 0.0
      %456 = vmatmul.mubr.f32.gmra.mxu0 %v352
      %v457 = vpop.f32.mrf.mxu0
      %v458 = vadd.f32 0.0, %v457
      %v459 = vpop.f32.mrf.mxu0
      %460 = vmatprep.mubr.f32.mxu0 0.0
      %461 = vmatmul.mubr.f32.gmra.mxu0 %v357
      %v462 = vpop.f32.mrf.mxu0
      %v463 = vadd.f32 0.0, %v462
      %v464 = vpop.f32.mrf.mxu0
      %465 = vdwg.mxu0
      %466 = vst [vmem:[%s242] sm:$0xff] %v443
      %467 = vst [vmem:[%s242 + $0x8] sm:$0xff] %v448
      %468 = vst [vmem:[%s242 + $0x10] sm:$0xff] %v453
      %469 = vst [vmem:[%s242 + $0x18] sm:$0xff] %v458
      %470 = vst [vmem:[%s242 + $0x20] sm:$0xff] %v463
      %s471 = smul.u32 5, %s21
      %p472 = scmp.lt.s32.totalorder %s19, 1
      %s473 = scalar_select %p472, %s19, 1
      %p474 = scmp.lt.s32.totalorder %s20, 1
      %s475 = scalar_select %p474, %s20, 1
      %p476 = scmp.lt.s32.totalorder %s471, 4
      %s477 = scalar_select %p476, %s471, 4
      %s478 = smul.addr %s475, 5
      %s479 = sadd.s32 %s477, %s478
      %s480 = smul.addr %s473, 10
      %s481 = sadd.s32 %s479, %s480
      %s482 = smul.addr %s481, 8
      %s483 = scalar_lea.vmem %s3, %s482
      // Predicated region
      $region33: #{danet_head.17} parent=31 // pred_check
        %p484 = pneg %p130
      $region34: #{danet_head.17} parent=31 // pred_check_branch
        %486 = sbr.rel (%p484) target = $region36
      $region35: #{danet_head.17} parent=31 // pred_region
        %s487 = smul.u32 5, %s21
      $region36: #{danet_head.17} parent=31 // pred_fallthru
        _
    $region32: #{danet_head.17} parent=5 // pred_fallthru
      _
    %p488 = scmp.le.s32.totalorder 2, %s9
    // Predicated region
    $region37: #{danet_head.17} parent=5 // pred_check
      %p489 = pneg %p488
    $region38: #{danet_head.17} parent=5 // pred_check_branch
      %491 = sbr.rel (%p489) target = $region40
    $region39: #{danet_head.17} parent=5 // pred_region
      %s492 = ssub.s32 %s9, 2
      // Predicated region
      $region41: #{danet_head.17} parent=39 // pred_check
        %p493 = pneg %p136
      $region42: #{danet_head.17} parent=39 // pred_check_branch
        %495 = sbr.rel (%p493) target = $region44
      $region43: #{danet_head.17} parent=39 // pred_region
        %s496 = smul.u32 5, %s24
        %p497 = scmp.lt.s32.totalorder %s22, 1
        %s498 = scalar_select %p497, %s22, 1
        %p499 = scmp.lt.s32.totalorder %s23, 1
        %s500 = scalar_select %p499, %s23, 1
        %p501 = scmp.lt.s32.totalorder %s496, 4
        %s502 = scalar_select %p501, %s496, 4
        %s503 = smul.addr %s500, 5
        %s504 = sadd.s32 %s502, %s503
        %s505 = smul.addr %s498, 10
        %s506 = sadd.s32 %s504, %s505
        %s507 = smul.addr %s506, 8
        %s508 = scalar_lea.vmem %s3, %s507
      $region44: #{danet_head.17} parent=39 // pred_fallthru
        _
    $region40: #{danet_head.17} parent=5 // pred_fallthru
      _
  $region6: #{danet_head.17} parent=0 // loop_footer
    %s13 = sadd.s32 1, %s9
  $region7: #{danet_head.17} parent=0 // loop_footer_branch
    %8 = sbr.rel target = $region3
  $region8: #{danet_head.17} parent=0 // loop_exit
    _

</llo_original>
